<compile_context>
chip_gen: v7x
topology: tpu7x:2x2x1
jax: 0.10.0
libtpu: 0.0.40
codegen_flags: <defaults>
</compile_context>

<pallas_src>
import functools
import math

import jax
import jax.numpy as jnp
from jax.experimental import pallas as pl
from jax.experimental.pallas import tpu as pltpu


# ---------------------------------------------------------------------------
# Kernel
# ---------------------------------------------------------------------------
def spectral_kernel(x_ref,
                    wqkv_ref, wnn1_ref, wfc1_ref, wfc2_ref,
                    pdim_ref, ptok_ref, phid_ref,
                    o_ref, *, depth, eps):
    """One grid step: `block_batch` batch elements through all `depth` layers."""
    bblk, n, dim = x_ref.shape
    cdt = wqkv_ref.dtype                        # matmul-input ("compute") dtype
    x = x_ref[...].astype(jnp.float32)          # f32 residual stream

    def layer_norm(z, w, b):
        mu = jnp.mean(z, axis=-1, keepdims=True)
        zc = z - mu
        var = jnp.mean(zc * zc, axis=-1, keepdims=True)    # two-pass variance
        return zc * jax.lax.rsqrt(var + eps) * w + b

    def gelu_exact(u):
        # nn.GELU() (erf form) via the Abramowitz-Stegun 7.1.26 erf
        # approximation (|err| <= 1.5e-7): only exp/mul/where, always lowers.
        z = u * 0.7071067811865476
        az = jnp.abs(z)
        t = 1.0 / (1.0 + 0.3275911 * az)
        poly = t * (0.254829592 + t * (-0.284496736 + t * (1.421413741
                 + t * (-1.453152027 + t * 1.061405429))))
        erf_abs = 1.0 - poly * jnp.exp(-az * az)
        erf = jnp.where(z < 0.0, -erf_abs, erf_abs)
        return 0.5 * u * (1.0 + erf)

    # Depth is collapsed into the kernel: weights stay resident in VMEM and the
    # (small, static) layer loop is unrolled with static leading-axis indexing.
    for l in range(depth):
        # ---- Residual(LayerNorm -> GSAttention) ---------------------------
        h1 = layer_norm(x, pdim_ref[l, 0], pdim_ref[l, 1])       # (bblk, n, dim)
        h1t = jnp.swapaxes(h1, 1, 2).astype(cdt)                 # permute(0, 2, 1)
        h1m = h1t.reshape(bblk * dim, n)                         # batch folded into M

        q = jnp.dot(h1m, wqkv_ref[l, 0],
                    preferred_element_type=jnp.float32) + ptok_ref[l, 0]
        k = jnp.dot(h1m, wqkv_ref[l, 1],
                    preferred_element_type=jnp.float32) + ptok_ref[l, 1]
        v = jnp.dot(h1m, wqkv_ref[l, 2],
                    preferred_element_type=jnp.float32) + ptok_ref[l, 2]
        q = q.reshape(bblk, dim, n)
        k = k.reshape(bblk, dim, n)
        v = v.reshape(bblk, dim, n)

        # (dim, dim) spectral scores per batch element; scale folded into q.
        dots = jax.lax.dot_general(q.astype(cdt), k.astype(cdt),
                                   (((2,), (2,)), ((0,), (0,))),
                                   preferred_element_type=jnp.float32)
        dots = dots - jnp.max(dots, axis=-1, keepdims=True)
        e = jnp.exp(dots)
        attn = e / jnp.sum(e, axis=-1, keepdims=True)            # exact softmax

        av = jax.lax.dot_general(attn.astype(cdt), v.astype(cdt),
                                 (((2,), (1,)), ((0,), (0,))),
                                 preferred_element_type=jnp.float32)  # (bblk, dim, n)
        avm = av.astype(cdt).reshape(bblk * dim, n)
        ao = jnp.dot(avm, wnn1_ref[l],
                     preferred_element_type=jnp.float32) + ptok_ref[l, 3]
        x = x + jnp.swapaxes(ao.reshape(bblk, dim, n), 1, 2)     # undo permute

        # ---- Residual(LayerNorm -> MLP) -----------------------------------
        h2 = layer_norm(x, pdim_ref[l, 2], pdim_ref[l, 3]).astype(cdt)
        h2m = h2.reshape(bblk * n, dim)                          # batch folded into M
        m = jnp.dot(h2m, wfc1_ref[l],
                    preferred_element_type=jnp.float32) + phid_ref[l]
        m = gelu_exact(m).astype(cdt)
        m = jnp.dot(m, wfc2_ref[l],
                    preferred_element_type=jnp.float32) + pdim_ref[l, 4]
        x = x + m.reshape(bblk, n, dim)

    o_ref[...] = x.astype(o_ref.dtype)


# ---------------------------------------------------------------------------
# Parameter packing (PyTorch convention -> kernel slabs)
# ---------------------------------------------------------------------------
def pack_params(torch_layers, *, compute_dtype=jnp.bfloat16):
    """Pack per-layer PyTorch-convention params into 7 kernel slabs.

    PyTorch Linear stores W as (out, in) with y = x @ W.T + b; the kernel wants
    (in, out).  The fused qkv weight is split into a (depth, 3, n, n) slab, the
    attention scale num_tokens**-0.5 is folded into the q weight/bias, matmul
    weights are cast to `compute_dtype`, and LN params / biases are packed into
    three small f32 slabs that the kernel indexes only on leading axes.
    """
    n = torch_layers[0]["nn1w"].shape[0]
    scale = float(n) ** (-0.5)

    def stack(fn, dtype):
        return jnp.stack([fn(p) for p in torch_layers], axis=0).astype(dtype)

    w_qkv = stack(lambda p: jnp.stack([p["qkvw"][0 * n:1 * n].T * scale,
                                       p["qkvw"][1 * n:2 * n].T,
                                       p["qkvw"][2 * n:3 * n].T]), compute_dtype)
    w_nn1 = stack(lambda p: p["nn1w"].T, compute_dtype)
    w_fc1 = stack(lambda p: p["fc1w"].T, compute_dtype)
    w_fc2 = stack(lambda p: p["fc2w"].T, compute_dtype)

    p_dim = stack(lambda p: jnp.stack([p["ln1w"], p["ln1b"], p["ln2w"],
                                       p["ln2b"], p["fc2b"]])[:, None, :],
                  jnp.float32)                                   # (depth, 5, 1, dim)
    p_tok = stack(lambda p: jnp.stack([p["qkvb"][0 * n:1 * n] * scale,
                                       p["qkvb"][1 * n:2 * n],
                                       p["qkvb"][2 * n:3 * n],
                                       p["nn1b"]])[:, None, :],
                  jnp.float32)                                   # (depth, 4, 1, n)
    p_hid = stack(lambda p: p["fc1b"][None, :], jnp.float32)     # (depth, 1, 4*dim)
    return (w_qkv, w_nn1, w_fc1, w_fc2, p_dim, p_tok, p_hid)


def _vmem_capacity_bytes():
    try:
        cap = getattr(pltpu.get_tpu_info(), "vmem_capacity_bytes", None)
        if cap:
            return int(cap)
    except Exception:
        pass
    return 64 << 20          # conservative default: v7x per-TensorCore VMEM


# ---------------------------------------------------------------------------
# Wrapper
# ---------------------------------------------------------------------------
def spectral_transformer(x, packed_params, *, eps=1e-5, block_batch=None):
    """Pallas forward of SpectralTransformer (dropout=0, mask unused)."""
    b, n, dim = x.shape
    depth = packed_params[0].shape[0]

    # Batch block: fill the MXU M dimension (target ~256 rows for v6e/v7x) but
    # keep >= 2 grid points on the parallel axis when possible (v7x has 2 TCs).
    if block_batch is None:
        block_batch = max(1, min(b, max(1, 256 // dim)))
        if b // block_batch < 2 and block_batch > 1:
            block_batch = max(1, b // 2)
    block_batch = max(1, min(block_batch, b))
    while b % block_batch:
        block_batch -= 1
    num_blocks = b // block_batch

    kernel = functools.partial(spectral_kernel, depth=depth, eps=eps)

    def const_spec(a):
        nd = a.ndim
        return pl.BlockSpec(a.shape, lambda i, _nd=nd: (0,) * _nd)

    in_specs = ([pl.BlockSpec((block_batch, n, dim), lambda i: (i, 0, 0))] +
                [const_spec(a) for a in packed_params])
    out_spec = pl.BlockSpec((block_batch, n, dim), lambda i: (i, 0, 0))

    # Generation-aware VMEM budget: double-buffered activation blocks +
    # (worst case double-buffered) resident weight slabs + Mosaic headroom,
    # capped below the physical per-core VMEM with headroom.
    act_bytes = block_batch * n * dim * 4
    w_bytes = sum(math.prod(a.shape) * a.dtype.itemsize for a in packed_params)
    budget = 4 * act_bytes + 2 * w_bytes + (8 << 20)
    cap = _vmem_capacity_bytes()
    vmem_limit = int(max(min(budget, cap - (8 << 20)), 16 << 20))

    return pl.pallas_call(
        kernel,
        out_shape=jax.ShapeDtypeStruct((b, n, dim), jnp.float32),
        grid_spec=pltpu.PrefetchScalarGridSpec(
            num_scalar_prefetch=0,
            grid=(num_blocks,),
            in_specs=in_specs,
            out_specs=out_spec,
        ),
        compiler_params=pltpu.CompilerParams(
            dimension_semantics=("parallel",),
            vmem_limit_bytes=vmem_limit,
        ),
    )(x.astype(jnp.float32), *packed_params)


# ------------------------ pure-JAX reference & init ------------------------
def _layer_norm_ref(z, w, b, eps=1e-5):
    mu = jnp.mean(z, axis=-1, keepdims=True)
    var = jnp.mean((z - mu) ** 2, axis=-1, keepdims=True)
    return (z - mu) / jnp.sqrt(var + eps) * w + b


def reference_forward(x, torch_layers):
    """f32 transcription of the PyTorch SpectralTransformer forward."""
    b, n, dim = x.shape
    scale = float(n) ** (-0.5)
    for p in torch_layers:
        h = _layer_norm_ref(x, p["ln1w"], p["ln1b"])
        ht = jnp.transpose(h, (0, 2, 1))                  # (b, dim, n)
        qkv = ht @ p["qkvw"].T + p["qkvb"]
        q, k, v = jnp.split(qkv, 3, axis=-1)
        dots = jnp.einsum("bik,bjk->bij", q, k) * scale   # (b, dim, dim)
        attn = jax.nn.softmax(dots, axis=-1)
        out = attn @ v
        out = out @ p["nn1w"].T + p["nn1b"]
        x = x + jnp.transpose(out, (0, 2, 1))
        h2 = _layer_norm_ref(x, p["ln2w"], p["ln2b"])
        m = jax.nn.gelu(h2 @ p["fc1w"].T + p["fc1b"], approximate=False)
        m = m @ p["fc2w"].T + p["fc2b"]
        x = x + m
    return x


def init_layer_params(key, dim, num_tokens):
    """Deterministic synthetic params in PyTorch convention (W: (out, in))."""
    ks = jax.random.split(key, 4)

    def linear(k, fan_out, fan_in):
        bound = 1.0 / math.sqrt(fan_in)
        kw, kb = jax.random.split(k)
        w = jax.random.uniform(kw, (fan_out, fan_in), jnp.float32, -bound, bound)
        b = jax.random.uniform(kb, (fan_out,), jnp.float32, -bound, bound)
        return w, b

    qkvw, qkvb = linear(ks[0], 3 * num_tokens, num_tokens)
    nn1w, nn1b = linear(ks[1], num_tokens, num_tokens)
    fc1w, fc1b = linear(ks[2], 4 * dim, dim)
    fc2w, fc2b = linear(ks[3], dim, 4 * dim)
    return dict(
        ln1w=jnp.ones((dim,), jnp.float32), ln1b=jnp.zeros((dim,), jnp.float32),
        qkvw=qkvw, qkvb=qkvb, nn1w=nn1w, nn1b=nn1b,
        ln2w=jnp.ones((dim,), jnp.float32), ln2b=jnp.zeros((dim,), jnp.float32),
        fc1w=fc1w, fc1b=fc1b, fc2w=fc2w, fc2b=fc2b,
    )


if __name__ == "__main__":
    key = jax.random.PRNGKey(0)
    # SpectralTransformer(dim=32, num_tokens=8, depth=2, heads=8, dropout=0):
    # GSAttention accepts `heads`/`mask` but its forward never uses them, and
    # dropout=0 is the identity, so the kernel captures the full forward.
    batch, num_tokens, dim, depth = 8, 8, 32, 2

    kx, kp = jax.random.split(key)
    x = jax.random.normal(kx, (batch, num_tokens, dim), jnp.float32)
    torch_layers = [init_layer_params(k, dim, num_tokens)
                    for k in jax.random.split(kp, depth)]

    ref = reference_forward(x, torch_layers)

    # 1) f32 matmul path: tight check against the pure-JAX reference.
    out_f32 = spectral_transformer(
        x, pack_params(torch_layers, compute_dtype=jnp.float32))
    out_f32 = jax.block_until_ready(out_f32)
    err32 = float(jnp.max(jnp.abs(out_f32 - ref)))
    assert jnp.allclose(out_f32, ref, atol=1e-2, rtol=1e-2), f"f32 max err {err32}"

    # 2) default bf16-matmul path (f32 accumulation): loose check -- the delta
    #    vs the f32 reference is bf16 rounding of matmul inputs, not a bug.
    out_bf16 = spectral_transformer(
        x, pack_params(torch_layers, compute_dtype=jnp.bfloat16))
    out_bf16 = jax.block_until_ready(out_bf16)
    errbf = float(jnp.max(jnp.abs(out_bf16 - ref)))
    assert jnp.allclose(out_bf16, ref, atol=1.5e-1, rtol=1.5e-1), f"bf16 max err {errbf}"

    print("KERNEL_OK")
</pallas_src>

<mosaic_0001>
module attributes {stable_mosaic.version = 11 : i64} {
  func.func @spectral_kernel(%arg0: i32, %arg1: memref<4x8x32xf32, #tpu.memory_space<vmem>>, %arg2: memref<2x3x8x8xf32, #tpu.memory_space<vmem>>, %arg3: memref<2x8x8xf32, #tpu.memory_space<vmem>>, %arg4: memref<2x32x128xf32, #tpu.memory_space<vmem>>, %arg5: memref<2x128x32xf32, #tpu.memory_space<vmem>>, %arg6: memref<2x5x1x32xf32, #tpu.memory_space<vmem>>, %arg7: memref<2x4x1x8xf32, #tpu.memory_space<vmem>>, %arg8: memref<2x1x128xf32, #tpu.memory_space<vmem>>, %arg9: memref<4x8x32xf32, #tpu.memory_space<vmem>>) attributes {dimension_semantics = [#tpu.dimension_semantics<parallel>], iteration_bounds = array<i64: 2>, scalar_prefetch = 0 : i64, scratch_operands = 0 : i64, tpu.core_type = #tpu.core_type<tc>, window_params = [{transform_indices = @transform_0, window_bounds = array<i64: 4, 8, 32>}, {pipeline_mode = #tpu.pipeline_mode<synchronous>, transform_indices = @transform_1, window_bounds = array<i64: 2, 3, 8, 8>}, {pipeline_mode = #tpu.pipeline_mode<synchronous>, transform_indices = @transform_2, window_bounds = array<i64: 2, 8, 8>}, {pipeline_mode = #tpu.pipeline_mode<synchronous>, transform_indices = @transform_3, window_bounds = array<i64: 2, 32, 128>}, {pipeline_mode = #tpu.pipeline_mode<synchronous>, transform_indices = @transform_4, window_bounds = array<i64: 2, 128, 32>}, {pipeline_mode = #tpu.pipeline_mode<synchronous>, transform_indices = @transform_5, window_bounds = array<i64: 2, 5, 1, 32>}, {pipeline_mode = #tpu.pipeline_mode<synchronous>, transform_indices = @transform_6, window_bounds = array<i64: 2, 4, 1, 8>}, {pipeline_mode = #tpu.pipeline_mode<synchronous>, transform_indices = @transform_7, window_bounds = array<i64: 2, 1, 128>}, {transform_indices = @transform_8, window_bounds = array<i64: 4, 8, 32>}]} {
    %c0 = arith.constant 0 : index
    %c0_0 = arith.constant 0 : index
    %c0_1 = arith.constant 0 : index
    %0 = vector.load %arg1[%c0, %c0_0, %c0_1] : memref<4x8x32xf32, #tpu.memory_space<vmem>>, vector<4x8x32xf32>
    %c0_2 = arith.constant 0 : index
    %c0_3 = arith.constant 0 : index
    %c0_4 = arith.constant 0 : index
    %c0_5 = arith.constant 0 : index
    %1 = vector.load %arg6[%c0_2, %c0_3, %c0_4, %c0_5] : memref<2x5x1x32xf32, #tpu.memory_space<vmem>>, vector<1x1x1x32xf32>
    %2 = vector.shape_cast %1 : vector<1x1x1x32xf32> to vector<1x32xf32>
    %c0_6 = arith.constant 0 : index
    %c1 = arith.constant 1 : index
    %c0_7 = arith.constant 0 : index
    %c0_8 = arith.constant 0 : index
    %3 = vector.load %arg6[%c0_6, %c1, %c0_7, %c0_8] : memref<2x5x1x32xf32, #tpu.memory_space<vmem>>, vector<1x1x1x32xf32>
    %4 = vector.shape_cast %3 : vector<1x1x1x32xf32> to vector<1x32xf32>
    %cst = arith.constant dense<0.000000e+00> : vector<4x8xf32>
    %5 = vector.multi_reduction <add>, %0, %cst [2] : vector<4x8x32xf32> to vector<4x8xf32>
    %6 = vector.shape_cast %5 : vector<4x8xf32> to vector<4x8x1xf32>
    %cst_9 = arith.constant 3.200000e+01 : f32
    %7 = vector.broadcast %cst_9 : f32 to vector<4x8x1xf32>
    %8 = arith.divf %6, %7 : vector<4x8x1xf32>
    %9 = vector.broadcast %8 : vector<4x8x1xf32> to vector<4x8x32xf32>
    %10 = arith.subf %0, %9 : vector<4x8x32xf32>
    %11 = arith.mulf %10, %10 : vector<4x8x32xf32>
    %cst_10 = arith.constant dense<0.000000e+00> : vector<4x8xf32>
    %12 = vector.multi_reduction <add>, %11, %cst_10 [2] : vector<4x8x32xf32> to vector<4x8xf32>
    %13 = vector.shape_cast %12 : vector<4x8xf32> to vector<4x8x1xf32>
    %cst_11 = arith.constant 3.200000e+01 : f32
    %14 = vector.broadcast %cst_11 : f32 to vector<4x8x1xf32>
    %15 = arith.divf %13, %14 : vector<4x8x1xf32>
    %cst_12 = arith.constant 9.99999974E-6 : f32
    %16 = vector.broadcast %cst_12 : f32 to vector<4x8x1xf32>
    %17 = arith.addf %15, %16 : vector<4x8x1xf32>
    %18 = math.rsqrt %17 : vector<4x8x1xf32>
    %19 = vector.broadcast %18 : vector<4x8x1xf32> to vector<4x8x32xf32>
    %20 = arith.mulf %10, %19 : vector<4x8x32xf32>
    %21 = vector.shape_cast %2 : vector<1x32xf32> to vector<1x1x32xf32>
    %22 = vector.broadcast %21 : vector<1x1x32xf32> to vector<4x8x32xf32>
    %23 = arith.mulf %20, %22 : vector<4x8x32xf32>
    %24 = vector.shape_cast %4 : vector<1x32xf32> to vector<1x1x32xf32>
    %25 = vector.broadcast %24 : vector<1x1x32xf32> to vector<4x8x32xf32>
    %26 = arith.addf %23, %25 : vector<4x8x32xf32>
    %27 = tpu.transpose %26, [0, 2, 1] : vector<4x8x32xf32> -> vector<4x32x8xf32>
    %28 = vector.shape_cast %27 : vector<4x32x8xf32> to vector<128x8xf32>
    %c0_13 = arith.constant 0 : index
    %c0_14 = arith.constant 0 : index
    %c0_15 = arith.constant 0 : index
    %c0_16 = arith.constant 0 : index
    %29 = vector.load %arg2[%c0_13, %c0_14, %c0_15, %c0_16] : memref<2x3x8x8xf32, #tpu.memory_space<vmem>>, vector<1x1x8x8xf32>
    %30 = vector.shape_cast %29 : vector<1x1x8x8xf32> to vector<8x8xf32>
    %cst_17 = arith.constant dense<0.000000e+00> : vector<128x8xf32>
    %31 = tpu.matmul %28, %30, %cst_17 {dimension_numbers = #tpu.dot_dimension_numbers<[1], [0], [0], [1], [0, 0, 1, 1], [], []>} : vector<128x8xf32>, vector<8x8xf32>, vector<128x8xf32> -> vector<128x8xf32>
    %c0_18 = arith.constant 0 : index
    %c0_19 = arith.constant 0 : index
    %c0_20 = arith.constant 0 : index
    %c0_21 = arith.constant 0 : index
    %32 = vector.load %arg7[%c0_18, %c0_19, %c0_20, %c0_21] : memref<2x4x1x8xf32, #tpu.memory_space<vmem>>, vector<1x1x1x8xf32>
    %33 = vector.shape_cast %32 : vector<1x1x1x8xf32> to vector<1x8xf32>
    %34 = vector.broadcast %33 : vector<1x8xf32> to vector<128x8xf32>
    %35 = arith.addf %31, %34 : vector<128x8xf32>
    %c0_22 = arith.constant 0 : index
    %c1_23 = arith.constant 1 : index
    %c0_24 = arith.constant 0 : index
    %c0_25 = arith.constant 0 : index
    %36 = vector.load %arg2[%c0_22, %c1_23, %c0_24, %c0_25] : memref<2x3x8x8xf32, #tpu.memory_space<vmem>>, vector<1x1x8x8xf32>
    %37 = vector.shape_cast %36 : vector<1x1x8x8xf32> to vector<8x8xf32>
    %cst_26 = arith.constant dense<0.000000e+00> : vector<128x8xf32>
    %38 = tpu.matmul %28, %37, %cst_26 {dimension_numbers = #tpu.dot_dimension_numbers<[1], [0], [0], [1], [0, 0, 1, 1], [], []>} : vector<128x8xf32>, vector<8x8xf32>, vector<128x8xf32> -> vector<128x8xf32>
    %c0_27 = arith.constant 0 : index
    %c1_28 = arith.constant 1 : index
    %c0_29 = arith.constant 0 : index
    %c0_30 = arith.constant 0 : index
    %39 = vector.load %arg7[%c0_27, %c1_28, %c0_29, %c0_30] : memref<2x4x1x8xf32, #tpu.memory_space<vmem>>, vector<1x1x1x8xf32>
    %40 = vector.shape_cast %39 : vector<1x1x1x8xf32> to vector<1x8xf32>
    %41 = vector.broadcast %40 : vector<1x8xf32> to vector<128x8xf32>
    %42 = arith.addf %38, %41 : vector<128x8xf32>
    %c0_31 = arith.constant 0 : index
    %c2 = arith.constant 2 : index
    %c0_32 = arith.constant 0 : index
    %c0_33 = arith.constant 0 : index
    %43 = vector.load %arg2[%c0_31, %c2, %c0_32, %c0_33] : memref<2x3x8x8xf32, #tpu.memory_space<vmem>>, vector<1x1x8x8xf32>
    %44 = vector.shape_cast %43 : vector<1x1x8x8xf32> to vector<8x8xf32>
    %cst_34 = arith.constant dense<0.000000e+00> : vector<128x8xf32>
    %45 = tpu.matmul %28, %44, %cst_34 {dimension_numbers = #tpu.dot_dimension_numbers<[1], [0], [0], [1], [0, 0, 1, 1], [], []>} : vector<128x8xf32>, vector<8x8xf32>, vector<128x8xf32> -> vector<128x8xf32>
    %c0_35 = arith.constant 0 : index
    %c2_36 = arith.constant 2 : index
    %c0_37 = arith.constant 0 : index
    %c0_38 = arith.constant 0 : index
    %46 = vector.load %arg7[%c0_35, %c2_36, %c0_37, %c0_38] : memref<2x4x1x8xf32, #tpu.memory_space<vmem>>, vector<1x1x1x8xf32>
    %47 = vector.shape_cast %46 : vector<1x1x1x8xf32> to vector<1x8xf32>
    %48 = vector.broadcast %47 : vector<1x8xf32> to vector<128x8xf32>
    %49 = arith.addf %45, %48 : vector<128x8xf32>
    %50 = vector.shape_cast %35 : vector<128x8xf32> to vector<4x32x8xf32>
    %51 = vector.shape_cast %42 : vector<128x8xf32> to vector<4x32x8xf32>
    %52 = vector.shape_cast %49 : vector<128x8xf32> to vector<4x32x8xf32>
    %cst_39 = arith.constant dense<0.000000e+00> : vector<4x32x32xf32>
    %53 = tpu.matmul %50, %51, %cst_39 {dimension_numbers = #tpu.dot_dimension_numbers<[2], [2], [1], [1], [0, 0, 0, 1, 1, 1], [0], [0]>} : vector<4x32x8xf32>, vector<4x32x8xf32>, vector<4x32x32xf32> -> vector<4x32x32xf32>
    %cst_40 = arith.constant dense<0xFF800000> : vector<4x32xf32>
    %54 = vector.multi_reduction <maximumf>, %53, %cst_40 [2] : vector<4x32x32xf32> to vector<4x32xf32>
    %55 = vector.shape_cast %54 : vector<4x32xf32> to vector<4x32x1xf32>
    %56 = vector.broadcast %55 : vector<4x32x1xf32> to vector<4x32x32xf32>
    %57 = arith.subf %53, %56 : vector<4x32x32xf32>
    %58 = math.exp %57 : vector<4x32x32xf32>
    %cst_41 = arith.constant dense<0.000000e+00> : vector<4x32xf32>
    %59 = vector.multi_reduction <add>, %58, %cst_41 [2] : vector<4x32x32xf32> to vector<4x32xf32>
    %60 = vector.shape_cast %59 : vector<4x32xf32> to vector<4x32x1xf32>
    %61 = vector.broadcast %60 : vector<4x32x1xf32> to vector<4x32x32xf32>
    %62 = arith.divf %58, %61 : vector<4x32x32xf32>
    %cst_42 = arith.constant dense<0.000000e+00> : vector<4x32x8xf32>
    %63 = tpu.matmul %62, %52, %cst_42 {dimension_numbers = #tpu.dot_dimension_numbers<[2], [1], [1], [2], [0, 0, 0, 1, 1, 2], [0], [0]>} : vector<4x32x32xf32>, vector<4x32x8xf32>, vector<4x32x8xf32> -> vector<4x32x8xf32>
    %64 = vector.shape_cast %63 : vector<4x32x8xf32> to vector<128x8xf32>
    %c0_43 = arith.constant 0 : index
    %c0_44 = arith.constant 0 : index
    %c0_45 = arith.constant 0 : index
    %65 = vector.load %arg3[%c0_43, %c0_44, %c0_45] : memref<2x8x8xf32, #tpu.memory_space<vmem>>, vector<1x8x8xf32>
    %66 = vector.shape_cast %65 : vector<1x8x8xf32> to vector<8x8xf32>
    %cst_46 = arith.constant dense<0.000000e+00> : vector<128x8xf32>
    %67 = tpu.matmul %64, %66, %cst_46 {dimension_numbers = #tpu.dot_dimension_numbers<[1], [0], [0], [1], [0, 0, 1, 1], [], []>} : vector<128x8xf32>, vector<8x8xf32>, vector<128x8xf32> -> vector<128x8xf32>
    %c0_47 = arith.constant 0 : index
    %c3 = arith.constant 3 : index
    %c0_48 = arith.constant 0 : index
    %c0_49 = arith.constant 0 : index
    %68 = vector.load %arg7[%c0_47, %c3, %c0_48, %c0_49] : memref<2x4x1x8xf32, #tpu.memory_space<vmem>>, vector<1x1x1x8xf32>
    %69 = vector.shape_cast %68 : vector<1x1x1x8xf32> to vector<1x8xf32>
    %70 = vector.broadcast %69 : vector<1x8xf32> to vector<128x8xf32>
    %71 = arith.addf %67, %70 : vector<128x8xf32>
    %72 = vector.shape_cast %71 : vector<128x8xf32> to vector<4x32x8xf32>
    %73 = tpu.transpose %72, [0, 2, 1] : vector<4x32x8xf32> -> vector<4x8x32xf32>
    %74 = arith.addf %0, %73 : vector<4x8x32xf32>
    %c0_50 = arith.constant 0 : index
    %c2_51 = arith.constant 2 : index
    %c0_52 = arith.constant 0 : index
    %c0_53 = arith.constant 0 : index
    %75 = vector.load %arg6[%c0_50, %c2_51, %c0_52, %c0_53] : memref<2x5x1x32xf32, #tpu.memory_space<vmem>>, vector<1x1x1x32xf32>
    %76 = vector.shape_cast %75 : vector<1x1x1x32xf32> to vector<1x32xf32>
    %c0_54 = arith.constant 0 : index
    %c3_55 = arith.constant 3 : index
    %c0_56 = arith.constant 0 : index
    %c0_57 = arith.constant 0 : index
    %77 = vector.load %arg6[%c0_54, %c3_55, %c0_56, %c0_57] : memref<2x5x1x32xf32, #tpu.memory_space<vmem>>, vector<1x1x1x32xf32>
    %78 = vector.shape_cast %77 : vector<1x1x1x32xf32> to vector<1x32xf32>
    %cst_58 = arith.constant dense<0.000000e+00> : vector<4x8xf32>
    %79 = vector.multi_reduction <add>, %74, %cst_58 [2] : vector<4x8x32xf32> to vector<4x8xf32>
    %80 = vector.shape_cast %79 : vector<4x8xf32> to vector<4x8x1xf32>
    %cst_59 = arith.constant 3.200000e+01 : f32
    %81 = vector.broadcast %cst_59 : f32 to vector<4x8x1xf32>
    %82 = arith.divf %80, %81 : vector<4x8x1xf32>
    %83 = vector.broadcast %82 : vector<4x8x1xf32> to vector<4x8x32xf32>
    %84 = arith.subf %74, %83 : vector<4x8x32xf32>
    %85 = arith.mulf %84, %84 : vector<4x8x32xf32>
    %cst_60 = arith.constant dense<0.000000e+00> : vector<4x8xf32>
    %86 = vector.multi_reduction <add>, %85, %cst_60 [2] : vector<4x8x32xf32> to vector<4x8xf32>
    %87 = vector.shape_cast %86 : vector<4x8xf32> to vector<4x8x1xf32>
    %cst_61 = arith.constant 3.200000e+01 : f32
    %88 = vector.broadcast %cst_61 : f32 to vector<4x8x1xf32>
    %89 = arith.divf %87, %88 : vector<4x8x1xf32>
    %cst_62 = arith.constant 9.99999974E-6 : f32
    %90 = vector.broadcast %cst_62 : f32 to vector<4x8x1xf32>
    %91 = arith.addf %89, %90 : vector<4x8x1xf32>
    %92 = math.rsqrt %91 : vector<4x8x1xf32>
    %93 = vector.broadcast %92 : vector<4x8x1xf32> to vector<4x8x32xf32>
    %94 = arith.mulf %84, %93 : vector<4x8x32xf32>
    %95 = vector.shape_cast %76 : vector<1x32xf32> to vector<1x1x32xf32>
    %96 = vector.broadcast %95 : vector<1x1x32xf32> to vector<4x8x32xf32>
    %97 = arith.mulf %94, %96 : vector<4x8x32xf32>
    %98 = vector.shape_cast %78 : vector<1x32xf32> to vector<1x1x32xf32>
    %99 = vector.broadcast %98 : vector<1x1x32xf32> to vector<4x8x32xf32>
    %100 = arith.addf %97, %99 : vector<4x8x32xf32>
    %101 = vector.shape_cast %100 : vector<4x8x32xf32> to vector<32x32xf32>
    %c0_63 = arith.constant 0 : index
    %c0_64 = arith.constant 0 : index
    %c0_65 = arith.constant 0 : index
    %102 = vector.load %arg4[%c0_63, %c0_64, %c0_65] : memref<2x32x128xf32, #tpu.memory_space<vmem>>, vector<1x32x128xf32>
    %103 = vector.shape_cast %102 : vector<1x32x128xf32> to vector<32x128xf32>
    %cst_66 = arith.constant dense<0.000000e+00> : vector<32x128xf32>
    %104 = tpu.matmul %101, %103, %cst_66 {dimension_numbers = #tpu.dot_dimension_numbers<[1], [0], [0], [1], [0, 0, 1, 1], [], []>} : vector<32x32xf32>, vector<32x128xf32>, vector<32x128xf32> -> vector<32x128xf32>
    %c0_67 = arith.constant 0 : index
    %c0_68 = arith.constant 0 : index
    %c0_69 = arith.constant 0 : index
    %105 = vector.load %arg8[%c0_67, %c0_68, %c0_69] : memref<2x1x128xf32, #tpu.memory_space<vmem>>, vector<1x1x128xf32>
    %106 = vector.shape_cast %105 : vector<1x1x128xf32> to vector<1x128xf32>
    %107 = vector.broadcast %106 : vector<1x128xf32> to vector<32x128xf32>
    %108 = arith.addf %104, %107 : vector<32x128xf32>
    %cst_70 = arith.constant 0.707106769 : f32
    %109 = vector.broadcast %cst_70 : f32 to vector<32x128xf32>
    %110 = arith.mulf %108, %109 : vector<32x128xf32>
    %111 = math.absf %110 : vector<32x128xf32>
    %cst_71 = arith.constant 0.327591091 : f32
    %112 = vector.broadcast %cst_71 : f32 to vector<32x128xf32>
    %113 = arith.mulf %112, %111 : vector<32x128xf32>
    %cst_72 = arith.constant 1.000000e+00 : f32
    %114 = vector.broadcast %cst_72 : f32 to vector<32x128xf32>
    %115 = arith.addf %114, %113 : vector<32x128xf32>
    %cst_73 = arith.constant 1.000000e+00 : f32
    %116 = vector.broadcast %cst_73 : f32 to vector<32x128xf32>
    %117 = arith.divf %116, %115 : vector<32x128xf32>
    %cst_74 = arith.constant 1.06140542 : f32
    %118 = vector.broadcast %cst_74 : f32 to vector<32x128xf32>
    %119 = arith.mulf %117, %118 : vector<32x128xf32>
    %cst_75 = arith.constant -1.45315206 : f32
    %120 = vector.broadcast %cst_75 : f32 to vector<32x128xf32>
    %121 = arith.addf %120, %119 : vector<32x128xf32>
    %122 = arith.mulf %117, %121 : vector<32x128xf32>
    %cst_76 = arith.constant 1.42141378 : f32
    %123 = vector.broadcast %cst_76 : f32 to vector<32x128xf32>
    %124 = arith.addf %123, %122 : vector<32x128xf32>
    %125 = arith.mulf %117, %124 : vector<32x128xf32>
    %cst_77 = arith.constant -0.284496725 : f32
    %126 = vector.broadcast %cst_77 : f32 to vector<32x128xf32>
    %127 = arith.addf %126, %125 : vector<32x128xf32>
    %128 = arith.mulf %117, %127 : vector<32x128xf32>
    %cst_78 = arith.constant 0.254829586 : f32
    %129 = vector.broadcast %cst_78 : f32 to vector<32x128xf32>
    %130 = arith.addf %129, %128 : vector<32x128xf32>
    %131 = arith.mulf %117, %130 : vector<32x128xf32>
    %cst_79 = arith.constant 0.000000e+00 : f32
    %132 = vector.broadcast %cst_79 : f32 to vector<32x128xf32>
    %133 = arith.subf %132, %111 : vector<32x128xf32>
    %134 = arith.mulf %133, %111 : vector<32x128xf32>
    %135 = math.exp %134 : vector<32x128xf32>
    %136 = arith.mulf %131, %135 : vector<32x128xf32>
    %cst_80 = arith.constant 1.000000e+00 : f32
    %137 = vector.broadcast %cst_80 : f32 to vector<32x128xf32>
    %138 = arith.subf %137, %136 : vector<32x128xf32>
    %cst_81 = arith.constant 0.000000e+00 : f32
    %139 = vector.broadcast %cst_81 : f32 to vector<32x128xf32>
    %140 = arith.cmpf olt, %110, %139 : vector<32x128xf32>
    %cst_82 = arith.constant 0.000000e+00 : f32
    %141 = vector.broadcast %cst_82 : f32 to vector<32x128xf32>
    %142 = arith.subf %141, %138 : vector<32x128xf32>
    %143 = arith.select %140, %142, %138 : vector<32x128xi1>, vector<32x128xf32>
    %cst_83 = arith.constant 5.000000e-01 : f32
    %144 = vector.broadcast %cst_83 : f32 to vector<32x128xf32>
    %145 = arith.mulf %144, %108 : vector<32x128xf32>
    %cst_84 = arith.constant 1.000000e+00 : f32
    %146 = vector.broadcast %cst_84 : f32 to vector<32x128xf32>
    %147 = arith.addf %146, %143 : vector<32x128xf32>
    %148 = arith.mulf %145, %147 : vector<32x128xf32>
    %c0_85 = arith.constant 0 : index
    %c0_86 = arith.constant 0 : index
    %c0_87 = arith.constant 0 : index
    %149 = vector.load %arg5[%c0_85, %c0_86, %c0_87] : memref<2x128x32xf32, #tpu.memory_space<vmem>>, vector<1x128x32xf32>
    %150 = vector.shape_cast %149 : vector<1x128x32xf32> to vector<128x32xf32>
    %cst_88 = arith.constant dense<0.000000e+00> : vector<32x32xf32>
    %151 = tpu.matmul %148, %150, %cst_88 {dimension_numbers = #tpu.dot_dimension_numbers<[1], [0], [0], [1], [0, 0, 1, 1], [], []>} : vector<32x128xf32>, vector<128x32xf32>, vector<32x32xf32> -> vector<32x32xf32>
    %c0_89 = arith.constant 0 : index
    %c4 = arith.constant 4 : index
    %c0_90 = arith.constant 0 : index
    %c0_91 = arith.constant 0 : index
    %152 = vector.load %arg6[%c0_89, %c4, %c0_90, %c0_91] : memref<2x5x1x32xf32, #tpu.memory_space<vmem>>, vector<1x1x1x32xf32>
    %153 = vector.shape_cast %152 : vector<1x1x1x32xf32> to vector<1x32xf32>
    %154 = vector.broadcast %153 : vector<1x32xf32> to vector<32x32xf32>
    %155 = arith.addf %151, %154 : vector<32x32xf32>
    %156 = vector.shape_cast %155 : vector<32x32xf32> to vector<4x8x32xf32>
    %157 = arith.addf %74, %156 : vector<4x8x32xf32>
    %c1_92 = arith.constant 1 : index
    %c0_93 = arith.constant 0 : index
    %c0_94 = arith.constant 0 : index
    %c0_95 = arith.constant 0 : index
    %158 = vector.load %arg6[%c1_92, %c0_93, %c0_94, %c0_95] : memref<2x5x1x32xf32, #tpu.memory_space<vmem>>, vector<1x1x1x32xf32>
    %159 = vector.shape_cast %158 : vector<1x1x1x32xf32> to vector<1x32xf32>
    %c1_96 = arith.constant 1 : index
    %c1_97 = arith.constant 1 : index
    %c0_98 = arith.constant 0 : index
    %c0_99 = arith.constant 0 : index
    %160 = vector.load %arg6[%c1_96, %c1_97, %c0_98, %c0_99] : memref<2x5x1x32xf32, #tpu.memory_space<vmem>>, vector<1x1x1x32xf32>
    %161 = vector.shape_cast %160 : vector<1x1x1x32xf32> to vector<1x32xf32>
    %cst_100 = arith.constant dense<0.000000e+00> : vector<4x8xf32>
    %162 = vector.multi_reduction <add>, %157, %cst_100 [2] : vector<4x8x32xf32> to vector<4x8xf32>
    %163 = vector.shape_cast %162 : vector<4x8xf32> to vector<4x8x1xf32>
    %cst_101 = arith.constant 3.200000e+01 : f32
    %164 = vector.broadcast %cst_101 : f32 to vector<4x8x1xf32>
    %165 = arith.divf %163, %164 : vector<4x8x1xf32>
    %166 = vector.broadcast %165 : vector<4x8x1xf32> to vector<4x8x32xf32>
    %167 = arith.subf %157, %166 : vector<4x8x32xf32>
    %168 = arith.mulf %167, %167 : vector<4x8x32xf32>
    %cst_102 = arith.constant dense<0.000000e+00> : vector<4x8xf32>
    %169 = vector.multi_reduction <add>, %168, %cst_102 [2] : vector<4x8x32xf32> to vector<4x8xf32>
    %170 = vector.shape_cast %169 : vector<4x8xf32> to vector<4x8x1xf32>
    %cst_103 = arith.constant 3.200000e+01 : f32
    %171 = vector.broadcast %cst_103 : f32 to vector<4x8x1xf32>
    %172 = arith.divf %170, %171 : vector<4x8x1xf32>
    %cst_104 = arith.constant 9.99999974E-6 : f32
    %173 = vector.broadcast %cst_104 : f32 to vector<4x8x1xf32>
    %174 = arith.addf %172, %173 : vector<4x8x1xf32>
    %175 = math.rsqrt %174 : vector<4x8x1xf32>
    %176 = vector.broadcast %175 : vector<4x8x1xf32> to vector<4x8x32xf32>
    %177 = arith.mulf %167, %176 : vector<4x8x32xf32>
    %178 = vector.shape_cast %159 : vector<1x32xf32> to vector<1x1x32xf32>
    %179 = vector.broadcast %178 : vector<1x1x32xf32> to vector<4x8x32xf32>
    %180 = arith.mulf %177, %179 : vector<4x8x32xf32>
    %181 = vector.shape_cast %161 : vector<1x32xf32> to vector<1x1x32xf32>
    %182 = vector.broadcast %181 : vector<1x1x32xf32> to vector<4x8x32xf32>
    %183 = arith.addf %180, %182 : vector<4x8x32xf32>
    %184 = tpu.transpose %183, [0, 2, 1] : vector<4x8x32xf32> -> vector<4x32x8xf32>
    %185 = vector.shape_cast %184 : vector<4x32x8xf32> to vector<128x8xf32>
    %c1_105 = arith.constant 1 : index
    %c0_106 = arith.constant 0 : index
    %c0_107 = arith.constant 0 : index
    %c0_108 = arith.constant 0 : index
    %186 = vector.load %arg2[%c1_105, %c0_106, %c0_107, %c0_108] : memref<2x3x8x8xf32, #tpu.memory_space<vmem>>, vector<1x1x8x8xf32>
    %187 = vector.shape_cast %186 : vector<1x1x8x8xf32> to vector<8x8xf32>
    %cst_109 = arith.constant dense<0.000000e+00> : vector<128x8xf32>
    %188 = tpu.matmul %185, %187, %cst_109 {dimension_numbers = #tpu.dot_dimension_numbers<[1], [0], [0], [1], [0, 0, 1, 1], [], []>} : vector<128x8xf32>, vector<8x8xf32>, vector<128x8xf32> -> vector<128x8xf32>
    %c1_110 = arith.constant 1 : index
    %c0_111 = arith.constant 0 : index
    %c0_112 = arith.constant 0 : index
    %c0_113 = arith.constant 0 : index
    %189 = vector.load %arg7[%c1_110, %c0_111, %c0_112, %c0_113] : memref<2x4x1x8xf32, #tpu.memory_space<vmem>>, vector<1x1x1x8xf32>
    %190 = vector.shape_cast %189 : vector<1x1x1x8xf32> to vector<1x8xf32>
    %191 = vector.broadcast %190 : vector<1x8xf32> to vector<128x8xf32>
    %192 = arith.addf %188, %191 : vector<128x8xf32>
    %c1_114 = arith.constant 1 : index
    %c1_115 = arith.constant 1 : index
    %c0_116 = arith.constant 0 : index
    %c0_117 = arith.constant 0 : index
    %193 = vector.load %arg2[%c1_114, %c1_115, %c0_116, %c0_117] : memref<2x3x8x8xf32, #tpu.memory_space<vmem>>, vector<1x1x8x8xf32>
    %194 = vector.shape_cast %193 : vector<1x1x8x8xf32> to vector<8x8xf32>
    %cst_118 = arith.constant dense<0.000000e+00> : vector<128x8xf32>
    %195 = tpu.matmul %185, %194, %cst_118 {dimension_numbers = #tpu.dot_dimension_numbers<[1], [0], [0], [1], [0, 0, 1, 1], [], []>} : vector<128x8xf32>, vector<8x8xf32>, vector<128x8xf32> -> vector<128x8xf32>
    %c1_119 = arith.constant 1 : index
    %c1_120 = arith.constant 1 : index
    %c0_121 = arith.constant 0 : index
    %c0_122 = arith.constant 0 : index
    %196 = vector.load %arg7[%c1_119, %c1_120, %c0_121, %c0_122] : memref<2x4x1x8xf32, #tpu.memory_space<vmem>>, vector<1x1x1x8xf32>
    %197 = vector.shape_cast %196 : vector<1x1x1x8xf32> to vector<1x8xf32>
    %198 = vector.broadcast %197 : vector<1x8xf32> to vector<128x8xf32>
    %199 = arith.addf %195, %198 : vector<128x8xf32>
    %c1_123 = arith.constant 1 : index
    %c2_124 = arith.constant 2 : index
    %c0_125 = arith.constant 0 : index
    %c0_126 = arith.constant 0 : index
    %200 = vector.load %arg2[%c1_123, %c2_124, %c0_125, %c0_126] : memref<2x3x8x8xf32, #tpu.memory_space<vmem>>, vector<1x1x8x8xf32>
    %201 = vector.shape_cast %200 : vector<1x1x8x8xf32> to vector<8x8xf32>
    %cst_127 = arith.constant dense<0.000000e+00> : vector<128x8xf32>
    %202 = tpu.matmul %185, %201, %cst_127 {dimension_numbers = #tpu.dot_dimension_numbers<[1], [0], [0], [1], [0, 0, 1, 1], [], []>} : vector<128x8xf32>, vector<8x8xf32>, vector<128x8xf32> -> vector<128x8xf32>
    %c1_128 = arith.constant 1 : index
    %c2_129 = arith.constant 2 : index
    %c0_130 = arith.constant 0 : index
    %c0_131 = arith.constant 0 : index
    %203 = vector.load %arg7[%c1_128, %c2_129, %c0_130, %c0_131] : memref<2x4x1x8xf32, #tpu.memory_space<vmem>>, vector<1x1x1x8xf32>
    %204 = vector.shape_cast %203 : vector<1x1x1x8xf32> to vector<1x8xf32>
    %205 = vector.broadcast %204 : vector<1x8xf32> to vector<128x8xf32>
    %206 = arith.addf %202, %205 : vector<128x8xf32>
    %207 = vector.shape_cast %192 : vector<128x8xf32> to vector<4x32x8xf32>
    %208 = vector.shape_cast %199 : vector<128x8xf32> to vector<4x32x8xf32>
    %209 = vector.shape_cast %206 : vector<128x8xf32> to vector<4x32x8xf32>
    %cst_132 = arith.constant dense<0.000000e+00> : vector<4x32x32xf32>
    %210 = tpu.matmul %207, %208, %cst_132 {dimension_numbers = #tpu.dot_dimension_numbers<[2], [2], [1], [1], [0, 0, 0, 1, 1, 1], [0], [0]>} : vector<4x32x8xf32>, vector<4x32x8xf32>, vector<4x32x32xf32> -> vector<4x32x32xf32>
    %cst_133 = arith.constant dense<0xFF800000> : vector<4x32xf32>
    %211 = vector.multi_reduction <maximumf>, %210, %cst_133 [2] : vector<4x32x32xf32> to vector<4x32xf32>
    %212 = vector.shape_cast %211 : vector<4x32xf32> to vector<4x32x1xf32>
    %213 = vector.broadcast %212 : vector<4x32x1xf32> to vector<4x32x32xf32>
    %214 = arith.subf %210, %213 : vector<4x32x32xf32>
    %215 = math.exp %214 : vector<4x32x32xf32>
    %cst_134 = arith.constant dense<0.000000e+00> : vector<4x32xf32>
    %216 = vector.multi_reduction <add>, %215, %cst_134 [2] : vector<4x32x32xf32> to vector<4x32xf32>
    %217 = vector.shape_cast %216 : vector<4x32xf32> to vector<4x32x1xf32>
    %218 = vector.broadcast %217 : vector<4x32x1xf32> to vector<4x32x32xf32>
    %219 = arith.divf %215, %218 : vector<4x32x32xf32>
    %cst_135 = arith.constant dense<0.000000e+00> : vector<4x32x8xf32>
    %220 = tpu.matmul %219, %209, %cst_135 {dimension_numbers = #tpu.dot_dimension_numbers<[2], [1], [1], [2], [0, 0, 0, 1, 1, 2], [0], [0]>} : vector<4x32x32xf32>, vector<4x32x8xf32>, vector<4x32x8xf32> -> vector<4x32x8xf32>
    %221 = vector.shape_cast %220 : vector<4x32x8xf32> to vector<128x8xf32>
    %c1_136 = arith.constant 1 : index
    %c0_137 = arith.constant 0 : index
    %c0_138 = arith.constant 0 : index
    %222 = vector.load %arg3[%c1_136, %c0_137, %c0_138] : memref<2x8x8xf32, #tpu.memory_space<vmem>>, vector<1x8x8xf32>
    %223 = vector.shape_cast %222 : vector<1x8x8xf32> to vector<8x8xf32>
    %cst_139 = arith.constant dense<0.000000e+00> : vector<128x8xf32>
    %224 = tpu.matmul %221, %223, %cst_139 {dimension_numbers = #tpu.dot_dimension_numbers<[1], [0], [0], [1], [0, 0, 1, 1], [], []>} : vector<128x8xf32>, vector<8x8xf32>, vector<128x8xf32> -> vector<128x8xf32>
    %c1_140 = arith.constant 1 : index
    %c3_141 = arith.constant 3 : index
    %c0_142 = arith.constant 0 : index
    %c0_143 = arith.constant 0 : index
    %225 = vector.load %arg7[%c1_140, %c3_141, %c0_142, %c0_143] : memref<2x4x1x8xf32, #tpu.memory_space<vmem>>, vector<1x1x1x8xf32>
    %226 = vector.shape_cast %225 : vector<1x1x1x8xf32> to vector<1x8xf32>
    %227 = vector.broadcast %226 : vector<1x8xf32> to vector<128x8xf32>
    %228 = arith.addf %224, %227 : vector<128x8xf32>
    %229 = vector.shape_cast %228 : vector<128x8xf32> to vector<4x32x8xf32>
    %230 = tpu.transpose %229, [0, 2, 1] : vector<4x32x8xf32> -> vector<4x8x32xf32>
    %231 = arith.addf %157, %230 : vector<4x8x32xf32>
    %c1_144 = arith.constant 1 : index
    %c2_145 = arith.constant 2 : index
    %c0_146 = arith.constant 0 : index
    %c0_147 = arith.constant 0 : index
    %232 = vector.load %arg6[%c1_144, %c2_145, %c0_146, %c0_147] : memref<2x5x1x32xf32, #tpu.memory_space<vmem>>, vector<1x1x1x32xf32>
    %233 = vector.shape_cast %232 : vector<1x1x1x32xf32> to vector<1x32xf32>
    %c1_148 = arith.constant 1 : index
    %c3_149 = arith.constant 3 : index
    %c0_150 = arith.constant 0 : index
    %c0_151 = arith.constant 0 : index
    %234 = vector.load %arg6[%c1_148, %c3_149, %c0_150, %c0_151] : memref<2x5x1x32xf32, #tpu.memory_space<vmem>>, vector<1x1x1x32xf32>
    %235 = vector.shape_cast %234 : vector<1x1x1x32xf32> to vector<1x32xf32>
    %cst_152 = arith.constant dense<0.000000e+00> : vector<4x8xf32>
    %236 = vector.multi_reduction <add>, %231, %cst_152 [2] : vector<4x8x32xf32> to vector<4x8xf32>
    %237 = vector.shape_cast %236 : vector<4x8xf32> to vector<4x8x1xf32>
    %cst_153 = arith.constant 3.200000e+01 : f32
    %238 = vector.broadcast %cst_153 : f32 to vector<4x8x1xf32>
    %239 = arith.divf %237, %238 : vector<4x8x1xf32>
    %240 = vector.broadcast %239 : vector<4x8x1xf32> to vector<4x8x32xf32>
    %241 = arith.subf %231, %240 : vector<4x8x32xf32>
    %242 = arith.mulf %241, %241 : vector<4x8x32xf32>
    %cst_154 = arith.constant dense<0.000000e+00> : vector<4x8xf32>
    %243 = vector.multi_reduction <add>, %242, %cst_154 [2] : vector<4x8x32xf32> to vector<4x8xf32>
    %244 = vector.shape_cast %243 : vector<4x8xf32> to vector<4x8x1xf32>
    %cst_155 = arith.constant 3.200000e+01 : f32
    %245 = vector.broadcast %cst_155 : f32 to vector<4x8x1xf32>
    %246 = arith.divf %244, %245 : vector<4x8x1xf32>
    %cst_156 = arith.constant 9.99999974E-6 : f32
    %247 = vector.broadcast %cst_156 : f32 to vector<4x8x1xf32>
    %248 = arith.addf %246, %247 : vector<4x8x1xf32>
    %249 = math.rsqrt %248 : vector<4x8x1xf32>
    %250 = vector.broadcast %249 : vector<4x8x1xf32> to vector<4x8x32xf32>
    %251 = arith.mulf %241, %250 : vector<4x8x32xf32>
    %252 = vector.shape_cast %233 : vector<1x32xf32> to vector<1x1x32xf32>
    %253 = vector.broadcast %252 : vector<1x1x32xf32> to vector<4x8x32xf32>
    %254 = arith.mulf %251, %253 : vector<4x8x32xf32>
    %255 = vector.shape_cast %235 : vector<1x32xf32> to vector<1x1x32xf32>
    %256 = vector.broadcast %255 : vector<1x1x32xf32> to vector<4x8x32xf32>
    %257 = arith.addf %254, %256 : vector<4x8x32xf32>
    %258 = vector.shape_cast %257 : vector<4x8x32xf32> to vector<32x32xf32>
    %c1_157 = arith.constant 1 : index
    %c0_158 = arith.constant 0 : index
    %c0_159 = arith.constant 0 : index
    %259 = vector.load %arg4[%c1_157, %c0_158, %c0_159] : memref<2x32x128xf32, #tpu.memory_space<vmem>>, vector<1x32x128xf32>
    %260 = vector.shape_cast %259 : vector<1x32x128xf32> to vector<32x128xf32>
    %cst_160 = arith.constant dense<0.000000e+00> : vector<32x128xf32>
    %261 = tpu.matmul %258, %260, %cst_160 {dimension_numbers = #tpu.dot_dimension_numbers<[1], [0], [0], [1], [0, 0, 1, 1], [], []>} : vector<32x32xf32>, vector<32x128xf32>, vector<32x128xf32> -> vector<32x128xf32>
    %c1_161 = arith.constant 1 : index
    %c0_162 = arith.constant 0 : index
    %c0_163 = arith.constant 0 : index
    %262 = vector.load %arg8[%c1_161, %c0_162, %c0_163] : memref<2x1x128xf32, #tpu.memory_space<vmem>>, vector<1x1x128xf32>
    %263 = vector.shape_cast %262 : vector<1x1x128xf32> to vector<1x128xf32>
    %264 = vector.broadcast %263 : vector<1x128xf32> to vector<32x128xf32>
    %265 = arith.addf %261, %264 : vector<32x128xf32>
    %cst_164 = arith.constant 0.707106769 : f32
    %266 = vector.broadcast %cst_164 : f32 to vector<32x128xf32>
    %267 = arith.mulf %265, %266 : vector<32x128xf32>
    %268 = math.absf %267 : vector<32x128xf32>
    %cst_165 = arith.constant 0.327591091 : f32
    %269 = vector.broadcast %cst_165 : f32 to vector<32x128xf32>
    %270 = arith.mulf %269, %268 : vector<32x128xf32>
    %cst_166 = arith.constant 1.000000e+00 : f32
    %271 = vector.broadcast %cst_166 : f32 to vector<32x128xf32>
    %272 = arith.addf %271, %270 : vector<32x128xf32>
    %cst_167 = arith.constant 1.000000e+00 : f32
    %273 = vector.broadcast %cst_167 : f32 to vector<32x128xf32>
    %274 = arith.divf %273, %272 : vector<32x128xf32>
    %cst_168 = arith.constant 1.06140542 : f32
    %275 = vector.broadcast %cst_168 : f32 to vector<32x128xf32>
    %276 = arith.mulf %274, %275 : vector<32x128xf32>
    %cst_169 = arith.constant -1.45315206 : f32
    %277 = vector.broadcast %cst_169 : f32 to vector<32x128xf32>
    %278 = arith.addf %277, %276 : vector<32x128xf32>
    %279 = arith.mulf %274, %278 : vector<32x128xf32>
    %cst_170 = arith.constant 1.42141378 : f32
    %280 = vector.broadcast %cst_170 : f32 to vector<32x128xf32>
    %281 = arith.addf %280, %279 : vector<32x128xf32>
    %282 = arith.mulf %274, %281 : vector<32x128xf32>
    %cst_171 = arith.constant -0.284496725 : f32
    %283 = vector.broadcast %cst_171 : f32 to vector<32x128xf32>
    %284 = arith.addf %283, %282 : vector<32x128xf32>
    %285 = arith.mulf %274, %284 : vector<32x128xf32>
    %cst_172 = arith.constant 0.254829586 : f32
    %286 = vector.broadcast %cst_172 : f32 to vector<32x128xf32>
    %287 = arith.addf %286, %285 : vector<32x128xf32>
    %288 = arith.mulf %274, %287 : vector<32x128xf32>
    %cst_173 = arith.constant 0.000000e+00 : f32
    %289 = vector.broadcast %cst_173 : f32 to vector<32x128xf32>
    %290 = arith.subf %289, %268 : vector<32x128xf32>
    %291 = arith.mulf %290, %268 : vector<32x128xf32>
    %292 = math.exp %291 : vector<32x128xf32>
    %293 = arith.mulf %288, %292 : vector<32x128xf32>
    %cst_174 = arith.constant 1.000000e+00 : f32
    %294 = vector.broadcast %cst_174 : f32 to vector<32x128xf32>
    %295 = arith.subf %294, %293 : vector<32x128xf32>
    %cst_175 = arith.constant 0.000000e+00 : f32
    %296 = vector.broadcast %cst_175 : f32 to vector<32x128xf32>
    %297 = arith.cmpf olt, %267, %296 : vector<32x128xf32>
    %cst_176 = arith.constant 0.000000e+00 : f32
    %298 = vector.broadcast %cst_176 : f32 to vector<32x128xf32>
    %299 = arith.subf %298, %295 : vector<32x128xf32>
    %300 = arith.select %297, %299, %295 : vector<32x128xi1>, vector<32x128xf32>
    %cst_177 = arith.constant 5.000000e-01 : f32
    %301 = vector.broadcast %cst_177 : f32 to vector<32x128xf32>
    %302 = arith.mulf %301, %265 : vector<32x128xf32>
    %cst_178 = arith.constant 1.000000e+00 : f32
    %303 = vector.broadcast %cst_178 : f32 to vector<32x128xf32>
    %304 = arith.addf %303, %300 : vector<32x128xf32>
    %305 = arith.mulf %302, %304 : vector<32x128xf32>
    %c1_179 = arith.constant 1 : index
    %c0_180 = arith.constant 0 : index
    %c0_181 = arith.constant 0 : index
    %306 = vector.load %arg5[%c1_179, %c0_180, %c0_181] : memref<2x128x32xf32, #tpu.memory_space<vmem>>, vector<1x128x32xf32>
    %307 = vector.shape_cast %306 : vector<1x128x32xf32> to vector<128x32xf32>
    %cst_182 = arith.constant dense<0.000000e+00> : vector<32x32xf32>
    %308 = tpu.matmul %305, %307, %cst_182 {dimension_numbers = #tpu.dot_dimension_numbers<[1], [0], [0], [1], [0, 0, 1, 1], [], []>} : vector<32x128xf32>, vector<128x32xf32>, vector<32x32xf32> -> vector<32x32xf32>
    %c1_183 = arith.constant 1 : index
    %c4_184 = arith.constant 4 : index
    %c0_185 = arith.constant 0 : index
    %c0_186 = arith.constant 0 : index
    %309 = vector.load %arg6[%c1_183, %c4_184, %c0_185, %c0_186] : memref<2x5x1x32xf32, #tpu.memory_space<vmem>>, vector<1x1x1x32xf32>
    %310 = vector.shape_cast %309 : vector<1x1x1x32xf32> to vector<1x32xf32>
    %311 = vector.broadcast %310 : vector<1x32xf32> to vector<32x32xf32>
    %312 = arith.addf %308, %311 : vector<32x32xf32>
    %313 = vector.shape_cast %312 : vector<32x32xf32> to vector<4x8x32xf32>
    %314 = arith.addf %231, %313 : vector<4x8x32xf32>
    %c0_187 = arith.constant 0 : index
    %c0_188 = arith.constant 0 : index
    %c0_189 = arith.constant 0 : index
    %315 = vector.load %arg9[%c0_187, %c0_188, %c0_189] : memref<4x8x32xf32, #tpu.memory_space<vmem>>, vector<4x8x32xf32>
    tpu.vector_store %arg9[%c0_187, %c0_188, %c0_189], %314 {strides = array<i32>} : memref<4x8x32xf32, #tpu.memory_space<vmem>>, vector<4x8x32xf32>,
    return
  }
  func.func @transform_0(%arg0: i32) -> (i32, i32, i32) {
    %c0_i32 = arith.constant 0 : i32
    %c0_i32_0 = arith.constant 0 : i32
    %c0_i32_1 = arith.constant 0 : i32
    return %arg0, %c0_i32, %c0_i32_0 : i32, i32, i32
  }
  func.func @transform_1(%arg0: i32) -> (i32, i32, i32, i32) {
    %c0_i32 = arith.constant 0 : i32
    %c0_i32_0 = arith.constant 0 : i32
    %c0_i32_1 = arith.constant 0 : i32
    %c0_i32_2 = arith.constant 0 : i32
    %c0_i32_3 = arith.constant 0 : i32
    return %c0_i32, %c0_i32_0, %c0_i32_1, %c0_i32_2 : i32, i32, i32, i32
  }
  func.func @transform_2(%arg0: i32) -> (i32, i32, i32) {
    %c0_i32 = arith.constant 0 : i32
    %c0_i32_0 = arith.constant 0 : i32
    %c0_i32_1 = arith.constant 0 : i32
    %c0_i32_2 = arith.constant 0 : i32
    return %c0_i32, %c0_i32_0, %c0_i32_1 : i32, i32, i32
  }
  func.func @transform_3(%arg0: i32) -> (i32, i32, i32) {
    %c0_i32 = arith.constant 0 : i32
    %c0_i32_0 = arith.constant 0 : i32
    %c0_i32_1 = arith.constant 0 : i32
    %c0_i32_2 = arith.constant 0 : i32
    return %c0_i32, %c0_i32_0, %c0_i32_1 : i32, i32, i32
  }
  func.func @transform_4(%arg0: i32) -> (i32, i32, i32) {
    %c0_i32 = arith.constant 0 : i32
    %c0_i32_0 = arith.constant 0 : i32
    %c0_i32_1 = arith.constant 0 : i32
    %c0_i32_2 = arith.constant 0 : i32
    return %c0_i32, %c0_i32_0, %c0_i32_1 : i32, i32, i32
  }
  func.func @transform_5(%arg0: i32) -> (i32, i32, i32, i32) {
    %c0_i32 = arith.constant 0 : i32
    %c0_i32_0 = arith.constant 0 : i32
    %c0_i32_1 = arith.constant 0 : i32
    %c0_i32_2 = arith.constant 0 : i32
    %c0_i32_3 = arith.constant 0 : i32
    return %c0_i32, %c0_i32_0, %c0_i32_1, %c0_i32_2 : i32, i32, i32, i32
  }
  func.func @transform_6(%arg0: i32) -> (i32, i32, i32, i32) {
    %c0_i32 = arith.constant 0 : i32
    %c0_i32_0 = arith.constant 0 : i32
    %c0_i32_1 = arith.constant 0 : i32
    %c0_i32_2 = arith.constant 0 : i32
    %c0_i32_3 = arith.constant 0 : i32
    return %c0_i32, %c0_i32_0, %c0_i32_1, %c0_i32_2 : i32, i32, i32, i32
  }
  func.func @transform_7(%arg0: i32) -> (i32, i32, i32) {
    %c0_i32 = arith.constant 0 : i32
    %c0_i32_0 = arith.constant 0 : i32
    %c0_i32_1 = arith.constant 0 : i32
    %c0_i32_2 = arith.constant 0 : i32
    return %c0_i32, %c0_i32_0, %c0_i32_1 : i32, i32, i32
  }
  func.func @transform_8(%arg0: i32) -> (i32, i32, i32) {
    %c0_i32 = arith.constant 0 : i32
    %c0_i32_0 = arith.constant 0 : i32
    %c0_i32_1 = arith.constant 0 : i32
    return %arg0, %c0_i32, %c0_i32_0 : i32, i32, i32
  }
}

</mosaic_0001>

<llo_original>
// kernel: tpu_custom_call.1
$region0: #{tpu_custom_call.1}
  #allocation0 [shape = 'u32[]', space=smem, size = 0x4, offset = 0x4, fixed_abs, tag = 'smem constant byte address 0x4 - core index']
  #allocation1 [shape = 'u32[144,128]{1,0:T(1,128)}', space=vmem, size = 0x12000, scoped, tag = 'internal scratch']
  %s0 = inlined_call_operand.vmem [shape: f32[8,8,32], index: 0, kind: input, shape index: {}]
  %s1 = inlined_call_operand.vmem [shape: f32[2,3,8,8], index: 1, kind: input, shape index: {}]
  %s2 = inlined_call_operand.vmem [shape: f32[2,8,8], index: 2, kind: input, shape index: {}]
  %s3 = inlined_call_operand.vmem [shape: f32[2,32,128], index: 3, kind: input, shape index: {}]
  %s4 = inlined_call_operand.vmem [shape: f32[2,128,32], index: 4, kind: input, shape index: {}]
  %s5 = inlined_call_operand.vmem [shape: f32[2,5,1,32], index: 5, kind: input, shape index: {}]
  %s6 = inlined_call_operand.vmem [shape: f32[2,4,1,8], index: 6, kind: input, shape index: {}]
  %s7 = inlined_call_operand.vmem [shape: f32[2,1,128], index: 7, kind: input, shape index: {}]
  %s8 = inlined_call_operand.hbm [shape: f32[8,8,32], index: 8, kind: output, shape index: {}]
  %s9 = sld [smem:[#allocation0]]
  $region65: #{tpu_custom_call.1} parent=0
    _
  %s11 = ssub.s32 1, %s9
  %s12 = scalar_select 0, %s11, %s9
  $region1: #{tpu_custom_call.1} parent=0
    #allocation2 [shape = 'u8[32768]{0}', space=vmem, size = 0x8000, scoped, tag = 'output window, operand 0']
    #allocation3 [shape = 's32[2]{0}', space=sflag, size = 0x8, scoped, tag = 'scoped memory for tpu_custom_call.1']
    %13 = vsyncpa [#allocation3], 0
    %s14 = scalar_lea.sflag [#allocation3], 1
    %15 = vsyncpa %s14, 0
    loop: start=0, step=1, limit=4
    $region2: #{tpu_custom_call.1} parent=1 // loop_pre_header
      _
    $region3: #{tpu_custom_call.1} parent=1 // loop_header
      %s17 = sphi 0, %s21
      %p18 = scmp.ge.s32.totalorder %s17, 4
      %s27 = sphi 0, %s29
      %s30 = sphi 0, %s27
      %s31 = sphi 0, %s30
      %s47 = sphi 0, %s31
      %s51 = sphi 0, %s51
      %s53 = sphi 0, %s51
      %s54 = sphi 0, %s53
      %s68 = sphi 0, %s54
      %s72 = sphi 0, %s72
      %s74 = sphi 0, %s72
      %s75 = sphi 0, %s74
      %s89 = sphi 0, %s75
      %s93 = sphi 0, %s93
      %s95 = sphi 0, %s93
      %s96 = sphi 0, %s95
      %s110 = sphi 0, %s96
      %s114 = sphi 0, %s114
      %s116 = sphi 0, %s114
      %s117 = sphi 0, %s116
      %s131 = sphi 0, %s117
      %s135 = sphi 0, %s135
      %s137 = sphi 0, %s135
      %s138 = sphi 0, %s137
      %s152 = sphi 0, %s138
      %s156 = sphi 0, %s156
      %s158 = sphi 0, %s156
      %s159 = sphi 0, %s158
      %s173 = sphi 0, %s159
      %s177 = sphi 0, %s177
      %s179 = sphi 0, %s177
      %s180 = sphi 0, %s179
      %s194 = sphi 0, %s180
      %s200 = sphi 0, %s202
      %s203 = sphi 0, %s200
      %s204 = sphi 0, %s203
      %s220 = sphi 0, %s204
    $region4: #{tpu_custom_call.1} parent=1 // loop_header_branch
      %20 = sbr.rel (%p18) target = $region8
    $region5: #{tpu_custom_call.1} parent=1 // loop_body
      %s22 = ssub.s32 %s17, 1
      %s23 = ssub.s32 %s17, 2
      %s24 = sadd.s32 %s17, 1
      %s25 = ssub.s32 %s17, %s24
      %p26 = scmp.eq.s32.totalorder %s25, 0
      %s28 = sadd.s32 %s27, 1
      %s29 = scalar_select %p26, %s27, %s28
      %p32 = pneg %p26
      %p33 = scmp.eq.s32.totalorder %s17, 1
      %p34 = por %p32, %p33
      %p35 = scmp.ne.s32.totalorder %s27, %s30
      %p36 = scmp.eq.s32.totalorder %s17, 0
      %p37 = por %p35, %p36
      %p38 = scmp.ne.s32.totalorder %s27, %s30
      %p39 = scmp.eq.s32.totalorder %s22, 1
      %p40 = por %p38, %p39
      %p41 = scmp.ne.s32.totalorder %s30, %s31
      %p42 = scmp.eq.s32.totalorder %s22, 0
      %p43 = por %p41, %p42
      %p44 = scmp.ne.s32.totalorder %s30, %s31
      %p45 = scmp.eq.s32.totalorder %s23, 1
      %p46 = por %p44, %p45
      %p48 = scmp.ne.s32.totalorder %s31, %s47
      %p49 = scmp.eq.s32.totalorder %s23, 0
      %p50 = por %p48, %p49
      %s52 = sadd.s32 %s51, 1
      %p55 = scmp.eq.s32.totalorder %s17, 1
      %p56 = scmp.ne.s32.totalorder %s51, %s53
      %p57 = scmp.eq.s32.totalorder %s17, 0
      %p58 = por %p56, %p57
      %p59 = scmp.ne.s32.totalorder %s51, %s53
      %p60 = scmp.eq.s32.totalorder %s22, 1
      %p61 = por %p59, %p60
      %p62 = scmp.ne.s32.totalorder %s53, %s54
      %p63 = scmp.eq.s32.totalorder %s22, 0
      %p64 = por %p62, %p63
      %p65 = scmp.ne.s32.totalorder %s53, %s54
      %p66 = scmp.eq.s32.totalorder %s23, 1
      %p67 = por %p65, %p66
      %p69 = scmp.ne.s32.totalorder %s54, %s68
      %p70 = scmp.eq.s32.totalorder %s23, 0
      %p71 = por %p69, %p70
      %s73 = sadd.s32 %s72, 1
      %p76 = scmp.eq.s32.totalorder %s17, 1
      %p77 = scmp.ne.s32.totalorder %s72, %s74
      %p78 = scmp.eq.s32.totalorder %s17, 0
      %p79 = por %p77, %p78
      %p80 = scmp.ne.s32.totalorder %s72, %s74
      %p81 = scmp.eq.s32.totalorder %s22, 1
      %p82 = por %p80, %p81
      %p83 = scmp.ne.s32.totalorder %s74, %s75
      %p84 = scmp.eq.s32.totalorder %s22, 0
      %p85 = por %p83, %p84
      %p86 = scmp.ne.s32.totalorder %s74, %s75
      %p87 = scmp.eq.s32.totalorder %s23, 1
      %p88 = por %p86, %p87
      %p90 = scmp.ne.s32.totalorder %s75, %s89
      %p91 = scmp.eq.s32.totalorder %s23, 0
      %p92 = por %p90, %p91
      %s94 = sadd.s32 %s93, 1
      %p97 = scmp.eq.s32.totalorder %s17, 1
      %p98 = scmp.ne.s32.totalorder %s93, %s95
      %p99 = scmp.eq.s32.totalorder %s17, 0
      %p100 = por %p98, %p99
      %p101 = scmp.ne.s32.totalorder %s93, %s95
      %p102 = scmp.eq.s32.totalorder %s22, 1
      %p103 = por %p101, %p102
      %p104 = scmp.ne.s32.totalorder %s95, %s96
      %p105 = scmp.eq.s32.totalorder %s22, 0
      %p106 = por %p104, %p105
      %p107 = scmp.ne.s32.totalorder %s95, %s96
      %p108 = scmp.eq.s32.totalorder %s23, 1
      %p109 = por %p107, %p108
      %p111 = scmp.ne.s32.totalorder %s96, %s110
      %p112 = scmp.eq.s32.totalorder %s23, 0
      %p113 = por %p111, %p112
      %s115 = sadd.s32 %s114, 1
      %p118 = scmp.eq.s32.totalorder %s17, 1
      %p119 = scmp.ne.s32.totalorder %s114, %s116
      %p120 = scmp.eq.s32.totalorder %s17, 0
      %p121 = por %p119, %p120
      %p122 = scmp.ne.s32.totalorder %s114, %s116
      %p123 = scmp.eq.s32.totalorder %s22, 1
      %p124 = por %p122, %p123
      %p125 = scmp.ne.s32.totalorder %s116, %s117
      %p126 = scmp.eq.s32.totalorder %s22, 0
      %p127 = por %p125, %p126
      %p128 = scmp.ne.s32.totalorder %s116, %s117
      %p129 = scmp.eq.s32.totalorder %s23, 1
      %p130 = por %p128, %p129
      %p132 = scmp.ne.s32.totalorder %s117, %s131
      %p133 = scmp.eq.s32.totalorder %s23, 0
      %p134 = por %p132, %p133
      %s136 = sadd.s32 %s135, 1
      %p139 = scmp.eq.s32.totalorder %s17, 1
      %p140 = scmp.ne.s32.totalorder %s135, %s137
      %p141 = scmp.eq.s32.totalorder %s17, 0
      %p142 = por %p140, %p141
      %p143 = scmp.ne.s32.totalorder %s135, %s137
      %p144 = scmp.eq.s32.totalorder %s22, 1
      %p145 = por %p143, %p144
      %p146 = scmp.ne.s32.totalorder %s137, %s138
      %p147 = scmp.eq.s32.totalorder %s22, 0
      %p148 = por %p146, %p147
      %p149 = scmp.ne.s32.totalorder %s137, %s138
      %p150 = scmp.eq.s32.totalorder %s23, 1
      %p151 = por %p149, %p150
      %p153 = scmp.ne.s32.totalorder %s138, %s152
      %p154 = scmp.eq.s32.totalorder %s23, 0
      %p155 = por %p153, %p154
      %s157 = sadd.s32 %s156, 1
      %p160 = scmp.eq.s32.totalorder %s17, 1
      %p161 = scmp.ne.s32.totalorder %s156, %s158
      %p162 = scmp.eq.s32.totalorder %s17, 0
      %p163 = por %p161, %p162
      %p164 = scmp.ne.s32.totalorder %s156, %s158
      %p165 = scmp.eq.s32.totalorder %s22, 1
      %p166 = por %p164, %p165
      %p167 = scmp.ne.s32.totalorder %s158, %s159
      %p168 = scmp.eq.s32.totalorder %s22, 0
      %p169 = por %p167, %p168
      %p170 = scmp.ne.s32.totalorder %s158, %s159
      %p171 = scmp.eq.s32.totalorder %s23, 1
      %p172 = por %p170, %p171
      %p174 = scmp.ne.s32.totalorder %s159, %s173
      %p175 = scmp.eq.s32.totalorder %s23, 0
      %p176 = por %p174, %p175
      %s178 = sadd.s32 %s177, 1
      %p181 = scmp.eq.s32.totalorder %s17, 1
      %p182 = scmp.ne.s32.totalorder %s177, %s179
      %p183 = scmp.eq.s32.totalorder %s17, 0
      %p184 = por %p182, %p183
      %p185 = scmp.ne.s32.totalorder %s177, %s179
      %p186 = scmp.eq.s32.totalorder %s22, 1
      %p187 = por %p185, %p186
      %p188 = scmp.ne.s32.totalorder %s179, %s180
      %p189 = scmp.eq.s32.totalorder %s22, 0
      %p190 = por %p188, %p189
      %p191 = scmp.ne.s32.totalorder %s179, %s180
      %p192 = scmp.eq.s32.totalorder %s23, 1
      %p193 = por %p191, %p192
      %p195 = scmp.ne.s32.totalorder %s180, %s194
      %p196 = scmp.eq.s32.totalorder %s23, 0
      %p197 = por %p195, %p196
      %s198 = ssub.s32 %s17, %s24
      %p199 = scmp.eq.s32.totalorder %s198, 0
      %s201 = sadd.s32 %s200, 1
      %s202 = scalar_select %p199, %s200, %s201
      %p205 = pneg %p199
      %p206 = scmp.eq.s32.totalorder %s17, 1
      %p207 = por %p205, %p206
      %p208 = scmp.ne.s32.totalorder %s200, %s203
      %p209 = scmp.eq.s32.totalorder %s17, 0
      %p210 = por %p208, %p209
      %p211 = scmp.ne.s32.totalorder %s200, %s203
      %p212 = scmp.eq.s32.totalorder %s22, 1
      %p213 = por %p211, %p212
      %p214 = scmp.ne.s32.totalorder %s203, %s204
      %p215 = scmp.eq.s32.totalorder %s22, 0
      %p216 = por %p214, %p215
      %p217 = scmp.ne.s32.totalorder %s203, %s204
      %p218 = scmp.eq.s32.totalorder %s23, 1
      %p219 = por %p217, %p218
      %p221 = scmp.ne.s32.totalorder %s204, %s220
      %p222 = scmp.eq.s32.totalorder %s23, 0
      %p223 = por %p221, %p222
      %p224 = scmp.le.s32.totalorder 1, %s17
      %p225 = scmp.lt.s32.totalorder %s17, 3
      %p226 = pnand %p224, %p225
      %p227 = pneg %p226
      // Predicated region
      $region9: #{tpu_custom_call.1} parent=5 // pred_check
        _
      $region10: #{tpu_custom_call.1} parent=5 // pred_check_branch
        %229 = sbr.rel (%p226) target = $region12
      $region11: #{tpu_custom_call.1} parent=5 // pred_region
        %s230 = ssub.s32 %s17, 1
        // Predicated region
        $region13: #{tpu_custom_call.1} parent=11 // pred_check
          %p231 = pneg %p64
        $region14: #{tpu_custom_call.1} parent=11 // pred_check_branch
          %233 = sbr.rel (%p231) target = $region16
        $region15: #{tpu_custom_call.1} parent=11 // pred_region
          _
        $region16: #{tpu_custom_call.1} parent=11 // pred_fallthru
          _
        // Predicated region
        $region17: #{tpu_custom_call.1} parent=11 // pred_check
          %p234 = pneg %p85
        $region18: #{tpu_custom_call.1} parent=11 // pred_check_branch
          %236 = sbr.rel (%p234) target = $region20
        $region19: #{tpu_custom_call.1} parent=11 // pred_region
          _
        $region20: #{tpu_custom_call.1} parent=11 // pred_fallthru
          _
        // Predicated region
        $region21: #{tpu_custom_call.1} parent=11 // pred_check
          %p237 = pneg %p106
        $region22: #{tpu_custom_call.1} parent=11 // pred_check_branch
          %239 = sbr.rel (%p237) target = $region24
        $region23: #{tpu_custom_call.1} parent=11 // pred_region
          _
        $region24: #{tpu_custom_call.1} parent=11 // pred_fallthru
          _
        // Predicated region
        $region25: #{tpu_custom_call.1} parent=11 // pred_check
          %p240 = pneg %p127
        $region26: #{tpu_custom_call.1} parent=11 // pred_check_branch
          %242 = sbr.rel (%p240) target = $region28
        $region27: #{tpu_custom_call.1} parent=11 // pred_region
          _
        $region28: #{tpu_custom_call.1} parent=11 // pred_fallthru
          _
        // Predicated region
        $region29: #{tpu_custom_call.1} parent=11 // pred_check
          %p243 = pneg %p148
        $region30: #{tpu_custom_call.1} parent=11 // pred_check_branch
          %245 = sbr.rel (%p243) target = $region32
        $region31: #{tpu_custom_call.1} parent=11 // pred_region
          _
        $region32: #{tpu_custom_call.1} parent=11 // pred_fallthru
          _
        // Predicated region
        $region33: #{tpu_custom_call.1} parent=11 // pred_check
          %p246 = pneg %p169
        $region34: #{tpu_custom_call.1} parent=11 // pred_check_branch
          %248 = sbr.rel (%p246) target = $region36
        $region35: #{tpu_custom_call.1} parent=11 // pred_region
          _
        $region36: #{tpu_custom_call.1} parent=11 // pred_fallthru
          _
        // Predicated region
        $region37: #{tpu_custom_call.1} parent=11 // pred_check
          %p249 = pneg %p190
        $region38: #{tpu_custom_call.1} parent=11 // pred_check_branch
          %251 = sbr.rel (%p249) target = $region40
        $region39: #{tpu_custom_call.1} parent=11 // pred_region
          _
        $region40: #{tpu_custom_call.1} parent=11 // pred_fallthru
          _
      $region12: #{tpu_custom_call.1} parent=5 // pred_fallthru
        _
      %p252 = scmp.lt.s32.totalorder %s17, 2
      // Predicated region
      $region41: #{tpu_custom_call.1} parent=5 // pred_check
        %p253 = pneg %p252
      $region42: #{tpu_custom_call.1} parent=5 // pred_check_branch
        %255 = sbr.rel (%p253) target = $region44
      $region43: #{tpu_custom_call.1} parent=5 // pred_region
        // Predicated region
        $region45: #{tpu_custom_call.1} parent=43 // pred_check
          %p256 = pneg %p37
        $region46: #{tpu_custom_call.1} parent=43 // pred_check_branch
          %258 = sbr.rel (%p256) target = $region48
        $region47: #{tpu_custom_call.1} parent=43 // pred_region
          %s259 = smul.u32 4, %s17
          %p260 = scmp.lt.s32.totalorder %s259, 7
          %s261 = scalar_select %p260, %s259, 7
          %s262 = smul.addr %s261, 8
          %s263 = scalar_lea.vmem %s0, %s262
          %s264 = smul.u32 4, %s17
        $region48: #{tpu_custom_call.1} parent=43 // pred_fallthru
          _
      $region44: #{tpu_custom_call.1} parent=5 // pred_fallthru
        _
      %p265 = scmp.le.s32.totalorder 1, %s17
      %p266 = scmp.lt.s32.totalorder %s17, 3
      %p267 = pnand %p265, %p266
      %p268 = pneg %p267
      // Predicated region
      $region49: #{tpu_custom_call.1} parent=5 // pred_check
        _
      $region50: #{tpu_custom_call.1} parent=5 // pred_check_branch
        %270 = sbr.rel (%p267) target = $region52
      $region51: #{tpu_custom_call.1} parent=5 // pred_region
        %s271 = ssub.s32 %s17, 1
        %s272 = smul.u32 4, %s22
        %p273 = scmp.lt.s32.totalorder %s272, 7
        %s274 = scalar_select %p273, %s272, 7
        %s275 = smul.addr %s274, 8
        %s276 = scalar_lea.vmem %s0, %s275
        %p277 = pneg %p43
        %p278 = pneg %p40
        %p279 = pneg %p64
        %p280 = pneg %p61
        %p281 = pneg %p85
        %p282 = pneg %p82
        %p283 = pneg %p106
        %p284 = pneg %p103
        %p285 = pneg %p127
        %p286 = pneg %p124
        %p287 = pneg %p148
        %p288 = pneg %p145
        %p289 = pneg %p169
        %p290 = pneg %p166
        %p291 = pneg %p190
        %p292 = pneg %p187
        %p293 = pneg %p216
        %p294 = pneg %p213
        %s295 = sand.u32 %s203, 1
        %s296 = scalar_lea.sflag [#allocation3], %s295
        %s297 = sand.u32 %s203, 1
        %s298 = smul.addr %s297, 32
        %s299 = scalar_lea.vmem [#allocation2], %s298
        %s300 = smul.u32 4, %s22
        %p301 = scmp.lt.s32.totalorder %s300, 7
        %s302 = scalar_select %p301, %s300, 7
        %s303 = smul.addr %s302, 8
        %s304 = scalar_lea.vmem %s0, %s303
        %s305 = smul.u32 4, %s22
        %s306 = smul.u32 4, %s22
        %v307 = vld [vmem:[%s304] sm:$0xff]
        %v308 = vld [vmem:[%s304 + $0x8] sm:$0xff]
        %v309 = vld [vmem:[%s304 + $0x10] sm:$0xff]
        %v310 = vld [vmem:[%s304 + $0x18] sm:$0xff]
        %v311 = vld [vmem:[%s5] sm:$0x1]
        %s312 = scalar_lea.vmem %s5, 1
        %v313 = vld [vmem:[%s312] sm:$0x1]
        %vm314 = vcmask 261120
        %v315 = vsel %vm314, %v307, 0.0
        %316 = vadd.xlane.f32.xlu0 %v315
        %v317 = vpop.xlane.xlu0 %316
        %v318 = vsel %vm314, %v308, 0.0
        %319 = vadd.xlane.f32.xlu0 %v318
        %v320 = vpop.xlane.xlu0 %319
        %v321 = vsel %vm314, %v309, 0.0
        %322 = vadd.xlane.f32.xlu0 %v321
        %v323 = vpop.xlane.xlu0 %322
        %v324 = vsel %vm314, %v310, 0.0
        %325 = vadd.xlane.f32.xlu0 %v324
        %v326 = vpop.xlane.xlu0 %325
        %v327 = vrcp.pop 32.0
        %v328 = vmul.f32 %v317, %v327
        %v329 = vmul.f32 %v320, %v327
        %v330 = vmul.f32 %v323, %v327
        %v331 = vmul.f32 %v326, %v327
        %v332 = vsub.f32 %v307, %v328
        %v333 = vsub.f32 %v308, %v329
        %v334 = vsub.f32 %v309, %v330
        %v335 = vsub.f32 %v310, %v331
        %v336 = vmul.f32 %v332, %v332
        %v337 = vmul.f32 %v333, %v333
        %v338 = vmul.f32 %v334, %v334
        %v339 = vmul.f32 %v335, %v335
        %v340 = vsel %vm314, %v336, 0.0
        %341 = vadd.xlane.f32.xlu0 %v340
        %v342 = vpop.xlane.xlu0 %341
        %v343 = vsel %vm314, %v337, 0.0
        %344 = vadd.xlane.f32.xlu0 %v343
        %v345 = vpop.xlane.xlu0 %344
        %v346 = vsel %vm314, %v338, 0.0
        %347 = vadd.xlane.f32.xlu0 %v346
        %v348 = vpop.xlane.xlu0 %347
        %v349 = vsel %vm314, %v339, 0.0
        %350 = vadd.xlane.f32.xlu0 %v349
        %v351 = vpop.xlane.xlu0 %350
        %v352 = vmul.f32 %v342, %v327
        %v353 = vmul.f32 %v345, %v327
        %v354 = vmul.f32 %v348, %v327
        %v355 = vmul.f32 %v351, %v327
        %v356 = vadd.f32 %v352, 1e-05
        %v357 = vadd.f32 %v353, 1e-05
        %v358 = vadd.f32 %v354, 1e-05
        %v359 = vadd.f32 %v355, 1e-05
        %v360 = vrsqrt.pop %v356
        %v361 = vrsqrt.pop %v357
        %v362 = vrsqrt.pop %v358
        %v363 = vrsqrt.pop %v359
        %v364 = vmul.f32 %v332, %v360
        %v365 = vmul.f32 %v333, %v361
        %v366 = vmul.f32 %v334, %v362
        %v367 = vmul.f32 %v335, %v363
        %v369 = vlaneseq
        %v370 = vshrl.u32 %v369, 7
        %v371 = vsub.s32 0, %v370
        %v372 = vrot.slane %v311, %v371
        %v374 = vmul.f32 %v364, %v372
        %v375 = vmul.f32 %v365, %v372
        %v376 = vmul.f32 %v366, %v372
        %v377 = vmul.f32 %v367, %v372
        %v379 = vlaneseq
        %v380 = vshrl.u32 %v379, 7
        %v381 = vsub.s32 0, %v380
        %v382 = vrot.slane %v313, %v381
        %v384 = vadd.f32 %v374, %v382
        %v385 = vadd.f32 %v375, %v382
        %v386 = vadd.f32 %v376, %v382
        %v387 = vadd.f32 %v377, %v382
        %388 = vxpose.xlu0.b32.start [1/16] %v384, 128
        %389 = vxpose.xlu0.b32.cont [2/16] 0.0, 128
        %390 = vxpose.xlu0.b32.cont [3/16] 0.0, 128
        %391 = vxpose.xlu0.b32.cont [4/16] 0.0, 128
        %392 = vxpose.xlu0.b32.cont [5/16] 0.0, 128
        %393 = vxpose.xlu0.b32.cont [6/16] 0.0, 128
        %394 = vxpose.xlu0.b32.cont [7/16] 0.0, 128
        %395 = vxpose.xlu0.b32.cont [8/16] 0.0, 128
        %396 = vxpose.xlu0.b32.cont [9/16] 0.0, 128
        %397 = vxpose.xlu0.b32.cont [10/16] 0.0, 128
        %398 = vxpose.xlu0.b32.cont [11/16] 0.0, 128
        %399 = vxpose.xlu0.b32.cont [12/16] 0.0, 128
        %400 = vxpose.xlu0.b32.cont [13/16] 0.0, 128
        %401 = vxpose.xlu0.b32.cont [14/16] 0.0, 128
        %402 = vxpose.xlu0.b32.cont [15/16] 0.0, 128
        %403 = vxpose.xlu0.b32.end [16/16] 0.0, 128
        %v404 = vpop.trf.xlu0
        %v405 = vpop.trf.xlu0
        %v406 = vpop.trf.xlu0
        %v407 = vpop.trf.xlu0
        %v408 = vpop.trf.xlu0
        %v409 = vpop.trf.xlu0
        %v410 = vpop.trf.xlu0
        %v411 = vpop.trf.xlu0
        %v412 = vpop.trf.xlu0
        %v413 = vpop.trf.xlu0
        %v414 = vpop.trf.xlu0
        %v415 = vpop.trf.xlu0
        %v416 = vpop.trf.xlu0
        %v417 = vpop.trf.xlu0
        %v418 = vpop.trf.xlu0
        %v419 = vpop.trf.xlu0
        %420 = vxpose.xlu0.b32.start [1/16] %v385, 128
        %421 = vxpose.xlu0.b32.cont [2/16] 0.0, 128
        %422 = vxpose.xlu0.b32.cont [3/16] 0.0, 128
        %423 = vxpose.xlu0.b32.cont [4/16] 0.0, 128
        %424 = vxpose.xlu0.b32.cont [5/16] 0.0, 128
        %425 = vxpose.xlu0.b32.cont [6/16] 0.0, 128
        %426 = vxpose.xlu0.b32.cont [7/16] 0.0, 128
        %427 = vxpose.xlu0.b32.cont [8/16] 0.0, 128
        %428 = vxpose.xlu0.b32.cont [9/16] 0.0, 128
        %429 = vxpose.xlu0.b32.cont [10/16] 0.0, 128
        %430 = vxpose.xlu0.b32.cont [11/16] 0.0, 128
        %431 = vxpose.xlu0.b32.cont [12/16] 0.0, 128
        %432 = vxpose.xlu0.b32.cont [13/16] 0.0, 128
        %433 = vxpose.xlu0.b32.cont [14/16] 0.0, 128
        %434 = vxpose.xlu0.b32.cont [15/16] 0.0, 128
        %435 = vxpose.xlu0.b32.end [16/16] 0.0, 128
        %v436 = vpop.trf.xlu0
        %v437 = vpop.trf.xlu0
        %v438 = vpop.trf.xlu0
        %v439 = vpop.trf.xlu0
        %v440 = vpop.trf.xlu0
        %v441 = vpop.trf.xlu0
        %v442 = vpop.trf.xlu0
        %v443 = vpop.trf.xlu0
        %v444 = vpop.trf.xlu0
        %v445 = vpop.trf.xlu0
        %v446 = vpop.trf.xlu0
        %v447 = vpop.trf.xlu0
        %v448 = vpop.trf.xlu0
        %v449 = vpop.trf.xlu0
        %v450 = vpop.trf.xlu0
        %v451 = vpop.trf.xlu0
        %452 = vxpose.xlu0.b32.start [1/16] %v386, 128
        %453 = vxpose.xlu0.b32.cont [2/16] 0.0, 128
        %454 = vxpose.xlu0.b32.cont [3/16] 0.0, 128
        %455 = vxpose.xlu0.b32.cont [4/16] 0.0, 128
        %456 = vxpose.xlu0.b32.cont [5/16] 0.0, 128
        %457 = vxpose.xlu0.b32.cont [6/16] 0.0, 128
        %458 = vxpose.xlu0.b32.cont [7/16] 0.0, 128
        %459 = vxpose.xlu0.b32.cont [8/16] 0.0, 128
        %460 = vxpose.xlu0.b32.cont [9/16] 0.0, 128
        %461 = vxpose.xlu0.b32.cont [10/16] 0.0, 128
        %462 = vxpose.xlu0.b32.cont [11/16] 0.0, 128
        %463 = vxpose.xlu0.b32.cont [12/16] 0.0, 128
        %464 = vxpose.xlu0.b32.cont [13/16] 0.0, 128
        %465 = vxpose.xlu0.b32.cont [14/16] 0.0, 128
        %466 = vxpose.xlu0.b32.cont [15/16] 0.0, 128
        %467 = vxpose.xlu0.b32.end [16/16] 0.0, 128
        %v468 = vpop.trf.xlu0
        %v469 = vpop.trf.xlu0
        %v470 = vpop.trf.xlu0
        %v471 = vpop.trf.xlu0
        %v472 = vpop.trf.xlu0
        %v473 = vpop.trf.xlu0
        %v474 = vpop.trf.xlu0
        %v475 = vpop.trf.xlu0
        %v476 = vpop.trf.xlu0
        %v477 = vpop.trf.xlu0
        %v478 = vpop.trf.xlu0
        %v479 = vpop.trf.xlu0
        %v480 = vpop.trf.xlu0
        %v481 = vpop.trf.xlu0
        %v482 = vpop.trf.xlu0
        %v483 = vpop.trf.xlu0
        %484 = vxpose.xlu0.b32.start [1/16] %v387, 128
        %485 = vxpose.xlu0.b32.cont [2/16] 0.0, 128
        %486 = vxpose.xlu0.b32.cont [3/16] 0.0, 128
        %487 = vxpose.xlu0.b32.cont [4/16] 0.0, 128
        %488 = vxpose.xlu0.b32.cont [5/16] 0.0, 128
        %489 = vxpose.xlu0.b32.cont [6/16] 0.0, 128
        %490 = vxpose.xlu0.b32.cont [7/16] 0.0, 128
        %491 = vxpose.xlu0.b32.cont [8/16] 0.0, 128
        %492 = vxpose.xlu0.b32.cont [9/16] 0.0, 128
        %493 = vxpose.xlu0.b32.cont [10/16] 0.0, 128
        %494 = vxpose.xlu0.b32.cont [11/16] 0.0, 128
        %495 = vxpose.xlu0.b32.cont [12/16] 0.0, 128
        %496 = vxpose.xlu0.b32.cont [13/16] 0.0, 128
        %497 = vxpose.xlu0.b32.cont [14/16] 0.0, 128
        %498 = vxpose.xlu0.b32.cont [15/16] 0.0, 128
        %499 = vxpose.xlu0.b32.end [16/16] 0.0, 128
        %v500 = vpop.trf.xlu0
        %v501 = vpop.trf.xlu0
        %v502 = vpop.trf.xlu0
        %v503 = vpop.trf.xlu0
        %v504 = vpop.trf.xlu0
        %v505 = vpop.trf.xlu0
        %v506 = vpop.trf.xlu0
        %v507 = vpop.trf.xlu0
        %v508 = vpop.trf.xlu0
        %v509 = vpop.trf.xlu0
        %v510 = vpop.trf.xlu0
        %v511 = vpop.trf.xlu0
        %v512 = vpop.trf.xlu0
        %v513 = vpop.trf.xlu0
        %v514 = vpop.trf.xlu0
        %v515 = vpop.trf.xlu0
        %v516 = vld [vmem:[%s1] sm:$0xff]
        %v517 = vld [vmem:[%s6] sm:$0x1]
        %v519 = vlaneseq
        %v520 = vshrl.u32 %v519, 7
        %v521 = vsub.s32 0, %v520
        %v522 = vrot.slane %v517, %v521
        %vm524 = vcmask 64512
        %v526 = vsel %vm524, %v404, 0
        %v529 = vsel %vm524, %v405, 0
        %v532 = vsel %vm524, %v406, 0
        %v535 = vsel %vm524, %v407, 0
        %v538 = vsel %vm524, %v436, 0
        %v541 = vsel %vm524, %v437, 0
        %v544 = vsel %vm524, %v438, 0
        %v547 = vsel %vm524, %v439, 0
        %v550 = vsel %vm524, %v468, 0
        %v553 = vsel %vm524, %v469, 0
        %v556 = vsel %vm524, %v470, 0
        %v559 = vsel %vm524, %v471, 0
        %v562 = vsel %vm524, %v500, 0
        %v565 = vsel %vm524, %v501, 0
        %v568 = vsel %vm524, %v502, 0
        %v571 = vsel %vm524, %v503, 0
        %573 = vmatprep.subr.mxu0 0.0
        %574 = vmatpush1.msra.mxu0 %v516
        %575 = vmatprep.subr.mxu0 0.0
        %576 = vmatpush1.msra.mxu0 0.0
        %577 = vmatprep.subr.mxu0 0.0
        %578 = vmatpush1.msra.mxu0 0.0
        %579 = vmatprep.subr.mxu0 0.0
        %580 = vmatpush1.msra.mxu0 0.0
        %581 = vmatprep.subr.mxu0 0.0
        %582 = vmatpush1.msra.mxu0 0.0
        %583 = vmatprep.subr.mxu0 0.0
        %584 = vmatpush1.msra.mxu0 0.0
        %585 = vmatprep.subr.mxu0 0.0
        %586 = vmatpush1.msra.mxu0 0.0
        %587 = vmatprep.subr.mxu0 0.0
        %588 = vmatpush1.msra.mxu0 0.0
        %589 = vmatprep.subr.mxu0 0.0
        %590 = vmatpush1.msra.mxu0 0.0
        %591 = vmatprep.subr.mxu0 0.0
        %592 = vmatpush1.msra.mxu0 0.0
        %593 = vmatprep.subr.mxu0 0.0
        %594 = vmatpush1.msra.mxu0 0.0
        %595 = vmatprep.subr.mxu0 0.0
        %596 = vmatpush1.msra.mxu0 0.0
        %597 = vmatprep.subr.mxu0 0.0
        %598 = vmatpush1.msra.mxu0 0.0
        %599 = vmatprep.subr.mxu0 0.0
        %600 = vmatpush1.msra.mxu0 0.0
        %601 = vmatprep.subr.mxu0 0.0
        %602 = vmatpush1.msra.mxu0 0.0
        %603 = vmatprep.subr.mxu0 0.0
        %604 = vmatpush1.msra.mxu0 0.0
        %605 = vmatprep.subr.mxu0 0.0
        %606 = vmatpush1.msra.mxu0 0.0
        %607 = vmatprep.subr.mxu0 0.0
        %608 = vmatpush1.msra.mxu0 0.0
        %609 = vmatprep.subr.mxu0 0.0
        %610 = vmatpush1.msra.mxu0 0.0
        %611 = vmatprep.subr.mxu0 0.0
        %612 = vmatpush1.msra.mxu0 0.0
        %613 = vmatprep.subr.mxu0 0.0
        %614 = vmatpush1.msra.mxu0 0.0
        %615 = vmatprep.subr.mxu0 0.0
        %616 = vmatpush1.msra.mxu0 0.0
        %617 = vmatprep.subr.mxu0 0.0
        %618 = vmatpush1.msra.mxu0 0.0
        %619 = vmatprep.subr.mxu0 0.0
        %620 = vmatpush1.msra.mxu0 0.0
        %621 = vmatprep.subr.mxu0 0.0
        %622 = vmatpush1.msra.mxu0 0.0
        %623 = vmatprep.subr.mxu0 0.0
        %624 = vmatpush1.msra.mxu0 0.0
        %625 = vmatprep.subr.mxu0 0.0
        %626 = vmatpush1.msra.mxu0 0.0
        %627 = vmatprep.subr.mxu0 0.0
        %628 = vmatpush1.msra.mxu0 0.0
        %629 = vmatprep.subr.mxu0 0.0
        %630 = vmatpush1.msra.mxu0 0.0
        %631 = vmatprep.subr.mxu0 0.0
        %632 = vmatpush1.msra.mxu0 0.0
        %633 = vmatprep.subr.mxu0 0.0
        %634 = vmatpush1.msra.mxu0 0.0
        %635 = vmatprep.subr.mxu0 0.0
        %636 = vmatpush1.msra.mxu0 0.0
        %637 = vmatprep.mubr.f32.mxu0 0.0
        %638 = vmatmul.mubr.f32.gmra.mrb[0].mxu0 %v526
        %v639 = vpop.f32.mrb[0].mxu0
        %v640 = vadd.f32 %v522, %v639
        %v641 = vpop.f32.mrb[0].mxu0
        %642 = vmatprep.mubr.f32.mxu0 0.0
        %643 = vmatmul.mubr.f32.gmra.mrb[0].mxu0 %v529
        %v644 = vpop.f32.mrb[0].mxu0
        %v645 = vadd.f32 %v522, %v644
        %v646 = vpop.f32.mrb[0].mxu0
        %647 = vmatprep.mubr.f32.mxu0 0.0
        %648 = vmatmul.mubr.f32.gmra.mrb[0].mxu0 %v532
        %v649 = vpop.f32.mrb[0].mxu0
        %v650 = vadd.f32 %v522, %v649
        %v651 = vpop.f32.mrb[0].mxu0
        %652 = vmatprep.mubr.f32.mxu0 0.0
        %653 = vmatmul.mubr.f32.gmra.mrb[0].mxu0 %v535
        %v654 = vpop.f32.mrb[0].mxu0
        %v655 = vadd.f32 %v522, %v654
        %v656 = vpop.f32.mrb[0].mxu0
        %657 = vmatprep.mubr.f32.mxu0 0.0
        %658 = vmatmul.mubr.f32.gmra.mrb[0].mxu0 %v538
        %v659 = vpop.f32.mrb[0].mxu0
        %v660 = vadd.f32 %v522, %v659
        %v661 = vpop.f32.mrb[0].mxu0
        %662 = vmatprep.mubr.f32.mxu0 0.0
        %663 = vmatmul.mubr.f32.gmra.mrb[0].mxu0 %v541
        %v664 = vpop.f32.mrb[0].mxu0
        %v665 = vadd.f32 %v522, %v664
        %v666 = vpop.f32.mrb[0].mxu0
        %667 = vmatprep.mubr.f32.mxu0 0.0
        %668 = vmatmul.mubr.f32.gmra.mrb[0].mxu0 %v544
        %v669 = vpop.f32.mrb[0].mxu0
        %v670 = vadd.f32 %v522, %v669
        %v671 = vpop.f32.mrb[0].mxu0
        %672 = vmatprep.mubr.f32.mxu0 0.0
        %673 = vmatmul.mubr.f32.gmra.mrb[0].mxu0 %v547
        %v674 = vpop.f32.mrb[0].mxu0
        %v675 = vadd.f32 %v522, %v674
        %v676 = vpop.f32.mrb[0].mxu0
        %677 = vmatprep.mubr.f32.mxu0 0.0
        %678 = vmatmul.mubr.f32.gmra.mrb[0].mxu0 %v550
        %v679 = vpop.f32.mrb[0].mxu0
        %v680 = vadd.f32 %v522, %v679
        %v681 = vpop.f32.mrb[0].mxu0
        %682 = vmatprep.mubr.f32.mxu0 0.0
        %683 = vmatmul.mubr.f32.gmra.mrb[0].mxu0 %v553
        %v684 = vpop.f32.mrb[0].mxu0
        %v685 = vadd.f32 %v522, %v684
        %v686 = vpop.f32.mrb[0].mxu0
        %687 = vmatprep.mubr.f32.mxu0 0.0
        %688 = vmatmul.mubr.f32.gmra.mrb[0].mxu0 %v556
        %v689 = vpop.f32.mrb[0].mxu0
        %v690 = vadd.f32 %v522, %v689
        %v691 = vpop.f32.mrb[0].mxu0
        %692 = vmatprep.mubr.f32.mxu0 0.0
        %693 = vmatmul.mubr.f32.gmra.mrb[0].mxu0 %v559
        %v694 = vpop.f32.mrb[0].mxu0
        %v695 = vadd.f32 %v522, %v694
        %v696 = vpop.f32.mrb[0].mxu0
        %697 = vmatprep.mubr.f32.mxu0 0.0
        %698 = vmatmul.mubr.f32.gmra.mrb[0].mxu0 %v562
        %v699 = vpop.f32.mrb[0].mxu0
        %v700 = vadd.f32 %v522, %v699
        %v701 = vpop.f32.mrb[0].mxu0
        %702 = vmatprep.mubr.f32.mxu0 0.0
        %703 = vmatmul.mubr.f32.gmra.mrb[0].mxu0 %v565
        %v704 = vpop.f32.mrb[0].mxu0
        %v705 = vadd.f32 %v522, %v704
        %v706 = vpop.f32.mrb[0].mxu0
        %707 = vmatprep.mubr.f32.mxu0 0.0
        %708 = vmatmul.mubr.f32.gmra.mrb[0].mxu0 %v568
        %v709 = vpop.f32.mrb[0].mxu0
        %v710 = vadd.f32 %v522, %v709
        %v711 = vpop.f32.mrb[0].mxu0
        %712 = vmatprep.mubr.f32.mxu0 0.0
        %713 = vmatmul.mubr.f32.gmra.mrb[0].mxu0 %v571
        %v714 = vpop.f32.mrb[0].mxu0
        %v715 = vadd.f32 %v522, %v714
        %v716 = vpop.f32.mrb[0].mxu0
        %717 = vdwg.mxu0
        %s718 = scalar_lea.vmem %s1, 8
        %v719 = vld [vmem:[%s718] sm:$0xff]
        %s720 = scalar_lea.vmem %s6, 1
        %v721 = vld [vmem:[%s720] sm:$0x1]
        %v723 = vlaneseq
        %v724 = vshrl.u32 %v723, 7
        %v725 = vsub.s32 0, %v724
        %v726 = vrot.slane %v721, %v725
        %728 = vmatprep.subr.mxu0 0.0
        %729 = vmatpush1.msra.mxu0 %v719
        %730 = vmatprep.subr.mxu0 0.0
        %731 = vmatpush1.msra.mxu0 0.0
        %732 = vmatprep.subr.mxu0 0.0
        %733 = vmatpush1.msra.mxu0 0.0
        %734 = vmatprep.subr.mxu0 0.0
        %735 = vmatpush1.msra.mxu0 0.0
        %736 = vmatprep.subr.mxu0 0.0
        %737 = vmatpush1.msra.mxu0 0.0
        %738 = vmatprep.subr.mxu0 0.0
        %739 = vmatpush1.msra.mxu0 0.0
        %740 = vmatprep.subr.mxu0 0.0
        %741 = vmatpush1.msra.mxu0 0.0
        %742 = vmatprep.subr.mxu0 0.0
        %743 = vmatpush1.msra.mxu0 0.0
        %744 = vmatprep.subr.mxu0 0.0
        %745 = vmatpush1.msra.mxu0 0.0
        %746 = vmatprep.subr.mxu0 0.0
        %747 = vmatpush1.msra.mxu0 0.0
        %748 = vmatprep.subr.mxu0 0.0
        %749 = vmatpush1.msra.mxu0 0.0
        %750 = vmatprep.subr.mxu0 0.0
        %751 = vmatpush1.msra.mxu0 0.0
        %752 = vmatprep.subr.mxu0 0.0
        %753 = vmatpush1.msra.mxu0 0.0
        %754 = vmatprep.subr.mxu0 0.0
        %755 = vmatpush1.msra.mxu0 0.0
        %756 = vmatprep.subr.mxu0 0.0
        %757 = vmatpush1.msra.mxu0 0.0
        %758 = vmatprep.subr.mxu0 0.0
        %759 = vmatpush1.msra.mxu0 0.0
        %760 = vmatprep.subr.mxu0 0.0
        %761 = vmatpush1.msra.mxu0 0.0
        %762 = vmatprep.subr.mxu0 0.0
        %763 = vmatpush1.msra.mxu0 0.0
        %764 = vmatprep.subr.mxu0 0.0
        %765 = vmatpush1.msra.mxu0 0.0
        %766 = vmatprep.subr.mxu0 0.0
        %767 = vmatpush1.msra.mxu0 0.0
        %768 = vmatprep.subr.mxu0 0.0
        %769 = vmatpush1.msra.mxu0 0.0
        %770 = vmatprep.subr.mxu0 0.0
        %771 = vmatpush1.msra.mxu0 0.0
        %772 = vmatprep.subr.mxu0 0.0
        %773 = vmatpush1.msra.mxu0 0.0
        %774 = vmatprep.subr.mxu0 0.0
        %775 = vmatpush1.msra.mxu0 0.0
        %776 = vmatprep.subr.mxu0 0.0
        %777 = vmatpush1.msra.mxu0 0.0
        %778 = vmatprep.subr.mxu0 0.0
        %779 = vmatpush1.msra.mxu0 0.0
        %780 = vmatprep.subr.mxu0 0.0
        %781 = vmatpush1.msra.mxu0 0.0
        %782 = vmatprep.subr.mxu0 0.0
        %783 = vmatpush1.msra.mxu0 0.0
        %784 = vmatprep.subr.mxu0 0.0
        %785 = vmatpush1.msra.mxu0 0.0
        %786 = vmatprep.subr.mxu0 0.0
        %787 = vmatpush1.msra.mxu0 0.0
        %788 = vmatprep.subr.mxu0 0.0
        %789 = vmatpush1.msra.mxu0 0.0
        %790 = vmatprep.subr.mxu0 0.0
        %791 = vmatpush1.msra.mxu0 0.0
        %792 = vmatprep.mubr.f32.mxu0 0.0
        %793 = vmatmul.mubr.f32.gmra.mrb[0].mxu0 %v526
        %v794 = vpop.f32.mrb[0].mxu0
        %v795 = vadd.f32 %v726, %v794
        %v796 = vpop.f32.mrb[0].mxu0
        %797 = vmatprep.mubr.f32.mxu0 0.0
        %798 = vmatmul.mubr.f32.gmra.mrb[0].mxu0 %v529
        %v799 = vpop.f32.mrb[0].mxu0
        %v800 = vadd.f32 %v726, %v799
        %v801 = vpop.f32.mrb[0].mxu0
        %802 = vmatprep.mubr.f32.mxu0 0.0
        %803 = vmatmul.mubr.f32.gmra.mrb[0].mxu0 %v532
        %v804 = vpop.f32.mrb[0].mxu0
        %v805 = vadd.f32 %v726, %v804
        %v806 = vpop.f32.mrb[0].mxu0
        %807 = vmatprep.mubr.f32.mxu0 0.0
        %808 = vmatmul.mubr.f32.gmra.mrb[0].mxu0 %v535
        %v809 = vpop.f32.mrb[0].mxu0
        %v810 = vadd.f32 %v726, %v809
        %v811 = vpop.f32.mrb[0].mxu0
        %812 = vmatprep.mubr.f32.mxu0 0.0
        %813 = vmatmul.mubr.f32.gmra.mrb[0].mxu0 %v538
        %v814 = vpop.f32.mrb[0].mxu0
        %v815 = vadd.f32 %v726, %v814
        %v816 = vpop.f32.mrb[0].mxu0
        %817 = vmatprep.mubr.f32.mxu0 0.0
        %818 = vmatmul.mubr.f32.gmra.mrb[0].mxu0 %v541
        %v819 = vpop.f32.mrb[0].mxu0
        %v820 = vadd.f32 %v726, %v819
        %v821 = vpop.f32.mrb[0].mxu0
        %822 = vmatprep.mubr.f32.mxu0 0.0
        %823 = vmatmul.mubr.f32.gmra.mrb[0].mxu0 %v544
        %v824 = vpop.f32.mrb[0].mxu0
        %v825 = vadd.f32 %v726, %v824
        %v826 = vpop.f32.mrb[0].mxu0
        %827 = vmatprep.mubr.f32.mxu0 0.0
        %828 = vmatmul.mubr.f32.gmra.mrb[0].mxu0 %v547
        %v829 = vpop.f32.mrb[0].mxu0
        %v830 = vadd.f32 %v726, %v829
        %v831 = vpop.f32.mrb[0].mxu0
        %832 = vmatprep.mubr.f32.mxu0 0.0
        %833 = vmatmul.mubr.f32.gmra.mrb[0].mxu0 %v550
        %v834 = vpop.f32.mrb[0].mxu0
        %v835 = vadd.f32 %v726, %v834
        %v836 = vpop.f32.mrb[0].mxu0
        %837 = vmatprep.mubr.f32.mxu0 0.0
        %838 = vmatmul.mubr.f32.gmra.mrb[0].mxu0 %v553
        %v839 = vpop.f32.mrb[0].mxu0
        %v840 = vadd.f32 %v726, %v839
        %v841 = vpop.f32.mrb[0].mxu0
        %842 = vmatprep.mubr.f32.mxu0 0.0
        %843 = vmatmul.mubr.f32.gmra.mrb[0].mxu0 %v556
        %v844 = vpop.f32.mrb[0].mxu0
        %v845 = vadd.f32 %v726, %v844
        %v846 = vpop.f32.mrb[0].mxu0
        %847 = vmatprep.mubr.f32.mxu0 0.0
        %848 = vmatmul.mubr.f32.gmra.mrb[0].mxu0 %v559
        %v849 = vpop.f32.mrb[0].mxu0
        %v850 = vadd.f32 %v726, %v849
        %v851 = vpop.f32.mrb[0].mxu0
        %852 = vmatprep.mubr.f32.mxu0 0.0
        %853 = vmatmul.mubr.f32.gmra.mrb[0].mxu0 %v562
        %v854 = vpop.f32.mrb[0].mxu0
        %v855 = vadd.f32 %v726, %v854
        %v856 = vpop.f32.mrb[0].mxu0
        %857 = vmatprep.mubr.f32.mxu0 0.0
        %858 = vmatmul.mubr.f32.gmra.mrb[0].mxu0 %v565
        %v859 = vpop.f32.mrb[0].mxu0
        %v860 = vadd.f32 %v726, %v859
        %v861 = vpop.f32.mrb[0].mxu0
        %862 = vmatprep.mubr.f32.mxu0 0.0
        %863 = vmatmul.mubr.f32.gmra.mrb[0].mxu0 %v568
        %v864 = vpop.f32.mrb[0].mxu0
        %v865 = vadd.f32 %v726, %v864
        %v866 = vpop.f32.mrb[0].mxu0
        %867 = vmatprep.mubr.f32.mxu0 0.0
        %868 = vmatmul.mubr.f32.gmra.mrb[0].mxu0 %v571
        %v869 = vpop.f32.mrb[0].mxu0
        %v870 = vadd.f32 %v726, %v869
        %v871 = vpop.f32.mrb[0].mxu0
        %872 = vdwg.mxu0
        %s873 = scalar_lea.vmem %s1, 16
        %v874 = vld [vmem:[%s873] sm:$0xff]
        %s875 = scalar_lea.vmem %s6, 2
        %v876 = vld [vmem:[%s875] sm:$0x1]
        %v878 = vlaneseq
        %v879 = vshrl.u32 %v878, 7
        %v880 = vsub.s32 0, %v879
        %v881 = vrot.slane %v876, %v880
        %883 = vmatprep.subr.mxu0 0.0
        %884 = vmatpush1.msra.mxu0 %v874
        %885 = vmatprep.subr.mxu0 0.0
        %886 = vmatpush1.msra.mxu0 0.0
        %887 = vmatprep.subr.mxu0 0.0
        %888 = vmatpush1.msra.mxu0 0.0
        %889 = vmatprep.subr.mxu0 0.0
        %890 = vmatpush1.msra.mxu0 0.0
        %891 = vmatprep.subr.mxu0 0.0
        %892 = vmatpush1.msra.mxu0 0.0
        %893 = vmatprep.subr.mxu0 0.0
        %894 = vmatpush1.msra.mxu0 0.0
        %895 = vmatprep.subr.mxu0 0.0
        %896 = vmatpush1.msra.mxu0 0.0
        %897 = vmatprep.subr.mxu0 0.0
        %898 = vmatpush1.msra.mxu0 0.0
        %899 = vmatprep.subr.mxu0 0.0
        %900 = vmatpush1.msra.mxu0 0.0
        %901 = vmatprep.subr.mxu0 0.0
        %902 = vmatpush1.msra.mxu0 0.0
        %903 = vmatprep.subr.mxu0 0.0
        %904 = vmatpush1.msra.mxu0 0.0
        %905 = vmatprep.subr.mxu0 0.0
        %906 = vmatpush1.msra.mxu0 0.0
        %907 = vmatprep.subr.mxu0 0.0
        %908 = vmatpush1.msra.mxu0 0.0
        %909 = vmatprep.subr.mxu0 0.0
        %910 = vmatpush1.msra.mxu0 0.0
        %911 = vmatprep.subr.mxu0 0.0
        %912 = vmatpush1.msra.mxu0 0.0
        %913 = vmatprep.subr.mxu0 0.0
        %914 = vmatpush1.msra.mxu0 0.0
        %915 = vmatprep.subr.mxu0 0.0
        %916 = vmatpush1.msra.mxu0 0.0
        %917 = vmatprep.subr.mxu0 0.0
        %918 = vmatpush1.msra.mxu0 0.0
        %919 = vmatprep.subr.mxu0 0.0
        %920 = vmatpush1.msra.mxu0 0.0
        %921 = vmatprep.subr.mxu0 0.0
        %922 = vmatpush1.msra.mxu0 0.0
        %923 = vmatprep.subr.mxu0 0.0
        %924 = vmatpush1.msra.mxu0 0.0
        %925 = vmatprep.subr.mxu0 0.0
        %926 = vmatpush1.msra.mxu0 0.0
        %927 = vmatprep.subr.mxu0 0.0
        %928 = vmatpush1.msra.mxu0 0.0
        %929 = vmatprep.subr.mxu0 0.0
        %930 = vmatpush1.msra.mxu0 0.0
        %931 = vmatprep.subr.mxu0 0.0
        %932 = vmatpush1.msra.mxu0 0.0
        %933 = vmatprep.subr.mxu0 0.0
        %934 = vmatpush1.msra.mxu0 0.0
        %935 = vmatprep.subr.mxu0 0.0
        %936 = vmatpush1.msra.mxu0 0.0
        %937 = vmatprep.subr.mxu0 0.0
        %938 = vmatpush1.msra.mxu0 0.0
        %939 = vmatprep.subr.mxu0 0.0
        %940 = vmatpush1.msra.mxu0 0.0
        %941 = vmatprep.subr.mxu0 0.0
        %942 = vmatpush1.msra.mxu0 0.0
        %943 = vmatprep.subr.mxu0 0.0
        %944 = vmatpush1.msra.mxu0 0.0
        %945 = vmatprep.subr.mxu0 0.0
        %946 = vmatpush1.msra.mxu0 0.0
        %947 = vmatprep.mubr.f32.mxu0 0.0
        %948 = vmatmul.mubr.f32.gmra.mrb[0].mxu0 %v526
        %v949 = vpop.f32.mrb[0].mxu0
        %v950 = vadd.f32 %v881, %v949
        %v951 = vpop.f32.mrb[0].mxu0
        %952 = vmatprep.mubr.f32.mxu0 0.0
        %953 = vmatmul.mubr.f32.gmra.mrb[0].mxu0 %v529
        %v954 = vpop.f32.mrb[0].mxu0
        %v955 = vadd.f32 %v881, %v954
        %v956 = vpop.f32.mrb[0].mxu0
        %957 = vmatprep.mubr.f32.mxu0 0.0
        %958 = vmatmul.mubr.f32.gmra.mrb[0].mxu0 %v532
        %v959 = vpop.f32.mrb[0].mxu0
        %v960 = vadd.f32 %v881, %v959
        %v961 = vpop.f32.mrb[0].mxu0
        %962 = vmatprep.mubr.f32.mxu0 0.0
        %963 = vmatmul.mubr.f32.gmra.mrb[0].mxu0 %v535
        %v964 = vpop.f32.mrb[0].mxu0
        %v965 = vadd.f32 %v881, %v964
        %v966 = vpop.f32.mrb[0].mxu0
        %967 = vmatprep.mubr.f32.mxu0 0.0
        %968 = vmatmul.mubr.f32.gmra.mrb[0].mxu0 %v538
        %v969 = vpop.f32.mrb[0].mxu0
        %v970 = vadd.f32 %v881, %v969
        %v971 = vpop.f32.mrb[0].mxu0
        %972 = vmatprep.mubr.f32.mxu0 0.0
        %973 = vmatmul.mubr.f32.gmra.mrb[0].mxu0 %v541
        %v974 = vpop.f32.mrb[0].mxu0
        %v975 = vadd.f32 %v881, %v974
        %v976 = vpop.f32.mrb[0].mxu0
        %977 = vmatprep.mubr.f32.mxu0 0.0
        %978 = vmatmul.mubr.f32.gmra.mrb[0].mxu0 %v544
        %v979 = vpop.f32.mrb[0].mxu0
        %v980 = vadd.f32 %v881, %v979
        %v981 = vpop.f32.mrb[0].mxu0
        %982 = vmatprep.mubr.f32.mxu0 0.0
        %983 = vmatmul.mubr.f32.gmra.mrb[0].mxu0 %v547
        %v984 = vpop.f32.mrb[0].mxu0
        %v985 = vadd.f32 %v881, %v984
        %v986 = vpop.f32.mrb[0].mxu0
        %987 = vmatprep.mubr.f32.mxu0 0.0
        %988 = vmatmul.mubr.f32.gmra.mrb[0].mxu0 %v550
        %v989 = vpop.f32.mrb[0].mxu0
        %v990 = vadd.f32 %v881, %v989
        %v991 = vpop.f32.mrb[0].mxu0
        %992 = vmatprep.mubr.f32.mxu0 0.0
        %993 = vmatmul.mubr.f32.gmra.mrb[0].mxu0 %v553
        %v994 = vpop.f32.mrb[0].mxu0
        %v995 = vadd.f32 %v881, %v994
        %v996 = vpop.f32.mrb[0].mxu0
        %997 = vmatprep.mubr.f32.mxu0 0.0
        %998 = vmatmul.mubr.f32.gmra.mrb[0].mxu0 %v556
        %v999 = vpop.f32.mrb[0].mxu0
        %v1000 = vadd.f32 %v881, %v999
        %v1001 = vpop.f32.mrb[0].mxu0
        %1002 = vmatprep.mubr.f32.mxu0 0.0
        %1003 = vmatmul.mubr.f32.gmra.mrb[0].mxu0 %v559
        %v1004 = vpop.f32.mrb[0].mxu0
        %v1005 = vadd.f32 %v881, %v1004
        %v1006 = vpop.f32.mrb[0].mxu0
        %1007 = vmatprep.mubr.f32.mxu0 0.0
        %1008 = vmatmul.mubr.f32.gmra.mrb[0].mxu0 %v562
        %v1009 = vpop.f32.mrb[0].mxu0
        %v1010 = vadd.f32 %v881, %v1009
        %v1011 = vpop.f32.mrb[0].mxu0
        %1012 = vmatprep.mubr.f32.mxu0 0.0
        %1013 = vmatmul.mubr.f32.gmra.mrb[0].mxu0 %v565
        %v1014 = vpop.f32.mrb[0].mxu0
        %v1015 = vadd.f32 %v881, %v1014
        %v1016 = vpop.f32.mrb[0].mxu0
        %1017 = vmatprep.mubr.f32.mxu0 0.0
        %1018 = vmatmul.mubr.f32.gmra.mrb[0].mxu0 %v568
        %v1019 = vpop.f32.mrb[0].mxu0
        %v1020 = vadd.f32 %v881, %v1019
        %v1021 = vpop.f32.mrb[0].mxu0
        %1022 = vmatprep.mubr.f32.mxu0 0.0
        %1023 = vmatmul.mubr.f32.gmra.mrb[0].mxu0 %v571
        %v1024 = vpop.f32.mrb[0].mxu0
        %v1025 = vadd.f32 %v881, %v1024
        %v1026 = vpop.f32.mrb[0].mxu0
        %1027 = vdwg.mxu0
        %v1029 = vsel %vm524, %v640, 0
        %v1032 = vsel %vm524, %v645, 0
        %v1035 = vsel %vm524, %v650, 0
        %v1038 = vsel %vm524, %v655, 0
        %v1041 = vsel %vm524, %v795, 0
        %v1044 = vsel %vm524, %v800, 0
        %v1047 = vsel %vm524, %v805, 0
        %v1050 = vsel %vm524, %v810, 0
        %1052 = vmatprep.subr.mxu0 0.0
        %1053 = vmatpush1.xpose.msra.mxu0 %v1041
        %1054 = vmatprep.subr.mxu0 0.0
        %1055 = vmatpush1.xpose.msra.mxu0 %v1044
        %1056 = vmatprep.subr.mxu0 0.0
        %1057 = vmatpush1.xpose.msra.mxu0 %v1047
        %1058 = vmatprep.subr.mxu0 0.0
        %1059 = vmatpush1.xpose.msra.mxu0 %v1050
        %1060 = vmatprep.subr.mxu0 0.0
        %1061 = vmatpush1.xpose.msra.mxu0 0.0
        %1062 = vmatprep.subr.mxu0 0.0
        %1063 = vmatpush1.xpose.msra.mxu0 0.0
        %1064 = vmatprep.subr.mxu0 0.0
        %1065 = vmatpush1.xpose.msra.mxu0 0.0
        %1066 = vmatprep.subr.mxu0 0.0
        %1067 = vmatpush1.xpose.msra.mxu0 0.0
        %1068 = vmatprep.subr.mxu0 0.0
        %1069 = vmatpush1.xpose.msra.mxu0 0.0
        %1070 = vmatprep.subr.mxu0 0.0
        %1071 = vmatpush1.xpose.msra.mxu0 0.0
        %1072 = vmatprep.subr.mxu0 0.0
        %1073 = vmatpush1.xpose.msra.mxu0 0.0
        %1074 = vmatprep.subr.mxu0 0.0
        %1075 = vmatpush1.xpose.msra.mxu0 0.0
        %1076 = vmatprep.subr.mxu0 0.0
        %1077 = vmatpush1.xpose.msra.mxu0 0.0
        %1078 = vmatprep.subr.mxu0 0.0
        %1079 = vmatpush1.xpose.msra.mxu0 0.0
        %1080 = vmatprep.subr.mxu0 0.0
        %1081 = vmatpush1.xpose.msra.mxu0 0.0
        %1082 = vmatprep.subr.mxu0 0.0
        %1083 = vmatpush1.xpose.msra.mxu0 0.0
        %1084 = vmatprep.subr.mxu0 0.0
        %1085 = vmatpush1.xpose.msra.mxu0 0.0
        %1086 = vmatprep.subr.mxu0 0.0
        %1087 = vmatpush1.xpose.msra.mxu0 0.0
        %1088 = vmatprep.subr.mxu0 0.0
        %1089 = vmatpush1.xpose.msra.mxu0 0.0
        %1090 = vmatprep.subr.mxu0 0.0
        %1091 = vmatpush1.xpose.msra.mxu0 0.0
        %1092 = vmatprep.subr.mxu0 0.0
        %1093 = vmatpush1.xpose.msra.mxu0 0.0
        %1094 = vmatprep.subr.mxu0 0.0
        %1095 = vmatpush1.xpose.msra.mxu0 0.0
        %1096 = vmatprep.subr.mxu0 0.0
        %1097 = vmatpush1.xpose.msra.mxu0 0.0
        %1098 = vmatprep.subr.mxu0 0.0
        %1099 = vmatpush1.xpose.msra.mxu0 0.0
        %1100 = vmatprep.subr.mxu0 0.0
        %1101 = vmatpush1.xpose.msra.mxu0 0.0
        %1102 = vmatprep.subr.mxu0 0.0
        %1103 = vmatpush1.xpose.msra.mxu0 0.0
        %1104 = vmatprep.subr.mxu0 0.0
        %1105 = vmatpush1.xpose.msra.mxu0 0.0
        %1106 = vmatprep.subr.mxu0 0.0
        %1107 = vmatpush1.xpose.msra.mxu0 0.0
        %1108 = vmatprep.subr.mxu0 0.0
        %1109 = vmatpush1.xpose.msra.mxu0 0.0
        %1110 = vmatprep.subr.mxu0 0.0
        %1111 = vmatpush1.xpose.msra.mxu0 0.0
        %1112 = vmatprep.subr.mxu0 0.0
        %1113 = vmatpush1.xpose.msra.mxu0 0.0
        %1114 = vmatprep.subr.mxu0 0.0
        %1115 = vmatpush1.xpose.msra.mxu0 0.0
        %1116 = vmatprep.mubr.f32.mxu0 0.0
        %1117 = vmatmul.mubr.f32.gmra.mrb[0].mxu0 %v1029
        %v1118 = vpop.f32.mrb[0].mxu0
        %v1119 = vadd.f32 0.0, %v1118
        %v1120 = vpop.f32.mrb[0].mxu0
        %1121 = vmatprep.mubr.f32.mxu0 0.0
        %1122 = vmatmul.mubr.f32.gmra.mrb[0].mxu0 %v1032
        %v1123 = vpop.f32.mrb[0].mxu0
        %v1124 = vadd.f32 0.0, %v1123
        %v1125 = vpop.f32.mrb[0].mxu0
        %1126 = vmatprep.mubr.f32.mxu0 0.0
        %1127 = vmatmul.mubr.f32.gmra.mrb[0].mxu0 %v1035
        %v1128 = vpop.f32.mrb[0].mxu0
        %v1129 = vadd.f32 0.0, %v1128
        %v1130 = vpop.f32.mrb[0].mxu0
        %1131 = vmatprep.mubr.f32.mxu0 0.0
        %1132 = vmatmul.mubr.f32.gmra.mrb[0].mxu0 %v1038
        %v1133 = vpop.f32.mrb[0].mxu0
        %v1134 = vadd.f32 0.0, %v1133
        %v1135 = vpop.f32.mrb[0].mxu0
        %1136 = vdwg.mxu0
        %v1138 = vsel %vm524, %v660, 0
        %v1141 = vsel %vm524, %v665, 0
        %v1144 = vsel %vm524, %v670, 0
        %v1147 = vsel %vm524, %v675, 0
        %v1150 = vsel %vm524, %v815, 0
        %v1153 = vsel %vm524, %v820, 0
        %v1156 = vsel %vm524, %v825, 0
        %v1159 = vsel %vm524, %v830, 0
        %1161 = vmatprep.subr.mxu0 0.0
        %1162 = vmatpush1.xpose.msra.mxu0 %v1150
        %1163 = vmatprep.subr.mxu0 0.0
        %1164 = vmatpush1.xpose.msra.mxu0 %v1153
        %1165 = vmatprep.subr.mxu0 0.0
        %1166 = vmatpush1.xpose.msra.mxu0 %v1156
        %1167 = vmatprep.subr.mxu0 0.0
        %1168 = vmatpush1.xpose.msra.mxu0 %v1159
        %1169 = vmatprep.subr.mxu0 0.0
        %1170 = vmatpush1.xpose.msra.mxu0 0.0
        %1171 = vmatprep.subr.mxu0 0.0
        %1172 = vmatpush1.xpose.msra.mxu0 0.0
        %1173 = vmatprep.subr.mxu0 0.0
        %1174 = vmatpush1.xpose.msra.mxu0 0.0
        %1175 = vmatprep.subr.mxu0 0.0
        %1176 = vmatpush1.xpose.msra.mxu0 0.0
        %1177 = vmatprep.subr.mxu0 0.0
        %1178 = vmatpush1.xpose.msra.mxu0 0.0
        %1179 = vmatprep.subr.mxu0 0.0
        %1180 = vmatpush1.xpose.msra.mxu0 0.0
        %1181 = vmatprep.subr.mxu0 0.0
        %1182 = vmatpush1.xpose.msra.mxu0 0.0
        %1183 = vmatprep.subr.mxu0 0.0
        %1184 = vmatpush1.xpose.msra.mxu0 0.0
        %1185 = vmatprep.subr.mxu0 0.0
        %1186 = vmatpush1.xpose.msra.mxu0 0.0
        %1187 = vmatprep.subr.mxu0 0.0
        %1188 = vmatpush1.xpose.msra.mxu0 0.0
        %1189 = vmatprep.subr.mxu0 0.0
        %1190 = vmatpush1.xpose.msra.mxu0 0.0
        %1191 = vmatprep.subr.mxu0 0.0
        %1192 = vmatpush1.xpose.msra.mxu0 0.0
        %1193 = vmatprep.subr.mxu0 0.0
        %1194 = vmatpush1.xpose.msra.mxu0 0.0
        %1195 = vmatprep.subr.mxu0 0.0
        %1196 = vmatpush1.xpose.msra.mxu0 0.0
        %1197 = vmatprep.subr.mxu0 0.0
        %1198 = vmatpush1.xpose.msra.mxu0 0.0
        %1199 = vmatprep.subr.mxu0 0.0
        %1200 = vmatpush1.xpose.msra.mxu0 0.0
        %1201 = vmatprep.subr.mxu0 0.0
        %1202 = vmatpush1.xpose.msra.mxu0 0.0
        %1203 = vmatprep.subr.mxu0 0.0
        %1204 = vmatpush1.xpose.msra.mxu0 0.0
        %1205 = vmatprep.subr.mxu0 0.0
        %1206 = vmatpush1.xpose.msra.mxu0 0.0
        %1207 = vmatprep.subr.mxu0 0.0
        %1208 = vmatpush1.xpose.msra.mxu0 0.0
        %1209 = vmatprep.subr.mxu0 0.0
        %1210 = vmatpush1.xpose.msra.mxu0 0.0
        %1211 = vmatprep.subr.mxu0 0.0
        %1212 = vmatpush1.xpose.msra.mxu0 0.0
        %1213 = vmatprep.subr.mxu0 0.0
        %1214 = vmatpush1.xpose.msra.mxu0 0.0
        %1215 = vmatprep.subr.mxu0 0.0
        %1216 = vmatpush1.xpose.msra.mxu0 0.0
        %1217 = vmatprep.subr.mxu0 0.0
        %1218 = vmatpush1.xpose.msra.mxu0 0.0
        %1219 = vmatprep.subr.mxu0 0.0
        %1220 = vmatpush1.xpose.msra.mxu0 0.0
        %1221 = vmatprep.subr.mxu0 0.0
        %1222 = vmatpush1.xpose.msra.mxu0 0.0
        %1223 = vmatprep.subr.mxu0 0.0
        %1224 = vmatpush1.xpose.msra.mxu0 0.0
        %1225 = vmatprep.mubr.f32.mxu0 0.0
        %1226 = vmatmul.mubr.f32.gmra.mrb[0].mxu0 %v1138
        %v1227 = vpop.f32.mrb[0].mxu0
        %v1228 = vadd.f32 0.0, %v1227
        %v1229 = vpop.f32.mrb[0].mxu0
        %1230 = vmatprep.mubr.f32.mxu0 0.0
        %1231 = vmatmul.mubr.f32.gmra.mrb[0].mxu0 %v1141
        %v1232 = vpop.f32.mrb[0].mxu0
        %v1233 = vadd.f32 0.0, %v1232
        %v1234 = vpop.f32.mrb[0].mxu0
        %1235 = vmatprep.mubr.f32.mxu0 0.0
        %1236 = vmatmul.mubr.f32.gmra.mrb[0].mxu0 %v1144
        %v1237 = vpop.f32.mrb[0].mxu0
        %v1238 = vadd.f32 0.0, %v1237
        %v1239 = vpop.f32.mrb[0].mxu0
        %1240 = vmatprep.mubr.f32.mxu0 0.0
        %1241 = vmatmul.mubr.f32.gmra.mrb[0].mxu0 %v1147
        %v1242 = vpop.f32.mrb[0].mxu0
        %v1243 = vadd.f32 0.0, %v1242
        %v1244 = vpop.f32.mrb[0].mxu0
        %1245 = vdwg.mxu0
        %v1247 = vsel %vm524, %v680, 0
        %v1250 = vsel %vm524, %v685, 0
        %v1253 = vsel %vm524, %v690, 0
        %v1256 = vsel %vm524, %v695, 0
        %v1259 = vsel %vm524, %v835, 0
        %v1262 = vsel %vm524, %v840, 0
        %v1265 = vsel %vm524, %v845, 0
        %v1268 = vsel %vm524, %v850, 0
        %1270 = vmatprep.subr.mxu0 0.0
        %1271 = vmatpush1.xpose.msra.mxu0 %v1259
        %1272 = vmatprep.subr.mxu0 0.0
        %1273 = vmatpush1.xpose.msra.mxu0 %v1262
        %1274 = vmatprep.subr.mxu0 0.0
        %1275 = vmatpush1.xpose.msra.mxu0 %v1265
        %1276 = vmatprep.subr.mxu0 0.0
        %1277 = vmatpush1.xpose.msra.mxu0 %v1268
        %1278 = vmatprep.subr.mxu0 0.0
        %1279 = vmatpush1.xpose.msra.mxu0 0.0
        %1280 = vmatprep.subr.mxu0 0.0
        %1281 = vmatpush1.xpose.msra.mxu0 0.0
        %1282 = vmatprep.subr.mxu0 0.0
        %1283 = vmatpush1.xpose.msra.mxu0 0.0
        %1284 = vmatprep.subr.mxu0 0.0
        %1285 = vmatpush1.xpose.msra.mxu0 0.0
        %1286 = vmatprep.subr.mxu0 0.0
        %1287 = vmatpush1.xpose.msra.mxu0 0.0
        %1288 = vmatprep.subr.mxu0 0.0
        %1289 = vmatpush1.xpose.msra.mxu0 0.0
        %1290 = vmatprep.subr.mxu0 0.0
        %1291 = vmatpush1.xpose.msra.mxu0 0.0
        %1292 = vmatprep.subr.mxu0 0.0
        %1293 = vmatpush1.xpose.msra.mxu0 0.0
        %1294 = vmatprep.subr.mxu0 0.0
        %1295 = vmatpush1.xpose.msra.mxu0 0.0
        %1296 = vmatprep.subr.mxu0 0.0
        %1297 = vmatpush1.xpose.msra.mxu0 0.0
        %1298 = vmatprep.subr.mxu0 0.0
        %1299 = vmatpush1.xpose.msra.mxu0 0.0
        %1300 = vmatprep.subr.mxu0 0.0
        %1301 = vmatpush1.xpose.msra.mxu0 0.0
        %1302 = vmatprep.subr.mxu0 0.0
        %1303 = vmatpush1.xpose.msra.mxu0 0.0
        %1304 = vmatprep.subr.mxu0 0.0
        %1305 = vmatpush1.xpose.msra.mxu0 0.0
        %1306 = vmatprep.subr.mxu0 0.0
        %1307 = vmatpush1.xpose.msra.mxu0 0.0
        %1308 = vmatprep.subr.mxu0 0.0
        %1309 = vmatpush1.xpose.msra.mxu0 0.0
        %1310 = vmatprep.subr.mxu0 0.0
        %1311 = vmatpush1.xpose.msra.mxu0 0.0
        %1312 = vmatprep.subr.mxu0 0.0
        %1313 = vmatpush1.xpose.msra.mxu0 0.0
        %1314 = vmatprep.subr.mxu0 0.0
        %1315 = vmatpush1.xpose.msra.mxu0 0.0
        %1316 = vmatprep.subr.mxu0 0.0
        %1317 = vmatpush1.xpose.msra.mxu0 0.0
        %1318 = vmatprep.subr.mxu0 0.0
        %1319 = vmatpush1.xpose.msra.mxu0 0.0
        %1320 = vmatprep.subr.mxu0 0.0
        %1321 = vmatpush1.xpose.msra.mxu0 0.0
        %1322 = vmatprep.subr.mxu0 0.0
        %1323 = vmatpush1.xpose.msra.mxu0 0.0
        %1324 = vmatprep.subr.mxu0 0.0
        %1325 = vmatpush1.xpose.msra.mxu0 0.0
        %1326 = vmatprep.subr.mxu0 0.0
        %1327 = vmatpush1.xpose.msra.mxu0 0.0
        %1328 = vmatprep.subr.mxu0 0.0
        %1329 = vmatpush1.xpose.msra.mxu0 0.0
        %1330 = vmatprep.subr.mxu0 0.0
        %1331 = vmatpush1.xpose.msra.mxu0 0.0
        %1332 = vmatprep.subr.mxu0 0.0
        %1333 = vmatpush1.xpose.msra.mxu0 0.0
        %1334 = vmatprep.mubr.f32.mxu0 0.0
        %1335 = vmatmul.mubr.f32.gmra.mrb[0].mxu0 %v1247
        %v1336 = vpop.f32.mrb[0].mxu0
        %v1337 = vadd.f32 0.0, %v1336
        %v1338 = vpop.f32.mrb[0].mxu0
        %1339 = vmatprep.mubr.f32.mxu0 0.0
        %1340 = vmatmul.mubr.f32.gmra.mrb[0].mxu0 %v1250
        %v1341 = vpop.f32.mrb[0].mxu0
        %v1342 = vadd.f32 0.0, %v1341
        %v1343 = vpop.f32.mrb[0].mxu0
        %1344 = vmatprep.mubr.f32.mxu0 0.0
        %1345 = vmatmul.mubr.f32.gmra.mrb[0].mxu0 %v1253
        %v1346 = vpop.f32.mrb[0].mxu0
        %v1347 = vadd.f32 0.0, %v1346
        %v1348 = vpop.f32.mrb[0].mxu0
        %1349 = vmatprep.mubr.f32.mxu0 0.0
        %1350 = vmatmul.mubr.f32.gmra.mrb[0].mxu0 %v1256
        %v1351 = vpop.f32.mrb[0].mxu0
        %v1352 = vadd.f32 0.0, %v1351
        %v1353 = vpop.f32.mrb[0].mxu0
        %1354 = vdwg.mxu0
        %v1356 = vsel %vm524, %v700, 0
        %v1359 = vsel %vm524, %v705, 0
        %v1362 = vsel %vm524, %v710, 0
        %v1365 = vsel %vm524, %v715, 0
        %v1368 = vsel %vm524, %v855, 0
        %v1371 = vsel %vm524, %v860, 0
        %v1374 = vsel %vm524, %v865, 0
        %v1377 = vsel %vm524, %v870, 0
        %1379 = vmatprep.subr.mxu0 0.0
        %1380 = vmatpush1.xpose.msra.mxu0 %v1368
        %1381 = vmatprep.subr.mxu0 0.0
        %1382 = vmatpush1.xpose.msra.mxu0 %v1371
        %1383 = vmatprep.subr.mxu0 0.0
        %1384 = vmatpush1.xpose.msra.mxu0 %v1374
        %1385 = vmatprep.subr.mxu0 0.0
        %1386 = vmatpush1.xpose.msra.mxu0 %v1377
        %1387 = vmatprep.subr.mxu0 0.0
        %1388 = vmatpush1.xpose.msra.mxu0 0.0
        %1389 = vmatprep.subr.mxu0 0.0
        %1390 = vmatpush1.xpose.msra.mxu0 0.0
        %1391 = vmatprep.subr.mxu0 0.0
        %1392 = vmatpush1.xpose.msra.mxu0 0.0
        %1393 = vmatprep.subr.mxu0 0.0
        %1394 = vmatpush1.xpose.msra.mxu0 0.0
        %1395 = vmatprep.subr.mxu0 0.0
        %1396 = vmatpush1.xpose.msra.mxu0 0.0
        %1397 = vmatprep.subr.mxu0 0.0
        %1398 = vmatpush1.xpose.msra.mxu0 0.0
        %1399 = vmatprep.subr.mxu0 0.0
        %1400 = vmatpush1.xpose.msra.mxu0 0.0
        %1401 = vmatprep.subr.mxu0 0.0
        %1402 = vmatpush1.xpose.msra.mxu0 0.0
        %1403 = vmatprep.subr.mxu0 0.0
        %1404 = vmatpush1.xpose.msra.mxu0 0.0
        %1405 = vmatprep.subr.mxu0 0.0
        %1406 = vmatpush1.xpose.msra.mxu0 0.0
        %1407 = vmatprep.subr.mxu0 0.0
        %1408 = vmatpush1.xpose.msra.mxu0 0.0
        %1409 = vmatprep.subr.mxu0 0.0
        %1410 = vmatpush1.xpose.msra.mxu0 0.0
        %1411 = vmatprep.subr.mxu0 0.0
        %1412 = vmatpush1.xpose.msra.mxu0 0.0
        %1413 = vmatprep.subr.mxu0 0.0
        %1414 = vmatpush1.xpose.msra.mxu0 0.0
        %1415 = vmatprep.subr.mxu0 0.0
        %1416 = vmatpush1.xpose.msra.mxu0 0.0
        %1417 = vmatprep.subr.mxu0 0.0
        %1418 = vmatpush1.xpose.msra.mxu0 0.0
        %1419 = vmatprep.subr.mxu0 0.0
        %1420 = vmatpush1.xpose.msra.mxu0 0.0
        %1421 = vmatprep.subr.mxu0 0.0
        %1422 = vmatpush1.xpose.msra.mxu0 0.0
        %1423 = vmatprep.subr.mxu0 0.0
        %1424 = vmatpush1.xpose.msra.mxu0 0.0
        %1425 = vmatprep.subr.mxu0 0.0
        %1426 = vmatpush1.xpose.msra.mxu0 0.0
        %1427 = vmatprep.subr.mxu0 0.0
        %1428 = vmatpush1.xpose.msra.mxu0 0.0
        %1429 = vmatprep.subr.mxu0 0.0
        %1430 = vmatpush1.xpose.msra.mxu0 0.0
        %1431 = vmatprep.subr.mxu0 0.0
        %1432 = vmatpush1.xpose.msra.mxu0 0.0
        %1433 = vmatprep.subr.mxu0 0.0
        %1434 = vmatpush1.xpose.msra.mxu0 0.0
        %1435 = vmatprep.subr.mxu0 0.0
        %1436 = vmatpush1.xpose.msra.mxu0 0.0
        %1437 = vmatprep.subr.mxu0 0.0
        %1438 = vmatpush1.xpose.msra.mxu0 0.0
        %1439 = vmatprep.subr.mxu0 0.0
        %1440 = vmatpush1.xpose.msra.mxu0 0.0
        %1441 = vmatprep.subr.mxu0 0.0
        %1442 = vmatpush1.xpose.msra.mxu0 0.0
        %1443 = vmatprep.mubr.f32.mxu0 0.0
        %1444 = vmatmul.mubr.f32.gmra.mrb[0].mxu0 %v1356
        %v1445 = vpop.f32.mrb[0].mxu0
        %v1446 = vadd.f32 0.0, %v1445
        %v1447 = vpop.f32.mrb[0].mxu0
        %1448 = vmatprep.mubr.f32.mxu0 0.0
        %1449 = vmatmul.mubr.f32.gmra.mrb[0].mxu0 %v1359
        %v1450 = vpop.f32.mrb[0].mxu0
        %v1451 = vadd.f32 0.0, %v1450
        %v1452 = vpop.f32.mrb[0].mxu0
        %1453 = vmatprep.mubr.f32.mxu0 0.0
        %1454 = vmatmul.mubr.f32.gmra.mrb[0].mxu0 %v1362
        %v1455 = vpop.f32.mrb[0].mxu0
        %v1456 = vadd.f32 0.0, %v1455
        %v1457 = vpop.f32.mrb[0].mxu0
        %1458 = vmatprep.mubr.f32.mxu0 0.0
        %1459 = vmatmul.mubr.f32.gmra.mrb[0].mxu0 %v1365
        %v1460 = vpop.f32.mrb[0].mxu0
        %v1461 = vadd.f32 0.0, %v1460
        %v1462 = vpop.f32.mrb[0].mxu0
        %1463 = vdwg.mxu0
        %v1464 = vsel %vm314, %v1119, -inf
        %1465 = vmax.xlane.f32.xlu0 %v1464
        %v1466 = vpop.xlane.xlu0 %1465
        %v1467 = vsel %vm314, %v1124, -inf
        %1468 = vmax.xlane.f32.xlu0 %v1467
        %v1469 = vpop.xlane.xlu0 %1468
        %v1470 = vsel %vm314, %v1129, -inf
        %1471 = vmax.xlane.f32.xlu0 %v1470
        %v1472 = vpop.xlane.xlu0 %1471
        %v1473 = vsel %vm314, %v1134, -inf
        %1474 = vmax.xlane.f32.xlu0 %v1473
        %v1475 = vpop.xlane.xlu0 %1474
        %v1476 = vsel %vm314, %v1228, -inf
        %1477 = vmax.xlane.f32.xlu0 %v1476
        %v1478 = vpop.xlane.xlu0 %1477
        %v1479 = vsel %vm314, %v1233, -inf
        %1480 = vmax.xlane.f32.xlu0 %v1479
        %v1481 = vpop.xlane.xlu0 %1480
        %v1482 = vsel %vm314, %v1238, -inf
        %1483 = vmax.xlane.f32.xlu0 %v1482
        %v1484 = vpop.xlane.xlu0 %1483
        %v1485 = vsel %vm314, %v1243, -inf
        %1486 = vmax.xlane.f32.xlu0 %v1485
        %v1487 = vpop.xlane.xlu0 %1486
        %v1488 = vsel %vm314, %v1337, -inf
        %1489 = vmax.xlane.f32.xlu0 %v1488
        %v1490 = vpop.xlane.xlu0 %1489
        %v1491 = vsel %vm314, %v1342, -inf
        %1492 = vmax.xlane.f32.xlu0 %v1491
        %v1493 = vpop.xlane.xlu0 %1492
        %v1494 = vsel %vm314, %v1347, -inf
        %1495 = vmax.xlane.f32.xlu0 %v1494
        %v1496 = vpop.xlane.xlu0 %1495
        %v1497 = vsel %vm314, %v1352, -inf
        %1498 = vmax.xlane.f32.xlu0 %v1497
        %v1499 = vpop.xlane.xlu0 %1498
        %v1500 = vsel %vm314, %v1446, -inf
        %1501 = vmax.xlane.f32.xlu0 %v1500
        %v1502 = vpop.xlane.xlu0 %1501
        %v1503 = vsel %vm314, %v1451, -inf
        %1504 = vmax.xlane.f32.xlu0 %v1503
        %v1505 = vpop.xlane.xlu0 %1504
        %v1506 = vsel %vm314, %v1456, -inf
        %1507 = vmax.xlane.f32.xlu0 %v1506
        %v1508 = vpop.xlane.xlu0 %1507
        %v1509 = vsel %vm314, %v1461, -inf
        %1510 = vmax.xlane.f32.xlu0 %v1509
        %v1511 = vpop.xlane.xlu0 %1510
        %v1512 = vsub.f32 %v1119, %v1466
        %v1513 = vsub.f32 %v1124, %v1469
        %v1514 = vsub.f32 %v1129, %v1472
        %v1515 = vsub.f32 %v1134, %v1475
        %v1516 = vsub.f32 %v1228, %v1478
        %v1517 = vsub.f32 %v1233, %v1481
        %v1518 = vsub.f32 %v1238, %v1484
        %v1519 = vsub.f32 %v1243, %v1487
        %v1520 = vsub.f32 %v1337, %v1490
        %v1521 = vsub.f32 %v1342, %v1493
        %v1522 = vsub.f32 %v1347, %v1496
        %v1523 = vsub.f32 %v1352, %v1499
        %v1524 = vsub.f32 %v1446, %v1502
        %v1525 = vsub.f32 %v1451, %v1505
        %v1526 = vsub.f32 %v1456, %v1508
        %v1527 = vsub.f32 %v1461, %v1511
        %v1528 = vmul.f32 %v1512, 1.442695
        %v1529 = vpow.pop %v1528
        %v1530 = vmul.f32 %v1513, 1.442695
        %v1531 = vpow.pop %v1530
        %v1532 = vmul.f32 %v1514, 1.442695
        %v1533 = vpow.pop %v1532
        %v1534 = vmul.f32 %v1515, 1.442695
        %v1535 = vpow.pop %v1534
        %v1536 = vmul.f32 %v1516, 1.442695
        %v1537 = vpow.pop %v1536
        %v1538 = vmul.f32 %v1517, 1.442695
        %v1539 = vpow.pop %v1538
        %v1540 = vmul.f32 %v1518, 1.442695
        %v1541 = vpow.pop %v1540
        %v1542 = vmul.f32 %v1519, 1.442695
        %v1543 = vpow.pop %v1542
        %v1544 = vmul.f32 %v1520, 1.442695
        %v1545 = vpow.pop %v1544
        %v1546 = vmul.f32 %v1521, 1.442695
        %v1547 = vpow.pop %v1546
        %v1548 = vmul.f32 %v1522, 1.442695
        %v1549 = vpow.pop %v1548
        %v1550 = vmul.f32 %v1523, 1.442695
        %v1551 = vpow.pop %v1550
        %v1552 = vmul.f32 %v1524, 1.442695
        %v1553 = vpow.pop %v1552
        %v1554 = vmul.f32 %v1525, 1.442695
        %v1555 = vpow.pop %v1554
        %v1556 = vmul.f32 %v1526, 1.442695
        %v1557 = vpow.pop %v1556
        %v1558 = vmul.f32 %v1527, 1.442695
        %v1559 = vpow.pop %v1558
        %v1560 = vsel %vm314, %v1529, 0.0
        %1561 = vadd.xlane.f32.xlu0 %v1560
        %v1562 = vpop.xlane.xlu0 %1561
        %v1563 = vsel %vm314, %v1531, 0.0
        %1564 = vadd.xlane.f32.xlu0 %v1563
        %v1565 = vpop.xlane.xlu0 %1564
        %v1566 = vsel %vm314, %v1533, 0.0
        %1567 = vadd.xlane.f32.xlu0 %v1566
        %v1568 = vpop.xlane.xlu0 %1567
        %v1569 = vsel %vm314, %v1535, 0.0
        %1570 = vadd.xlane.f32.xlu0 %v1569
        %v1571 = vpop.xlane.xlu0 %1570
        %v1572 = vsel %vm314, %v1537, 0.0
        %1573 = vadd.xlane.f32.xlu0 %v1572
        %v1574 = vpop.xlane.xlu0 %1573
        %v1575 = vsel %vm314, %v1539, 0.0
        %1576 = vadd.xlane.f32.xlu0 %v1575
        %v1577 = vpop.xlane.xlu0 %1576
        %v1578 = vsel %vm314, %v1541, 0.0
        %1579 = vadd.xlane.f32.xlu0 %v1578
        %v1580 = vpop.xlane.xlu0 %1579
        %v1581 = vsel %vm314, %v1543, 0.0
        %1582 = vadd.xlane.f32.xlu0 %v1581
        %v1583 = vpop.xlane.xlu0 %1582
        %v1584 = vsel %vm314, %v1545, 0.0
        %1585 = vadd.xlane.f32.xlu0 %v1584
        %v1586 = vpop.xlane.xlu0 %1585
        %v1587 = vsel %vm314, %v1547, 0.0
        %1588 = vadd.xlane.f32.xlu0 %v1587
        %v1589 = vpop.xlane.xlu0 %1588
        %v1590 = vsel %vm314, %v1549, 0.0
        %1591 = vadd.xlane.f32.xlu0 %v1590
        %v1592 = vpop.xlane.xlu0 %1591
        %v1593 = vsel %vm314, %v1551, 0.0
        %1594 = vadd.xlane.f32.xlu0 %v1593
        %v1595 = vpop.xlane.xlu0 %1594
        %v1596 = vsel %vm314, %v1553, 0.0
        %1597 = vadd.xlane.f32.xlu0 %v1596
        %v1598 = vpop.xlane.xlu0 %1597
        %v1599 = vsel %vm314, %v1555, 0.0
        %1600 = vadd.xlane.f32.xlu0 %v1599
        %v1601 = vpop.xlane.xlu0 %1600
        %v1602 = vsel %vm314, %v1557, 0.0
        %1603 = vadd.xlane.f32.xlu0 %v1602
        %v1604 = vpop.xlane.xlu0 %1603
        %v1605 = vsel %vm314, %v1559, 0.0
        %1606 = vadd.xlane.f32.xlu0 %v1605
        %v1607 = vpop.xlane.xlu0 %1606
        %v1608 = vrcp.pop %v1562
        %v1609 = vmul.f32 %v1529, %v1608
        %v1610 = vrcp.pop %v1565
        %v1611 = vmul.f32 %v1531, %v1610
        %v1612 = vrcp.pop %v1568
        %v1613 = vmul.f32 %v1533, %v1612
        %v1614 = vrcp.pop %v1571
        %v1615 = vmul.f32 %v1535, %v1614
        %v1616 = vrcp.pop %v1574
        %v1617 = vmul.f32 %v1537, %v1616
        %v1618 = vrcp.pop %v1577
        %v1619 = vmul.f32 %v1539, %v1618
        %v1620 = vrcp.pop %v1580
        %v1621 = vmul.f32 %v1541, %v1620
        %v1622 = vrcp.pop %v1583
        %v1623 = vmul.f32 %v1543, %v1622
        %v1624 = vrcp.pop %v1586
        %v1625 = vmul.f32 %v1545, %v1624
        %v1626 = vrcp.pop %v1589
        %v1627 = vmul.f32 %v1547, %v1626
        %v1628 = vrcp.pop %v1592
        %v1629 = vmul.f32 %v1549, %v1628
        %v1630 = vrcp.pop %v1595
        %v1631 = vmul.f32 %v1551, %v1630
        %v1632 = vrcp.pop %v1598
        %v1633 = vmul.f32 %v1553, %v1632
        %v1634 = vrcp.pop %v1601
        %v1635 = vmul.f32 %v1555, %v1634
        %v1636 = vrcp.pop %v1604
        %v1637 = vmul.f32 %v1557, %v1636
        %v1638 = vrcp.pop %v1607
        %v1639 = vmul.f32 %v1559, %v1638
        %v1641 = vsel %vm314, %v1609, 0
        %v1644 = vsel %vm314, %v1611, 0
        %v1647 = vsel %vm314, %v1613, 0
        %v1650 = vsel %vm314, %v1615, 0
        %1652 = vmatprep.subr.mxu0 0.0
        %1653 = vmatpush1.msra.mxu0 %v950
        %1654 = vmatprep.subr.mxu0 0.0
        %1655 = vmatpush1.msra.mxu0 %v955
        %1656 = vmatprep.subr.mxu0 0.0
        %1657 = vmatpush1.msra.mxu0 %v960
        %1658 = vmatprep.subr.mxu0 0.0
        %1659 = vmatpush1.msra.mxu0 %v965
        %1660 = vmatprep.subr.mxu0 0.0
        %1661 = vmatpush1.msra.mxu0 0.0
        %1662 = vmatprep.subr.mxu0 0.0
        %1663 = vmatpush1.msra.mxu0 0.0
        %1664 = vmatprep.subr.mxu0 0.0
        %1665 = vmatpush1.msra.mxu0 0.0
        %1666 = vmatprep.subr.mxu0 0.0
        %1667 = vmatpush1.msra.mxu0 0.0
        %1668 = vmatprep.subr.mxu0 0.0
        %1669 = vmatpush1.msra.mxu0 0.0
        %1670 = vmatprep.subr.mxu0 0.0
        %1671 = vmatpush1.msra.mxu0 0.0
        %1672 = vmatprep.subr.mxu0 0.0
        %1673 = vmatpush1.msra.mxu0 0.0
        %1674 = vmatprep.subr.mxu0 0.0
        %1675 = vmatpush1.msra.mxu0 0.0
        %1676 = vmatprep.subr.mxu0 0.0
        %1677 = vmatpush1.msra.mxu0 0.0
        %1678 = vmatprep.subr.mxu0 0.0
        %1679 = vmatpush1.msra.mxu0 0.0
        %1680 = vmatprep.subr.mxu0 0.0
        %1681 = vmatpush1.msra.mxu0 0.0
        %1682 = vmatprep.subr.mxu0 0.0
        %1683 = vmatpush1.msra.mxu0 0.0
        %1684 = vmatprep.subr.mxu0 0.0
        %1685 = vmatpush1.msra.mxu0 0.0
        %1686 = vmatprep.subr.mxu0 0.0
        %1687 = vmatpush1.msra.mxu0 0.0
        %1688 = vmatprep.subr.mxu0 0.0
        %1689 = vmatpush1.msra.mxu0 0.0
        %1690 = vmatprep.subr.mxu0 0.0
        %1691 = vmatpush1.msra.mxu0 0.0
        %1692 = vmatprep.subr.mxu0 0.0
        %1693 = vmatpush1.msra.mxu0 0.0
        %1694 = vmatprep.subr.mxu0 0.0
        %1695 = vmatpush1.msra.mxu0 0.0
        %1696 = vmatprep.subr.mxu0 0.0
        %1697 = vmatpush1.msra.mxu0 0.0
        %1698 = vmatprep.subr.mxu0 0.0
        %1699 = vmatpush1.msra.mxu0 0.0
        %1700 = vmatprep.subr.mxu0 0.0
        %1701 = vmatpush1.msra.mxu0 0.0
        %1702 = vmatprep.subr.mxu0 0.0
        %1703 = vmatpush1.msra.mxu0 0.0
        %1704 = vmatprep.subr.mxu0 0.0
        %1705 = vmatpush1.msra.mxu0 0.0
        %1706 = vmatprep.subr.mxu0 0.0
        %1707 = vmatpush1.msra.mxu0 0.0
        %1708 = vmatprep.subr.mxu0 0.0
        %1709 = vmatpush1.msra.mxu0 0.0
        %1710 = vmatprep.subr.mxu0 0.0
        %1711 = vmatpush1.msra.mxu0 0.0
        %1712 = vmatprep.subr.mxu0 0.0
        %1713 = vmatpush1.msra.mxu0 0.0
        %1714 = vmatprep.subr.mxu0 0.0
        %1715 = vmatpush1.msra.mxu0 0.0
        %1716 = vmatprep.mubr.f32.mxu0 0.0
        %1717 = vmatmul.mubr.f32.gmra.mrb[0].mxu0 %v1641
        %v1718 = vpop.f32.mrb[0].mxu0
        %v1719 = vadd.f32 0.0, %v1718
        %v1720 = vpop.f32.mrb[0].mxu0
        %1721 = vmatprep.mubr.f32.mxu0 0.0
        %1722 = vmatmul.mubr.f32.gmra.mrb[0].mxu0 %v1644
        %v1723 = vpop.f32.mrb[0].mxu0
        %v1724 = vadd.f32 0.0, %v1723
        %v1725 = vpop.f32.mrb[0].mxu0
        %1726 = vmatprep.mubr.f32.mxu0 0.0
        %1727 = vmatmul.mubr.f32.gmra.mrb[0].mxu0 %v1647
        %v1728 = vpop.f32.mrb[0].mxu0
        %v1729 = vadd.f32 0.0, %v1728
        %v1730 = vpop.f32.mrb[0].mxu0
        %1731 = vmatprep.mubr.f32.mxu0 0.0
        %1732 = vmatmul.mubr.f32.gmra.mrb[0].mxu0 %v1650
        %v1733 = vpop.f32.mrb[0].mxu0
        %v1734 = vadd.f32 0.0, %v1733
        %v1735 = vpop.f32.mrb[0].mxu0
        %1736 = vdwg.mxu0
        %v1738 = vsel %vm314, %v1617, 0
        %v1741 = vsel %vm314, %v1619, 0
        %v1744 = vsel %vm314, %v1621, 0
        %v1747 = vsel %vm314, %v1623, 0
        %1749 = vmatprep.subr.mxu0 0.0
        %1750 = vmatpush1.msra.mxu0 %v970
        %1751 = vmatprep.subr.mxu0 0.0
        %1752 = vmatpush1.msra.mxu0 %v975
        %1753 = vmatprep.subr.mxu0 0.0
        %1754 = vmatpush1.msra.mxu0 %v980
        %1755 = vmatprep.subr.mxu0 0.0
        %1756 = vmatpush1.msra.mxu0 %v985
        %1757 = vmatprep.subr.mxu0 0.0
        %1758 = vmatpush1.msra.mxu0 0.0
        %1759 = vmatprep.subr.mxu0 0.0
        %1760 = vmatpush1.msra.mxu0 0.0
        %1761 = vmatprep.subr.mxu0 0.0
        %1762 = vmatpush1.msra.mxu0 0.0
        %1763 = vmatprep.subr.mxu0 0.0
        %1764 = vmatpush1.msra.mxu0 0.0
        %1765 = vmatprep.subr.mxu0 0.0
        %1766 = vmatpush1.msra.mxu0 0.0
        %1767 = vmatprep.subr.mxu0 0.0
        %1768 = vmatpush1.msra.mxu0 0.0
        %1769 = vmatprep.subr.mxu0 0.0
        %1770 = vmatpush1.msra.mxu0 0.0
        %1771 = vmatprep.subr.mxu0 0.0
        %1772 = vmatpush1.msra.mxu0 0.0
        %1773 = vmatprep.subr.mxu0 0.0
        %1774 = vmatpush1.msra.mxu0 0.0
        %1775 = vmatprep.subr.mxu0 0.0
        %1776 = vmatpush1.msra.mxu0 0.0
        %1777 = vmatprep.subr.mxu0 0.0
        %1778 = vmatpush1.msra.mxu0 0.0
        %1779 = vmatprep.subr.mxu0 0.0
        %1780 = vmatpush1.msra.mxu0 0.0
        %1781 = vmatprep.subr.mxu0 0.0
        %1782 = vmatpush1.msra.mxu0 0.0
        %1783 = vmatprep.subr.mxu0 0.0
        %1784 = vmatpush1.msra.mxu0 0.0
        %1785 = vmatprep.subr.mxu0 0.0
        %1786 = vmatpush1.msra.mxu0 0.0
        %1787 = vmatprep.subr.mxu0 0.0
        %1788 = vmatpush1.msra.mxu0 0.0
        %1789 = vmatprep.subr.mxu0 0.0
        %1790 = vmatpush1.msra.mxu0 0.0
        %1791 = vmatprep.subr.mxu0 0.0
        %1792 = vmatpush1.msra.mxu0 0.0
        %1793 = vmatprep.subr.mxu0 0.0
        %1794 = vmatpush1.msra.mxu0 0.0
        %1795 = vmatprep.subr.mxu0 0.0
        %1796 = vmatpush1.msra.mxu0 0.0
        %1797 = vmatprep.subr.mxu0 0.0
        %1798 = vmatpush1.msra.mxu0 0.0
        %1799 = vmatprep.subr.mxu0 0.0
        %1800 = vmatpush1.msra.mxu0 0.0
        %1801 = vmatprep.subr.mxu0 0.0
        %1802 = vmatpush1.msra.mxu0 0.0
        %1803 = vmatprep.subr.mxu0 0.0
        %1804 = vmatpush1.msra.mxu0 0.0
        %1805 = vmatprep.subr.mxu0 0.0
        %1806 = vmatpush1.msra.mxu0 0.0
        %1807 = vmatprep.subr.mxu0 0.0
        %1808 = vmatpush1.msra.mxu0 0.0
        %1809 = vmatprep.subr.mxu0 0.0
        %1810 = vmatpush1.msra.mxu0 0.0
        %1811 = vmatprep.subr.mxu0 0.0
        %1812 = vmatpush1.msra.mxu0 0.0
        %1813 = vmatprep.mubr.f32.mxu0 0.0
        %1814 = vmatmul.mubr.f32.gmra.mrb[0].mxu0 %v1738
        %v1815 = vpop.f32.mrb[0].mxu0
        %v1816 = vadd.f32 0.0, %v1815
        %v1817 = vpop.f32.mrb[0].mxu0
        %1818 = vmatprep.mubr.f32.mxu0 0.0
        %1819 = vmatmul.mubr.f32.gmra.mrb[0].mxu0 %v1741
        %v1820 = vpop.f32.mrb[0].mxu0
        %v1821 = vadd.f32 0.0, %v1820
        %v1822 = vpop.f32.mrb[0].mxu0
        %1823 = vmatprep.mubr.f32.mxu0 0.0
        %1824 = vmatmul.mubr.f32.gmra.mrb[0].mxu0 %v1744
        %v1825 = vpop.f32.mrb[0].mxu0
        %v1826 = vadd.f32 0.0, %v1825
        %v1827 = vpop.f32.mrb[0].mxu0
        %1828 = vmatprep.mubr.f32.mxu0 0.0
        %1829 = vmatmul.mubr.f32.gmra.mrb[0].mxu0 %v1747
        %v1830 = vpop.f32.mrb[0].mxu0
        %v1831 = vadd.f32 0.0, %v1830
        %v1832 = vpop.f32.mrb[0].mxu0
        %1833 = vdwg.mxu0
        %v1835 = vsel %vm314, %v1625, 0
        %v1838 = vsel %vm314, %v1627, 0
        %v1841 = vsel %vm314, %v1629, 0
        %v1844 = vsel %vm314, %v1631, 0
        %1846 = vmatprep.subr.mxu0 0.0
        %1847 = vmatpush1.msra.mxu0 %v990
        %1848 = vmatprep.subr.mxu0 0.0
        %1849 = vmatpush1.msra.mxu0 %v995
        %1850 = vmatprep.subr.mxu0 0.0
        %1851 = vmatpush1.msra.mxu0 %v1000
        %1852 = vmatprep.subr.mxu0 0.0
        %1853 = vmatpush1.msra.mxu0 %v1005
        %1854 = vmatprep.subr.mxu0 0.0
        %1855 = vmatpush1.msra.mxu0 0.0
        %1856 = vmatprep.subr.mxu0 0.0
        %1857 = vmatpush1.msra.mxu0 0.0
        %1858 = vmatprep.subr.mxu0 0.0
        %1859 = vmatpush1.msra.mxu0 0.0
        %1860 = vmatprep.subr.mxu0 0.0
        %1861 = vmatpush1.msra.mxu0 0.0
        %1862 = vmatprep.subr.mxu0 0.0
        %1863 = vmatpush1.msra.mxu0 0.0
        %1864 = vmatprep.subr.mxu0 0.0
        %1865 = vmatpush1.msra.mxu0 0.0
        %1866 = vmatprep.subr.mxu0 0.0
        %1867 = vmatpush1.msra.mxu0 0.0
        %1868 = vmatprep.subr.mxu0 0.0
        %1869 = vmatpush1.msra.mxu0 0.0
        %1870 = vmatprep.subr.mxu0 0.0
        %1871 = vmatpush1.msra.mxu0 0.0
        %1872 = vmatprep.subr.mxu0 0.0
        %1873 = vmatpush1.msra.mxu0 0.0
        %1874 = vmatprep.subr.mxu0 0.0
        %1875 = vmatpush1.msra.mxu0 0.0
        %1876 = vmatprep.subr.mxu0 0.0
        %1877 = vmatpush1.msra.mxu0 0.0
        %1878 = vmatprep.subr.mxu0 0.0
        %1879 = vmatpush1.msra.mxu0 0.0
        %1880 = vmatprep.subr.mxu0 0.0
        %1881 = vmatpush1.msra.mxu0 0.0
        %1882 = vmatprep.subr.mxu0 0.0
        %1883 = vmatpush1.msra.mxu0 0.0
        %1884 = vmatprep.subr.mxu0 0.0
        %1885 = vmatpush1.msra.mxu0 0.0
        %1886 = vmatprep.subr.mxu0 0.0
        %1887 = vmatpush1.msra.mxu0 0.0
        %1888 = vmatprep.subr.mxu0 0.0
        %1889 = vmatpush1.msra.mxu0 0.0
        %1890 = vmatprep.subr.mxu0 0.0
        %1891 = vmatpush1.msra.mxu0 0.0
        %1892 = vmatprep.subr.mxu0 0.0
        %1893 = vmatpush1.msra.mxu0 0.0
        %1894 = vmatprep.subr.mxu0 0.0
        %1895 = vmatpush1.msra.mxu0 0.0
        %1896 = vmatprep.subr.mxu0 0.0
        %1897 = vmatpush1.msra.mxu0 0.0
        %1898 = vmatprep.subr.mxu0 0.0
        %1899 = vmatpush1.msra.mxu0 0.0
        %1900 = vmatprep.subr.mxu0 0.0
        %1901 = vmatpush1.msra.mxu0 0.0
        %1902 = vmatprep.subr.mxu0 0.0
        %1903 = vmatpush1.msra.mxu0 0.0
        %1904 = vmatprep.subr.mxu0 0.0
        %1905 = vmatpush1.msra.mxu0 0.0
        %1906 = vmatprep.subr.mxu0 0.0
        %1907 = vmatpush1.msra.mxu0 0.0
        %1908 = vmatprep.subr.mxu0 0.0
        %1909 = vmatpush1.msra.mxu0 0.0
        %1910 = vmatprep.mubr.f32.mxu0 0.0
        %1911 = vmatmul.mubr.f32.gmra.mrb[0].mxu0 %v1835
        %v1912 = vpop.f32.mrb[0].mxu0
        %v1913 = vadd.f32 0.0, %v1912
        %v1914 = vpop.f32.mrb[0].mxu0
        %1915 = vmatprep.mubr.f32.mxu0 0.0
        %1916 = vmatmul.mubr.f32.gmra.mrb[0].mxu0 %v1838
        %v1917 = vpop.f32.mrb[0].mxu0
        %v1918 = vadd.f32 0.0, %v1917
        %v1919 = vpop.f32.mrb[0].mxu0
        %1920 = vmatprep.mubr.f32.mxu0 0.0
        %1921 = vmatmul.mubr.f32.gmra.mrb[0].mxu0 %v1841
        %v1922 = vpop.f32.mrb[0].mxu0
        %v1923 = vadd.f32 0.0, %v1922
        %v1924 = vpop.f32.mrb[0].mxu0
        %1925 = vmatprep.mubr.f32.mxu0 0.0
        %1926 = vmatmul.mubr.f32.gmra.mrb[0].mxu0 %v1844
        %v1927 = vpop.f32.mrb[0].mxu0
        %v1928 = vadd.f32 0.0, %v1927
        %v1929 = vpop.f32.mrb[0].mxu0
        %1930 = vdwg.mxu0
        %v1932 = vsel %vm314, %v1633, 0
        %v1935 = vsel %vm314, %v1635, 0
        %v1938 = vsel %vm314, %v1637, 0
        %v1941 = vsel %vm314, %v1639, 0
        %1943 = vmatprep.subr.mxu0 0.0
        %1944 = vmatpush1.msra.mxu0 %v1010
        %1945 = vmatprep.subr.mxu0 0.0
        %1946 = vmatpush1.msra.mxu0 %v1015
        %1947 = vmatprep.subr.mxu0 0.0
        %1948 = vmatpush1.msra.mxu0 %v1020
        %1949 = vmatprep.subr.mxu0 0.0
        %1950 = vmatpush1.msra.mxu0 %v1025
        %1951 = vmatprep.subr.mxu0 0.0
        %1952 = vmatpush1.msra.mxu0 0.0
        %1953 = vmatprep.subr.mxu0 0.0
        %1954 = vmatpush1.msra.mxu0 0.0
        %1955 = vmatprep.subr.mxu0 0.0
        %1956 = vmatpush1.msra.mxu0 0.0
        %1957 = vmatprep.subr.mxu0 0.0
        %1958 = vmatpush1.msra.mxu0 0.0
        %1959 = vmatprep.subr.mxu0 0.0
        %1960 = vmatpush1.msra.mxu0 0.0
        %1961 = vmatprep.subr.mxu0 0.0
        %1962 = vmatpush1.msra.mxu0 0.0
        %1963 = vmatprep.subr.mxu0 0.0
        %1964 = vmatpush1.msra.mxu0 0.0
        %1965 = vmatprep.subr.mxu0 0.0
        %1966 = vmatpush1.msra.mxu0 0.0
        %1967 = vmatprep.subr.mxu0 0.0
        %1968 = vmatpush1.msra.mxu0 0.0
        %1969 = vmatprep.subr.mxu0 0.0
        %1970 = vmatpush1.msra.mxu0 0.0
        %1971 = vmatprep.subr.mxu0 0.0
        %1972 = vmatpush1.msra.mxu0 0.0
        %1973 = vmatprep.subr.mxu0 0.0
        %1974 = vmatpush1.msra.mxu0 0.0
        %1975 = vmatprep.subr.mxu0 0.0
        %1976 = vmatpush1.msra.mxu0 0.0
        %1977 = vmatprep.subr.mxu0 0.0
        %1978 = vmatpush1.msra.mxu0 0.0
        %1979 = vmatprep.subr.mxu0 0.0
        %1980 = vmatpush1.msra.mxu0 0.0
        %1981 = vmatprep.subr.mxu0 0.0
        %1982 = vmatpush1.msra.mxu0 0.0
        %1983 = vmatprep.subr.mxu0 0.0
        %1984 = vmatpush1.msra.mxu0 0.0
        %1985 = vmatprep.subr.mxu0 0.0
        %1986 = vmatpush1.msra.mxu0 0.0
        %1987 = vmatprep.subr.mxu0 0.0
        %1988 = vmatpush1.msra.mxu0 0.0
        %1989 = vmatprep.subr.mxu0 0.0
        %1990 = vmatpush1.msra.mxu0 0.0
        %1991 = vmatprep.subr.mxu0 0.0
        %1992 = vmatpush1.msra.mxu0 0.0
        %1993 = vmatprep.subr.mxu0 0.0
        %1994 = vmatpush1.msra.mxu0 0.0
        %1995 = vmatprep.subr.mxu0 0.0
        %1996 = vmatpush1.msra.mxu0 0.0
        %1997 = vmatprep.subr.mxu0 0.0
        %1998 = vmatpush1.msra.mxu0 0.0
        %1999 = vmatprep.subr.mxu0 0.0
        %2000 = vmatpush1.msra.mxu0 0.0
        %2001 = vmatprep.subr.mxu0 0.0
        %2002 = vmatpush1.msra.mxu0 0.0
        %2003 = vmatprep.subr.mxu0 0.0
        %2004 = vmatpush1.msra.mxu0 0.0
        %2005 = vmatprep.subr.mxu0 0.0
        %2006 = vmatpush1.msra.mxu0 0.0
        %2007 = vmatprep.mubr.f32.mxu0 0.0
        %2008 = vmatmul.mubr.f32.gmra.mrb[0].mxu0 %v1932
        %v2009 = vpop.f32.mrb[0].mxu0
        %v2010 = vadd.f32 0.0, %v2009
        %v2011 = vpop.f32.mrb[0].mxu0
        %2012 = vmatprep.mubr.f32.mxu0 0.0
        %2013 = vmatmul.mubr.f32.gmra.mrb[0].mxu0 %v1935
        %v2014 = vpop.f32.mrb[0].mxu0
        %v2015 = vadd.f32 0.0, %v2014
        %v2016 = vpop.f32.mrb[0].mxu0
        %2017 = vmatprep.mubr.f32.mxu0 0.0
        %2018 = vmatmul.mubr.f32.gmra.mrb[0].mxu0 %v1938
        %v2019 = vpop.f32.mrb[0].mxu0
        %v2020 = vadd.f32 0.0, %v2019
        %v2021 = vpop.f32.mrb[0].mxu0
        %2022 = vmatprep.mubr.f32.mxu0 0.0
        %2023 = vmatmul.mubr.f32.gmra.mrb[0].mxu0 %v1941
        %v2024 = vpop.f32.mrb[0].mxu0
        %v2025 = vadd.f32 0.0, %v2024
        %v2026 = vpop.f32.mrb[0].mxu0
        %2027 = vdwg.mxu0
        %v2028 = vld [vmem:[%s2] sm:$0xff]
        %s2029 = scalar_lea.vmem %s6, 3
        %v2030 = vld [vmem:[%s2029] sm:$0x1]
        %v2032 = vlaneseq
        %v2033 = vshrl.u32 %v2032, 7
        %v2034 = vsub.s32 0, %v2033
        %v2035 = vrot.slane %v2030, %v2034
        %v2038 = vsel %vm524, %v1719, 0
        %v2041 = vsel %vm524, %v1724, 0
        %v2044 = vsel %vm524, %v1729, 0
        %v2047 = vsel %vm524, %v1734, 0
        %v2050 = vsel %vm524, %v1816, 0
        %v2053 = vsel %vm524, %v1821, 0
        %v2056 = vsel %vm524, %v1826, 0
        %v2059 = vsel %vm524, %v1831, 0
        %v2062 = vsel %vm524, %v1913, 0
        %v2065 = vsel %vm524, %v1918, 0
        %v2068 = vsel %vm524, %v1923, 0
        %v2071 = vsel %vm524, %v1928, 0
        %v2074 = vsel %vm524, %v2010, 0
        %v2077 = vsel %vm524, %v2015, 0
        %v2080 = vsel %vm524, %v2020, 0
        %v2083 = vsel %vm524, %v2025, 0
        %2085 = vmatprep.subr.mxu0 0.0
        %2086 = vmatpush1.msra.mxu0 %v2028
        %2087 = vmatprep.subr.mxu0 0.0
        %2088 = vmatpush1.msra.mxu0 0.0
        %2089 = vmatprep.subr.mxu0 0.0
        %2090 = vmatpush1.msra.mxu0 0.0
        %2091 = vmatprep.subr.mxu0 0.0
        %2092 = vmatpush1.msra.mxu0 0.0
        %2093 = vmatprep.subr.mxu0 0.0
        %2094 = vmatpush1.msra.mxu0 0.0
        %2095 = vmatprep.subr.mxu0 0.0
        %2096 = vmatpush1.msra.mxu0 0.0
        %2097 = vmatprep.subr.mxu0 0.0
        %2098 = vmatpush1.msra.mxu0 0.0
        %2099 = vmatprep.subr.mxu0 0.0
        %2100 = vmatpush1.msra.mxu0 0.0
        %2101 = vmatprep.subr.mxu0 0.0
        %2102 = vmatpush1.msra.mxu0 0.0
        %2103 = vmatprep.subr.mxu0 0.0
        %2104 = vmatpush1.msra.mxu0 0.0
        %2105 = vmatprep.subr.mxu0 0.0
        %2106 = vmatpush1.msra.mxu0 0.0
        %2107 = vmatprep.subr.mxu0 0.0
        %2108 = vmatpush1.msra.mxu0 0.0
        %2109 = vmatprep.subr.mxu0 0.0
        %2110 = vmatpush1.msra.mxu0 0.0
        %2111 = vmatprep.subr.mxu0 0.0
        %2112 = vmatpush1.msra.mxu0 0.0
        %2113 = vmatprep.subr.mxu0 0.0
        %2114 = vmatpush1.msra.mxu0 0.0
        %2115 = vmatprep.subr.mxu0 0.0
        %2116 = vmatpush1.msra.mxu0 0.0
        %2117 = vmatprep.subr.mxu0 0.0
        %2118 = vmatpush1.msra.mxu0 0.0
        %2119 = vmatprep.subr.mxu0 0.0
        %2120 = vmatpush1.msra.mxu0 0.0
        %2121 = vmatprep.subr.mxu0 0.0
        %2122 = vmatpush1.msra.mxu0 0.0
        %2123 = vmatprep.subr.mxu0 0.0
        %2124 = vmatpush1.msra.mxu0 0.0
        %2125 = vmatprep.subr.mxu0 0.0
        %2126 = vmatpush1.msra.mxu0 0.0
        %2127 = vmatprep.subr.mxu0 0.0
        %2128 = vmatpush1.msra.mxu0 0.0
        %2129 = vmatprep.subr.mxu0 0.0
        %2130 = vmatpush1.msra.mxu0 0.0
        %2131 = vmatprep.subr.mxu0 0.0
        %2132 = vmatpush1.msra.mxu0 0.0
        %2133 = vmatprep.subr.mxu0 0.0
        %2134 = vmatpush1.msra.mxu0 0.0
        %2135 = vmatprep.subr.mxu0 0.0
        %2136 = vmatpush1.msra.mxu0 0.0
        %2137 = vmatprep.subr.mxu0 0.0
        %2138 = vmatpush1.msra.mxu0 0.0
        %2139 = vmatprep.subr.mxu0 0.0
        %2140 = vmatpush1.msra.mxu0 0.0
        %2141 = vmatprep.subr.mxu0 0.0
        %2142 = vmatpush1.msra.mxu0 0.0
        %2143 = vmatprep.subr.mxu0 0.0
        %2144 = vmatpush1.msra.mxu0 0.0
        %2145 = vmatprep.subr.mxu0 0.0
        %2146 = vmatpush1.msra.mxu0 0.0
        %2147 = vmatprep.subr.mxu0 0.0
        %2148 = vmatpush1.msra.mxu0 0.0
        %2149 = vmatprep.mubr.f32.mxu0 0.0
        %2150 = vmatmul.mubr.f32.gmra.mrb[0].mxu0 %v2038
        %v2151 = vpop.f32.mrb[0].mxu0
        %v2152 = vadd.f32 %v2035, %v2151
        %v2153 = vpop.f32.mrb[0].mxu0
        %2154 = vmatprep.mubr.f32.mxu0 0.0
        %2155 = vmatmul.mubr.f32.gmra.mrb[0].mxu0 %v2041
        %v2156 = vpop.f32.mrb[0].mxu0
        %v2157 = vadd.f32 %v2035, %v2156
        %v2158 = vpop.f32.mrb[0].mxu0
        %2159 = vmatprep.mubr.f32.mxu0 0.0
        %2160 = vmatmul.mubr.f32.gmra.mrb[0].mxu0 %v2044
        %v2161 = vpop.f32.mrb[0].mxu0
        %v2162 = vadd.f32 %v2035, %v2161
        %v2163 = vpop.f32.mrb[0].mxu0
        %2164 = vmatprep.mubr.f32.mxu0 0.0
        %2165 = vmatmul.mubr.f32.gmra.mrb[0].mxu0 %v2047
        %v2166 = vpop.f32.mrb[0].mxu0
        %v2167 = vadd.f32 %v2035, %v2166
        %v2168 = vpop.f32.mrb[0].mxu0
        %2169 = vmatprep.mubr.f32.mxu0 0.0
        %2170 = vmatmul.mubr.f32.gmra.mrb[0].mxu0 %v2050
        %v2171 = vpop.f32.mrb[0].mxu0
        %v2172 = vadd.f32 %v2035, %v2171
        %v2173 = vpop.f32.mrb[0].mxu0
        %2174 = vmatprep.mubr.f32.mxu0 0.0
        %2175 = vmatmul.mubr.f32.gmra.mrb[0].mxu0 %v2053
        %v2176 = vpop.f32.mrb[0].mxu0
        %v2177 = vadd.f32 %v2035, %v2176
        %v2178 = vpop.f32.mrb[0].mxu0
        %2179 = vmatprep.mubr.f32.mxu0 0.0
        %2180 = vmatmul.mubr.f32.gmra.mrb[0].mxu0 %v2056
        %v2181 = vpop.f32.mrb[0].mxu0
        %v2182 = vadd.f32 %v2035, %v2181
        %v2183 = vpop.f32.mrb[0].mxu0
        %2184 = vmatprep.mubr.f32.mxu0 0.0
        %2185 = vmatmul.mubr.f32.gmra.mrb[0].mxu0 %v2059
        %v2186 = vpop.f32.mrb[0].mxu0
        %v2187 = vadd.f32 %v2035, %v2186
        %v2188 = vpop.f32.mrb[0].mxu0
        %2189 = vmatprep.mubr.f32.mxu0 0.0
        %2190 = vmatmul.mubr.f32.gmra.mrb[0].mxu0 %v2062
        %v2191 = vpop.f32.mrb[0].mxu0
        %v2192 = vadd.f32 %v2035, %v2191
        %v2193 = vpop.f32.mrb[0].mxu0
        %2194 = vmatprep.mubr.f32.mxu0 0.0
        %2195 = vmatmul.mubr.f32.gmra.mrb[0].mxu0 %v2065
        %v2196 = vpop.f32.mrb[0].mxu0
        %v2197 = vadd.f32 %v2035, %v2196
        %v2198 = vpop.f32.mrb[0].mxu0
        %2199 = vmatprep.mubr.f32.mxu0 0.0
        %2200 = vmatmul.mubr.f32.gmra.mrb[0].mxu0 %v2068
        %v2201 = vpop.f32.mrb[0].mxu0
        %v2202 = vadd.f32 %v2035, %v2201
        %v2203 = vpop.f32.mrb[0].mxu0
        %2204 = vmatprep.mubr.f32.mxu0 0.0
        %2205 = vmatmul.mubr.f32.gmra.mrb[0].mxu0 %v2071
        %v2206 = vpop.f32.mrb[0].mxu0
        %v2207 = vadd.f32 %v2035, %v2206
        %v2208 = vpop.f32.mrb[0].mxu0
        %2209 = vmatprep.mubr.f32.mxu0 0.0
        %2210 = vmatmul.mubr.f32.gmra.mrb[0].mxu0 %v2074
        %v2211 = vpop.f32.mrb[0].mxu0
        %v2212 = vadd.f32 %v2035, %v2211
        %v2213 = vpop.f32.mrb[0].mxu0
        %2214 = vmatprep.mubr.f32.mxu0 0.0
        %2215 = vmatmul.mubr.f32.gmra.mrb[0].mxu0 %v2077
        %v2216 = vpop.f32.mrb[0].mxu0
        %v2217 = vadd.f32 %v2035, %v2216
        %v2218 = vpop.f32.mrb[0].mxu0
        %2219 = vmatprep.mubr.f32.mxu0 0.0
        %2220 = vmatmul.mubr.f32.gmra.mrb[0].mxu0 %v2080
        %v2221 = vpop.f32.mrb[0].mxu0
        %v2222 = vadd.f32 %v2035, %v2221
        %v2223 = vpop.f32.mrb[0].mxu0
        %2224 = vmatprep.mubr.f32.mxu0 0.0
        %2225 = vmatmul.mubr.f32.gmra.mrb[0].mxu0 %v2083
        %v2226 = vpop.f32.mrb[0].mxu0
        %v2227 = vadd.f32 %v2035, %v2226
        %v2228 = vpop.f32.mrb[0].mxu0
        %2229 = vdwg.mxu0
        %2230 = vxpose.xlu0.b32.start [1/16] %v2152, 128
        %2231 = vxpose.xlu0.b32.cont [2/16] %v2157, 128
        %2232 = vxpose.xlu0.b32.cont [3/16] %v2162, 128
        %2233 = vxpose.xlu0.b32.cont [4/16] %v2167, 128
        %2234 = vxpose.xlu0.b32.cont [5/16] 0.0, 128
        %2235 = vxpose.xlu0.b32.cont [6/16] 0.0, 128
        %2236 = vxpose.xlu0.b32.cont [7/16] 0.0, 128
        %2237 = vxpose.xlu0.b32.cont [8/16] 0.0, 128
        %2238 = vxpose.xlu0.b32.cont [9/16] 0.0, 128
        %2239 = vxpose.xlu0.b32.cont [10/16] 0.0, 128
        %2240 = vxpose.xlu0.b32.cont [11/16] 0.0, 128
        %2241 = vxpose.xlu0.b32.cont [12/16] 0.0, 128
        %2242 = vxpose.xlu0.b32.cont [13/16] 0.0, 128
        %2243 = vxpose.xlu0.b32.cont [14/16] 0.0, 128
        %2244 = vxpose.xlu0.b32.cont [15/16] 0.0, 128
        %2245 = vxpose.xlu0.b32.end [16/16] 0.0, 128
        %v2246 = vpop.trf.xlu0
        %v2247 = vpop.trf.xlu0
        %v2248 = vpop.trf.xlu0
        %v2249 = vpop.trf.xlu0
        %v2250 = vpop.trf.xlu0
        %v2251 = vpop.trf.xlu0
        %v2252 = vpop.trf.xlu0
        %v2253 = vpop.trf.xlu0
        %v2254 = vpop.trf.xlu0
        %v2255 = vpop.trf.xlu0
        %v2256 = vpop.trf.xlu0
        %v2257 = vpop.trf.xlu0
        %v2258 = vpop.trf.xlu0
        %v2259 = vpop.trf.xlu0
        %v2260 = vpop.trf.xlu0
        %v2261 = vpop.trf.xlu0
        %2262 = vxpose.xlu0.b32.start [1/16] %v2172, 128
        %2263 = vxpose.xlu0.b32.cont [2/16] %v2177, 128
        %2264 = vxpose.xlu0.b32.cont [3/16] %v2182, 128
        %2265 = vxpose.xlu0.b32.cont [4/16] %v2187, 128
        %2266 = vxpose.xlu0.b32.cont [5/16] 0.0, 128
        %2267 = vxpose.xlu0.b32.cont [6/16] 0.0, 128
        %2268 = vxpose.xlu0.b32.cont [7/16] 0.0, 128
        %2269 = vxpose.xlu0.b32.cont [8/16] 0.0, 128
        %2270 = vxpose.xlu0.b32.cont [9/16] 0.0, 128
        %2271 = vxpose.xlu0.b32.cont [10/16] 0.0, 128
        %2272 = vxpose.xlu0.b32.cont [11/16] 0.0, 128
        %2273 = vxpose.xlu0.b32.cont [12/16] 0.0, 128
        %2274 = vxpose.xlu0.b32.cont [13/16] 0.0, 128
        %2275 = vxpose.xlu0.b32.cont [14/16] 0.0, 128
        %2276 = vxpose.xlu0.b32.cont [15/16] 0.0, 128
        %2277 = vxpose.xlu0.b32.end [16/16] 0.0, 128
        %v2278 = vpop.trf.xlu0
        %v2279 = vpop.trf.xlu0
        %v2280 = vpop.trf.xlu0
        %v2281 = vpop.trf.xlu0
        %v2282 = vpop.trf.xlu0
        %v2283 = vpop.trf.xlu0
        %v2284 = vpop.trf.xlu0
        %v2285 = vpop.trf.xlu0
        %v2286 = vpop.trf.xlu0
        %v2287 = vpop.trf.xlu0
        %v2288 = vpop.trf.xlu0
        %v2289 = vpop.trf.xlu0
        %v2290 = vpop.trf.xlu0
        %v2291 = vpop.trf.xlu0
        %v2292 = vpop.trf.xlu0
        %v2293 = vpop.trf.xlu0
        %2294 = vxpose.xlu0.b32.start [1/16] %v2192, 128
        %2295 = vxpose.xlu0.b32.cont [2/16] %v2197, 128
        %2296 = vxpose.xlu0.b32.cont [3/16] %v2202, 128
        %2297 = vxpose.xlu0.b32.cont [4/16] %v2207, 128
        %2298 = vxpose.xlu0.b32.cont [5/16] 0.0, 128
        %2299 = vxpose.xlu0.b32.cont [6/16] 0.0, 128
        %2300 = vxpose.xlu0.b32.cont [7/16] 0.0, 128
        %2301 = vxpose.xlu0.b32.cont [8/16] 0.0, 128
        %2302 = vxpose.xlu0.b32.cont [9/16] 0.0, 128
        %2303 = vxpose.xlu0.b32.cont [10/16] 0.0, 128
        %2304 = vxpose.xlu0.b32.cont [11/16] 0.0, 128
        %2305 = vxpose.xlu0.b32.cont [12/16] 0.0, 128
        %2306 = vxpose.xlu0.b32.cont [13/16] 0.0, 128
        %2307 = vxpose.xlu0.b32.cont [14/16] 0.0, 128
        %2308 = vxpose.xlu0.b32.cont [15/16] 0.0, 128
        %2309 = vxpose.xlu0.b32.end [16/16] 0.0, 128
        %v2310 = vpop.trf.xlu0
        %v2311 = vpop.trf.xlu0
        %v2312 = vpop.trf.xlu0
        %v2313 = vpop.trf.xlu0
        %v2314 = vpop.trf.xlu0
        %v2315 = vpop.trf.xlu0
        %v2316 = vpop.trf.xlu0
        %v2317 = vpop.trf.xlu0
        %v2318 = vpop.trf.xlu0
        %v2319 = vpop.trf.xlu0
        %v2320 = vpop.trf.xlu0
        %v2321 = vpop.trf.xlu0
        %v2322 = vpop.trf.xlu0
        %v2323 = vpop.trf.xlu0
        %v2324 = vpop.trf.xlu0
        %v2325 = vpop.trf.xlu0
        %2326 = vxpose.xlu0.b32.start [1/16] %v2212, 128
        %2327 = vxpose.xlu0.b32.cont [2/16] %v2217, 128
        %2328 = vxpose.xlu0.b32.cont [3/16] %v2222, 128
        %2329 = vxpose.xlu0.b32.cont [4/16] %v2227, 128
        %2330 = vxpose.xlu0.b32.cont [5/16] 0.0, 128
        %2331 = vxpose.xlu0.b32.cont [6/16] 0.0, 128
        %2332 = vxpose.xlu0.b32.cont [7/16] 0.0, 128
        %2333 = vxpose.xlu0.b32.cont [8/16] 0.0, 128
        %2334 = vxpose.xlu0.b32.cont [9/16] 0.0, 128
        %2335 = vxpose.xlu0.b32.cont [10/16] 0.0, 128
        %2336 = vxpose.xlu0.b32.cont [11/16] 0.0, 128
        %2337 = vxpose.xlu0.b32.cont [12/16] 0.0, 128
        %2338 = vxpose.xlu0.b32.cont [13/16] 0.0, 128
        %2339 = vxpose.xlu0.b32.cont [14/16] 0.0, 128
        %2340 = vxpose.xlu0.b32.cont [15/16] 0.0, 128
        %2341 = vxpose.xlu0.b32.end [16/16] 0.0, 128
        %v2342 = vpop.trf.xlu0
        %v2343 = vpop.trf.xlu0
        %v2344 = vpop.trf.xlu0
        %v2345 = vpop.trf.xlu0
        %v2346 = vpop.trf.xlu0
        %v2347 = vpop.trf.xlu0
        %v2348 = vpop.trf.xlu0
        %v2349 = vpop.trf.xlu0
        %v2350 = vpop.trf.xlu0
        %v2351 = vpop.trf.xlu0
        %v2352 = vpop.trf.xlu0
        %v2353 = vpop.trf.xlu0
        %v2354 = vpop.trf.xlu0
        %v2355 = vpop.trf.xlu0
        %v2356 = vpop.trf.xlu0
        %v2357 = vpop.trf.xlu0
        %v2358 = vadd.f32 %v307, %v2246
        %v2359 = vadd.f32 %v308, %v2278
        %v2360 = vadd.f32 %v309, %v2310
        %v2361 = vadd.f32 %v310, %v2342
        %s2362 = scalar_lea.vmem %s5, 2
        %v2363 = vld [vmem:[%s2362] sm:$0x1]
        %s2364 = scalar_lea.vmem %s5, 3
        %v2365 = vld [vmem:[%s2364] sm:$0x1]
        %v2366 = vsel %vm314, %v2358, 0.0
        %2367 = vadd.xlane.f32.xlu0 %v2366
        %v2368 = vpop.xlane.xlu0 %2367
        %v2369 = vsel %vm314, %v2359, 0.0
        %2370 = vadd.xlane.f32.xlu0 %v2369
        %v2371 = vpop.xlane.xlu0 %2370
        %v2372 = vsel %vm314, %v2360, 0.0
        %2373 = vadd.xlane.f32.xlu0 %v2372
        %v2374 = vpop.xlane.xlu0 %2373
        %v2375 = vsel %vm314, %v2361, 0.0
        %2376 = vadd.xlane.f32.xlu0 %v2375
        %v2377 = vpop.xlane.xlu0 %2376
        %v2378 = vmul.f32 %v2368, %v327
        %v2379 = vmul.f32 %v2371, %v327
        %v2380 = vmul.f32 %v2374, %v327
        %v2381 = vmul.f32 %v2377, %v327
        %v2382 = vsub.f32 %v2358, %v2378
        %v2383 = vsub.f32 %v2359, %v2379
        %v2384 = vsub.f32 %v2360, %v2380
        %v2385 = vsub.f32 %v2361, %v2381
        %v2386 = vmul.f32 %v2382, %v2382
        %v2387 = vmul.f32 %v2383, %v2383
        %v2388 = vmul.f32 %v2384, %v2384
        %v2389 = vmul.f32 %v2385, %v2385
        %v2390 = vsel %vm314, %v2386, 0.0
        %2391 = vadd.xlane.f32.xlu0 %v2390
        %v2392 = vpop.xlane.xlu0 %2391
        %v2393 = vsel %vm314, %v2387, 0.0
        %2394 = vadd.xlane.f32.xlu0 %v2393
        %v2395 = vpop.xlane.xlu0 %2394
        %v2396 = vsel %vm314, %v2388, 0.0
        %2397 = vadd.xlane.f32.xlu0 %v2396
        %v2398 = vpop.xlane.xlu0 %2397
        %v2399 = vsel %vm314, %v2389, 0.0
        %2400 = vadd.xlane.f32.xlu0 %v2399
        %v2401 = vpop.xlane.xlu0 %2400
        %v2402 = vmul.f32 %v2392, %v327
        %v2403 = vmul.f32 %v2395, %v327
        %v2404 = vmul.f32 %v2398, %v327
        %v2405 = vmul.f32 %v2401, %v327
        %v2406 = vadd.f32 %v2402, 1e-05
        %v2407 = vadd.f32 %v2403, 1e-05
        %v2408 = vadd.f32 %v2404, 1e-05
        %v2409 = vadd.f32 %v2405, 1e-05
        %v2410 = vrsqrt.pop %v2406
        %v2411 = vrsqrt.pop %v2407
        %v2412 = vrsqrt.pop %v2408
        %v2413 = vrsqrt.pop %v2409
        %v2414 = vmul.f32 %v2382, %v2410
        %v2415 = vmul.f32 %v2383, %v2411
        %v2416 = vmul.f32 %v2384, %v2412
        %v2417 = vmul.f32 %v2385, %v2413
        %v2419 = vlaneseq
        %v2420 = vshrl.u32 %v2419, 7
        %v2421 = vsub.s32 0, %v2420
        %v2422 = vrot.slane %v2363, %v2421
        %v2424 = vmul.f32 %v2414, %v2422
        %v2425 = vmul.f32 %v2415, %v2422
        %v2426 = vmul.f32 %v2416, %v2422
        %v2427 = vmul.f32 %v2417, %v2422
        %v2429 = vlaneseq
        %v2430 = vshrl.u32 %v2429, 7
        %v2431 = vsub.s32 0, %v2430
        %v2432 = vrot.slane %v2365, %v2431
        %v2434 = vadd.f32 %v2424, %v2432
        %v2435 = vadd.f32 %v2425, %v2432
        %v2436 = vadd.f32 %v2426, %v2432
        %v2437 = vadd.f32 %v2427, %v2432
        %v2438 = vld [vmem:[%s3] sm:$0xff]
        %v2439 = vld [vmem:[%s3 + $0x8] sm:$0xff]
        %v2440 = vld [vmem:[%s3 + $0x10] sm:$0xff]
        %v2441 = vld [vmem:[%s3 + $0x18] sm:$0xff]
        %v2442 = vld [vmem:[%s7] sm:$0x1]
        %v2444 = vlaneseq
        %v2445 = vshrl.u32 %v2444, 7
        %v2446 = vsub.s32 0, %v2445
        %v2447 = vrot.slane %v2442, %v2446
        %v2450 = vsel %vm314, %v2434, 0
        %v2453 = vsel %vm314, %v2435, 0
        %v2456 = vsel %vm314, %v2436, 0
        %v2459 = vsel %vm314, %v2437, 0
        %2461 = vmatprep.subr.mxu0 0.0
        %2462 = vmatpush1.msra.mxu0 %v2438
        %2463 = vmatprep.subr.mxu0 0.0
        %2464 = vmatpush1.msra.mxu0 %v2439
        %2465 = vmatprep.subr.mxu0 0.0
        %2466 = vmatpush1.msra.mxu0 %v2440
        %2467 = vmatprep.subr.mxu0 0.0
        %2468 = vmatpush1.msra.mxu0 %v2441
        %2469 = vmatprep.subr.mxu0 0.0
        %2470 = vmatpush1.msra.mxu0 0.0
        %2471 = vmatprep.subr.mxu0 0.0
        %2472 = vmatpush1.msra.mxu0 0.0
        %2473 = vmatprep.subr.mxu0 0.0
        %2474 = vmatpush1.msra.mxu0 0.0
        %2475 = vmatprep.subr.mxu0 0.0
        %2476 = vmatpush1.msra.mxu0 0.0
        %2477 = vmatprep.subr.mxu0 0.0
        %2478 = vmatpush1.msra.mxu0 0.0
        %2479 = vmatprep.subr.mxu0 0.0
        %2480 = vmatpush1.msra.mxu0 0.0
        %2481 = vmatprep.subr.mxu0 0.0
        %2482 = vmatpush1.msra.mxu0 0.0
        %2483 = vmatprep.subr.mxu0 0.0
        %2484 = vmatpush1.msra.mxu0 0.0
        %2485 = vmatprep.subr.mxu0 0.0
        %2486 = vmatpush1.msra.mxu0 0.0
        %2487 = vmatprep.subr.mxu0 0.0
        %2488 = vmatpush1.msra.mxu0 0.0
        %2489 = vmatprep.subr.mxu0 0.0
        %2490 = vmatpush1.msra.mxu0 0.0
        %2491 = vmatprep.subr.mxu0 0.0
        %2492 = vmatpush1.msra.mxu0 0.0
        %2493 = vmatprep.subr.mxu0 0.0
        %2494 = vmatpush1.msra.mxu0 0.0
        %2495 = vmatprep.subr.mxu0 0.0
        %2496 = vmatpush1.msra.mxu0 0.0
        %2497 = vmatprep.subr.mxu0 0.0
        %2498 = vmatpush1.msra.mxu0 0.0
        %2499 = vmatprep.subr.mxu0 0.0
        %2500 = vmatpush1.msra.mxu0 0.0
        %2501 = vmatprep.subr.mxu0 0.0
        %2502 = vmatpush1.msra.mxu0 0.0
        %2503 = vmatprep.subr.mxu0 0.0
        %2504 = vmatpush1.msra.mxu0 0.0
        %2505 = vmatprep.subr.mxu0 0.0
        %2506 = vmatpush1.msra.mxu0 0.0
        %2507 = vmatprep.subr.mxu0 0.0
        %2508 = vmatpush1.msra.mxu0 0.0
        %2509 = vmatprep.subr.mxu0 0.0
        %2510 = vmatpush1.msra.mxu0 0.0
        %2511 = vmatprep.subr.mxu0 0.0
        %2512 = vmatpush1.msra.mxu0 0.0
        %2513 = vmatprep.subr.mxu0 0.0
        %2514 = vmatpush1.msra.mxu0 0.0
        %2515 = vmatprep.subr.mxu0 0.0
        %2516 = vmatpush1.msra.mxu0 0.0
        %2517 = vmatprep.subr.mxu0 0.0
        %2518 = vmatpush1.msra.mxu0 0.0
        %2519 = vmatprep.subr.mxu0 0.0
        %2520 = vmatpush1.msra.mxu0 0.0
        %2521 = vmatprep.subr.mxu0 0.0
        %2522 = vmatpush1.msra.mxu0 0.0
        %2523 = vmatprep.subr.mxu0 0.0
        %2524 = vmatpush1.msra.mxu0 0.0
        %2525 = vmatprep.mubr.f32.mxu0 0.0
        %2526 = vmatmul.mubr.f32.gmra.mrb[0].mxu0 %v2450
        %v2527 = vpop.f32.mrb[0].mxu0
        %v2528 = vadd.f32 %v2447, %v2527
        %v2529 = vpop.f32.mrb[0].mxu0
        %2530 = vmatprep.mubr.f32.mxu0 0.0
        %2531 = vmatmul.mubr.f32.gmra.mrb[0].mxu0 %v2453
        %v2532 = vpop.f32.mrb[0].mxu0
        %v2533 = vadd.f32 %v2447, %v2532
        %v2534 = vpop.f32.mrb[0].mxu0
        %2535 = vmatprep.mubr.f32.mxu0 0.0
        %2536 = vmatmul.mubr.f32.gmra.mrb[0].mxu0 %v2456
        %v2537 = vpop.f32.mrb[0].mxu0
        %v2538 = vadd.f32 %v2447, %v2537
        %v2539 = vpop.f32.mrb[0].mxu0
        %2540 = vmatprep.mubr.f32.mxu0 0.0
        %2541 = vmatmul.mubr.f32.gmra.mrb[0].mxu0 %v2459
        %v2542 = vpop.f32.mrb[0].mxu0
        %v2543 = vadd.f32 %v2447, %v2542
        %v2544 = vpop.f32.mrb[0].mxu0
        %2545 = vdwg.mxu0
        %v2546 = vmul.f32 %v2528, 0.70710677
        %v2547 = vmul.f32 %v2533, 0.70710677
        %v2548 = vmul.f32 %v2538, 0.70710677
        %v2549 = vmul.f32 %v2543, 0.70710677
        %v2550 = vand.u32 2147483647, %v2546
        %v2551 = vand.u32 2147483647, %v2547
        %v2552 = vand.u32 2147483647, %v2548
        %v2553 = vand.u32 2147483647, %v2549
        %v2554 = vmul.f32 %v2550, 0.3275911
        %v2555 = vmul.f32 %v2551, 0.3275911
        %v2556 = vmul.f32 %v2552, 0.3275911
        %v2557 = vmul.f32 %v2553, 0.3275911
        %v2558 = vadd.f32 %v2554, 1.0
        %v2559 = vadd.f32 %v2555, 1.0
        %v2560 = vadd.f32 %v2556, 1.0
        %v2561 = vadd.f32 %v2557, 1.0
        %v2562 = vrcp.pop %v2558
        %v2563 = vmul.f32 1.0, %v2562
        %v2564 = vrcp.pop %v2559
        %v2565 = vmul.f32 1.0, %v2564
        %v2566 = vrcp.pop %v2560
        %v2567 = vmul.f32 1.0, %v2566
        %v2568 = vrcp.pop %v2561
        %v2569 = vmul.f32 1.0, %v2568
        %v2570 = vmul.f32 %v2563, 1.0614054
        %v2571 = vmul.f32 %v2565, 1.0614054
        %v2572 = vmul.f32 %v2567, 1.0614054
        %v2573 = vmul.f32 %v2569, 1.0614054
        %v2574 = vadd.f32 %v2570, -1.4531521
        %v2575 = vadd.f32 %v2571, -1.4531521
        %v2576 = vadd.f32 %v2572, -1.4531521
        %v2577 = vadd.f32 %v2573, -1.4531521
        %v2578 = vmul.f32 %v2563, %v2574
        %v2579 = vmul.f32 %v2565, %v2575
        %v2580 = vmul.f32 %v2567, %v2576
        %v2581 = vmul.f32 %v2569, %v2577
        %v2582 = vadd.f32 %v2578, 1.4214138
        %v2583 = vadd.f32 %v2579, 1.4214138
        %v2584 = vadd.f32 %v2580, 1.4214138
        %v2585 = vadd.f32 %v2581, 1.4214138
        %v2586 = vmul.f32 %v2563, %v2582
        %v2587 = vmul.f32 %v2565, %v2583
        %v2588 = vmul.f32 %v2567, %v2584
        %v2589 = vmul.f32 %v2569, %v2585
        %v2590 = vadd.f32 %v2586, -0.28449672
        %v2591 = vadd.f32 %v2587, -0.28449672
        %v2592 = vadd.f32 %v2588, -0.28449672
        %v2593 = vadd.f32 %v2589, -0.28449672
        %v2594 = vmul.f32 %v2563, %v2590
        %v2595 = vmul.f32 %v2565, %v2591
        %v2596 = vmul.f32 %v2567, %v2592
        %v2597 = vmul.f32 %v2569, %v2593
        %v2598 = vadd.f32 %v2594, 0.2548296
        %v2599 = vadd.f32 %v2595, 0.2548296
        %v2600 = vadd.f32 %v2596, 0.2548296
        %v2601 = vadd.f32 %v2597, 0.2548296
        %v2602 = vmul.f32 %v2563, %v2598
        %v2603 = vmul.f32 %v2565, %v2599
        %v2604 = vmul.f32 %v2567, %v2600
        %v2605 = vmul.f32 %v2569, %v2601
        %v2606 = vsub.f32 0.0, %v2550
        %v2607 = vsub.f32 0.0, %v2551
        %v2608 = vsub.f32 0.0, %v2552
        %v2609 = vsub.f32 0.0, %v2553
        %v2610 = vmul.f32 %v2606, %v2550
        %v2611 = vmul.f32 %v2607, %v2551
        %v2612 = vmul.f32 %v2608, %v2552
        %v2613 = vmul.f32 %v2609, %v2553
        %v2614 = vmul.f32 %v2610, 1.442695
        %v2615 = vpow.pop %v2614
        %v2616 = vmul.f32 %v2611, 1.442695
        %v2617 = vpow.pop %v2616
        %v2618 = vmul.f32 %v2612, 1.442695
        %v2619 = vpow.pop %v2618
        %v2620 = vmul.f32 %v2613, 1.442695
        %v2621 = vpow.pop %v2620
        %v2622 = vmul.f32 %v2602, %v2615
        %v2623 = vmul.f32 %v2603, %v2617
        %v2624 = vmul.f32 %v2604, %v2619
        %v2625 = vmul.f32 %v2605, %v2621
        %v2626 = vsub.f32 1.0, %v2622
        %v2627 = vsub.f32 1.0, %v2623
        %v2628 = vsub.f32 1.0, %v2624
        %v2629 = vsub.f32 1.0, %v2625
        %vm2630 = vcmp.lt.f32.partialorder %v2546, 0.0
        %vm2631 = vcmp.lt.f32.partialorder %v2547, 0.0
        %vm2632 = vcmp.lt.f32.partialorder %v2548, 0.0
        %vm2633 = vcmp.lt.f32.partialorder %v2549, 0.0
        %v2634 = vsub.f32 0.0, %v2626
        %v2635 = vsub.f32 0.0, %v2627
        %v2636 = vsub.f32 0.0, %v2628
        %v2637 = vsub.f32 0.0, %v2629
        %v2638 = vsel %vm2630, %v2634, %v2626
        %v2639 = vsel %vm2631, %v2635, %v2627
        %v2640 = vsel %vm2632, %v2636, %v2628
        %v2641 = vsel %vm2633, %v2637, %v2629
        %v2642 = vmul.f32 %v2528, 0.5
        %v2643 = vmul.f32 %v2533, 0.5
        %v2644 = vmul.f32 %v2538, 0.5
        %v2645 = vmul.f32 %v2543, 0.5
        %v2646 = vadd.f32 %v2638, 1.0
        %v2647 = vadd.f32 %v2639, 1.0
        %v2648 = vadd.f32 %v2640, 1.0
        %v2649 = vadd.f32 %v2641, 1.0
        %v2650 = vmul.f32 %v2642, %v2646
        %v2651 = vmul.f32 %v2643, %v2647
        %v2652 = vmul.f32 %v2644, %v2648
        %v2653 = vmul.f32 %v2645, %v2649
        %v2654 = vld [vmem:[%s4] sm:$0xff]
        %v2655 = vld [vmem:[%s4 + $0x8] sm:$0xff]
        %v2656 = vld [vmem:[%s4 + $0x10] sm:$0xff]
        %v2657 = vld [vmem:[%s4 + $0x18] sm:$0xff]
        %v2658 = vld [vmem:[%s4 + $0x20] sm:$0xff]
        %v2659 = vld [vmem:[%s4 + $0x28] sm:$0xff]
        %v2660 = vld [vmem:[%s4 + $0x30] sm:$0xff]
        %v2661 = vld [vmem:[%s4 + $0x38] sm:$0xff]
        %v2662 = vld [vmem:[%s4 + $0x40] sm:$0xff]
        %v2663 = vld [vmem:[%s4 + $0x48] sm:$0xff]
        %v2664 = vld [vmem:[%s4 + $0x50] sm:$0xff]
        %v2665 = vld [vmem:[%s4 + $0x58] sm:$0xff]
        %v2666 = vld [vmem:[%s4 + $0x60] sm:$0xff]
        %v2667 = vld [vmem:[%s4 + $0x68] sm:$0xff]
        %v2668 = vld [vmem:[%s4 + $0x70] sm:$0xff]
        %v2669 = vld [vmem:[%s4 + $0x78] sm:$0xff]
        %s2670 = scalar_lea.vmem %s5, 4
        %v2671 = vld [vmem:[%s2670] sm:$0x1]
        %v2673 = vlaneseq
        %v2674 = vshrl.u32 %v2673, 7
        %v2675 = vsub.s32 0, %v2674
        %v2676 = vrot.slane %v2671, %v2675
        %2678 = vmatprep.subr.mxu0 0.0
        %2679 = vmatpush1.msra.mxu0 %v2654
        %2680 = vmatprep.subr.mxu0 0.0
        %2681 = vmatpush1.msra.mxu0 %v2655
        %2682 = vmatprep.subr.mxu0 0.0
        %2683 = vmatpush1.msra.mxu0 %v2656
        %2684 = vmatprep.subr.mxu0 0.0
        %2685 = vmatpush1.msra.mxu0 %v2657
        %2686 = vmatprep.subr.mxu0 0.0
        %2687 = vmatpush1.msra.mxu0 %v2658
        %2688 = vmatprep.subr.mxu0 0.0
        %2689 = vmatpush1.msra.mxu0 %v2659
        %2690 = vmatprep.subr.mxu0 0.0
        %2691 = vmatpush1.msra.mxu0 %v2660
        %2692 = vmatprep.subr.mxu0 0.0
        %2693 = vmatpush1.msra.mxu0 %v2661
        %2694 = vmatprep.subr.mxu0 0.0
        %2695 = vmatpush1.msra.mxu0 %v2662
        %2696 = vmatprep.subr.mxu0 0.0
        %2697 = vmatpush1.msra.mxu0 %v2663
        %2698 = vmatprep.subr.mxu0 0.0
        %2699 = vmatpush1.msra.mxu0 %v2664
        %2700 = vmatprep.subr.mxu0 0.0
        %2701 = vmatpush1.msra.mxu0 %v2665
        %2702 = vmatprep.subr.mxu0 0.0
        %2703 = vmatpush1.msra.mxu0 %v2666
        %2704 = vmatprep.subr.mxu0 0.0
        %2705 = vmatpush1.msra.mxu0 %v2667
        %2706 = vmatprep.subr.mxu0 0.0
        %2707 = vmatpush1.msra.mxu0 %v2668
        %2708 = vmatprep.subr.mxu0 0.0
        %2709 = vmatpush1.msra.mxu0 %v2669
        %2710 = vmatprep.subr.mxu0 0.0
        %2711 = vmatpush1.msra.mxu0 0.0
        %2712 = vmatprep.subr.mxu0 0.0
        %2713 = vmatpush1.msra.mxu0 0.0
        %2714 = vmatprep.subr.mxu0 0.0
        %2715 = vmatpush1.msra.mxu0 0.0
        %2716 = vmatprep.subr.mxu0 0.0
        %2717 = vmatpush1.msra.mxu0 0.0
        %2718 = vmatprep.subr.mxu0 0.0
        %2719 = vmatpush1.msra.mxu0 0.0
        %2720 = vmatprep.subr.mxu0 0.0
        %2721 = vmatpush1.msra.mxu0 0.0
        %2722 = vmatprep.subr.mxu0 0.0
        %2723 = vmatpush1.msra.mxu0 0.0
        %2724 = vmatprep.subr.mxu0 0.0
        %2725 = vmatpush1.msra.mxu0 0.0
        %2726 = vmatprep.subr.mxu0 0.0
        %2727 = vmatpush1.msra.mxu0 0.0
        %2728 = vmatprep.subr.mxu0 0.0
        %2729 = vmatpush1.msra.mxu0 0.0
        %2730 = vmatprep.subr.mxu0 0.0
        %2731 = vmatpush1.msra.mxu0 0.0
        %2732 = vmatprep.subr.mxu0 0.0
        %2733 = vmatpush1.msra.mxu0 0.0
        %2734 = vmatprep.subr.mxu0 0.0
        %2735 = vmatpush1.msra.mxu0 0.0
        %2736 = vmatprep.subr.mxu0 0.0
        %2737 = vmatpush1.msra.mxu0 0.0
        %2738 = vmatprep.subr.mxu0 0.0
        %2739 = vmatpush1.msra.mxu0 0.0
        %2740 = vmatprep.subr.mxu0 0.0
        %2741 = vmatpush1.msra.mxu0 0.0
        %2742 = vmatprep.mubr.f32.mxu0 0.0
        %2743 = vmatmul.mubr.f32.gmra.mrb[0].mxu0 %v2650
        %v2744 = vpop.f32.mrb[0].mxu0
        %v2745 = vadd.f32 %v2676, %v2744
        %v2746 = vpop.f32.mrb[0].mxu0
        %2747 = vmatprep.mubr.f32.mxu0 0.0
        %2748 = vmatmul.mubr.f32.gmra.mrb[0].mxu0 %v2651
        %v2749 = vpop.f32.mrb[0].mxu0
        %v2750 = vadd.f32 %v2676, %v2749
        %v2751 = vpop.f32.mrb[0].mxu0
        %2752 = vmatprep.mubr.f32.mxu0 0.0
        %2753 = vmatmul.mubr.f32.gmra.mrb[0].mxu0 %v2652
        %v2754 = vpop.f32.mrb[0].mxu0
        %v2755 = vadd.f32 %v2676, %v2754
        %v2756 = vpop.f32.mrb[0].mxu0
        %2757 = vmatprep.mubr.f32.mxu0 0.0
        %2758 = vmatmul.mubr.f32.gmra.mrb[0].mxu0 %v2653
        %v2759 = vpop.f32.mrb[0].mxu0
        %v2760 = vadd.f32 %v2676, %v2759
        %v2761 = vpop.f32.mrb[0].mxu0
        %2762 = vdwg.mxu0
        %v2763 = vadd.f32 %v2358, %v2745
        %v2764 = vadd.f32 %v2359, %v2750
        %v2765 = vadd.f32 %v2360, %v2755
        %v2766 = vadd.f32 %v2361, %v2760
        %s2767 = scalar_lea.vmem %s5, 5
        %v2768 = vld [vmem:[%s2767] sm:$0x1]
        %s2769 = scalar_lea.vmem %s5, 6
        %v2770 = vld [vmem:[%s2769] sm:$0x1]
        %v2771 = vsel %vm314, %v2763, 0.0
        %2772 = vadd.xlane.f32.xlu0 %v2771
        %v2773 = vpop.xlane.xlu0 %2772
        %v2774 = vsel %vm314, %v2764, 0.0
        %2775 = vadd.xlane.f32.xlu0 %v2774
        %v2776 = vpop.xlane.xlu0 %2775
        %v2777 = vsel %vm314, %v2765, 0.0
        %2778 = vadd.xlane.f32.xlu0 %v2777
        %v2779 = vpop.xlane.xlu0 %2778
        %v2780 = vsel %vm314, %v2766, 0.0
        %2781 = vadd.xlane.f32.xlu0 %v2780
        %v2782 = vpop.xlane.xlu0 %2781
        %v2783 = vmul.f32 %v2773, %v327
        %v2784 = vmul.f32 %v2776, %v327
        %v2785 = vmul.f32 %v2779, %v327
        %v2786 = vmul.f32 %v2782, %v327
        %v2787 = vsub.f32 %v2763, %v2783
        %v2788 = vsub.f32 %v2764, %v2784
        %v2789 = vsub.f32 %v2765, %v2785
        %v2790 = vsub.f32 %v2766, %v2786
        %v2791 = vmul.f32 %v2787, %v2787
        %v2792 = vmul.f32 %v2788, %v2788
        %v2793 = vmul.f32 %v2789, %v2789
        %v2794 = vmul.f32 %v2790, %v2790
        %v2795 = vsel %vm314, %v2791, 0.0
        %2796 = vadd.xlane.f32.xlu0 %v2795
        %v2797 = vpop.xlane.xlu0 %2796
        %v2798 = vsel %vm314, %v2792, 0.0
        %2799 = vadd.xlane.f32.xlu0 %v2798
        %v2800 = vpop.xlane.xlu0 %2799
        %v2801 = vsel %vm314, %v2793, 0.0
        %2802 = vadd.xlane.f32.xlu0 %v2801
        %v2803 = vpop.xlane.xlu0 %2802
        %v2804 = vsel %vm314, %v2794, 0.0
        %2805 = vadd.xlane.f32.xlu0 %v2804
        %v2806 = vpop.xlane.xlu0 %2805
        %v2807 = vmul.f32 %v2797, %v327
        %v2808 = vmul.f32 %v2800, %v327
        %v2809 = vmul.f32 %v2803, %v327
        %v2810 = vmul.f32 %v2806, %v327
        %v2811 = vadd.f32 %v2807, 1e-05
        %v2812 = vadd.f32 %v2808, 1e-05
        %v2813 = vadd.f32 %v2809, 1e-05
        %v2814 = vadd.f32 %v2810, 1e-05
        %v2815 = vrsqrt.pop %v2811
        %v2816 = vrsqrt.pop %v2812
        %v2817 = vrsqrt.pop %v2813
        %v2818 = vrsqrt.pop %v2814
        %v2819 = vmul.f32 %v2787, %v2815
        %v2820 = vmul.f32 %v2788, %v2816
        %v2821 = vmul.f32 %v2789, %v2817
        %v2822 = vmul.f32 %v2790, %v2818
        %v2824 = vlaneseq
        %v2825 = vshrl.u32 %v2824, 7
        %v2826 = vsub.s32 0, %v2825
        %v2827 = vrot.slane %v2768, %v2826
        %v2829 = vmul.f32 %v2819, %v2827
        %v2830 = vmul.f32 %v2820, %v2827
        %v2831 = vmul.f32 %v2821, %v2827
        %v2832 = vmul.f32 %v2822, %v2827
        %v2834 = vlaneseq
        %v2835 = vshrl.u32 %v2834, 7
        %v2836 = vsub.s32 0, %v2835
        %v2837 = vrot.slane %v2770, %v2836
        %v2839 = vadd.f32 %v2829, %v2837
        %v2840 = vadd.f32 %v2830, %v2837
        %v2841 = vadd.f32 %v2831, %v2837
        %v2842 = vadd.f32 %v2832, %v2837
        %2843 = vxpose.xlu0.b32.start [1/16] %v2839, 128
        %2844 = vxpose.xlu0.b32.cont [2/16] 0.0, 128
        %2845 = vxpose.xlu0.b32.cont [3/16] 0.0, 128
        %2846 = vxpose.xlu0.b32.cont [4/16] 0.0, 128
        %2847 = vxpose.xlu0.b32.cont [5/16] 0.0, 128
        %2848 = vxpose.xlu0.b32.cont [6/16] 0.0, 128
        %2849 = vxpose.xlu0.b32.cont [7/16] 0.0, 128
        %2850 = vxpose.xlu0.b32.cont [8/16] 0.0, 128
        %2851 = vxpose.xlu0.b32.cont [9/16] 0.0, 128
        %2852 = vxpose.xlu0.b32.cont [10/16] 0.0, 128
        %2853 = vxpose.xlu0.b32.cont [11/16] 0.0, 128
        %2854 = vxpose.xlu0.b32.cont [12/16] 0.0, 128
        %2855 = vxpose.xlu0.b32.cont [13/16] 0.0, 128
        %2856 = vxpose.xlu0.b32.cont [14/16] 0.0, 128
        %2857 = vxpose.xlu0.b32.cont [15/16] 0.0, 128
        %2858 = vxpose.xlu0.b32.end [16/16] 0.0, 128
        %v2859 = vpop.trf.xlu0
        %v2860 = vpop.trf.xlu0
        %v2861 = vpop.trf.xlu0
        %v2862 = vpop.trf.xlu0
        %v2863 = vpop.trf.xlu0
        %v2864 = vpop.trf.xlu0
        %v2865 = vpop.trf.xlu0
        %v2866 = vpop.trf.xlu0
        %v2867 = vpop.trf.xlu0
        %v2868 = vpop.trf.xlu0
        %v2869 = vpop.trf.xlu0
        %v2870 = vpop.trf.xlu0
        %v2871 = vpop.trf.xlu0
        %v2872 = vpop.trf.xlu0
        %v2873 = vpop.trf.xlu0
        %v2874 = vpop.trf.xlu0
        %2875 = vxpose.xlu0.b32.start [1/16] %v2840, 128
        %2876 = vxpose.xlu0.b32.cont [2/16] 0.0, 128
        %2877 = vxpose.xlu0.b32.cont [3/16] 0.0, 128
        %2878 = vxpose.xlu0.b32.cont [4/16] 0.0, 128
        %2879 = vxpose.xlu0.b32.cont [5/16] 0.0, 128
        %2880 = vxpose.xlu0.b32.cont [6/16] 0.0, 128
        %2881 = vxpose.xlu0.b32.cont [7/16] 0.0, 128
        %2882 = vxpose.xlu0.b32.cont [8/16] 0.0, 128
        %2883 = vxpose.xlu0.b32.cont [9/16] 0.0, 128
        %2884 = vxpose.xlu0.b32.cont [10/16] 0.0, 128
        %2885 = vxpose.xlu0.b32.cont [11/16] 0.0, 128
        %2886 = vxpose.xlu0.b32.cont [12/16] 0.0, 128
        %2887 = vxpose.xlu0.b32.cont [13/16] 0.0, 128
        %2888 = vxpose.xlu0.b32.cont [14/16] 0.0, 128
        %2889 = vxpose.xlu0.b32.cont [15/16] 0.0, 128
        %2890 = vxpose.xlu0.b32.end [16/16] 0.0, 128
        %v2891 = vpop.trf.xlu0
        %v2892 = vpop.trf.xlu0
        %v2893 = vpop.trf.xlu0
        %v2894 = vpop.trf.xlu0
        %v2895 = vpop.trf.xlu0
        %v2896 = vpop.trf.xlu0
        %v2897 = vpop.trf.xlu0
        %v2898 = vpop.trf.xlu0
        %v2899 = vpop.trf.xlu0
        %v2900 = vpop.trf.xlu0
        %v2901 = vpop.trf.xlu0
        %v2902 = vpop.trf.xlu0
        %v2903 = vpop.trf.xlu0
        %v2904 = vpop.trf.xlu0
        %v2905 = vpop.trf.xlu0
        %v2906 = vpop.trf.xlu0
        %2907 = vxpose.xlu0.b32.start [1/16] %v2841, 128
        %2908 = vxpose.xlu0.b32.cont [2/16] 0.0, 128
        %2909 = vxpose.xlu0.b32.cont [3/16] 0.0, 128
        %2910 = vxpose.xlu0.b32.cont [4/16] 0.0, 128
        %2911 = vxpose.xlu0.b32.cont [5/16] 0.0, 128
        %2912 = vxpose.xlu0.b32.cont [6/16] 0.0, 128
        %2913 = vxpose.xlu0.b32.cont [7/16] 0.0, 128
        %2914 = vxpose.xlu0.b32.cont [8/16] 0.0, 128
        %2915 = vxpose.xlu0.b32.cont [9/16] 0.0, 128
        %2916 = vxpose.xlu0.b32.cont [10/16] 0.0, 128
        %2917 = vxpose.xlu0.b32.cont [11/16] 0.0, 128
        %2918 = vxpose.xlu0.b32.cont [12/16] 0.0, 128
        %2919 = vxpose.xlu0.b32.cont [13/16] 0.0, 128
        %2920 = vxpose.xlu0.b32.cont [14/16] 0.0, 128
        %2921 = vxpose.xlu0.b32.cont [15/16] 0.0, 128
        %2922 = vxpose.xlu0.b32.end [16/16] 0.0, 128
        %v2923 = vpop.trf.xlu0
        %v2924 = vpop.trf.xlu0
        %v2925 = vpop.trf.xlu0
        %v2926 = vpop.trf.xlu0
        %v2927 = vpop.trf.xlu0
        %v2928 = vpop.trf.xlu0
        %v2929 = vpop.trf.xlu0
        %v2930 = vpop.trf.xlu0
        %v2931 = vpop.trf.xlu0
        %v2932 = vpop.trf.xlu0
        %v2933 = vpop.trf.xlu0
        %v2934 = vpop.trf.xlu0
        %v2935 = vpop.trf.xlu0
        %v2936 = vpop.trf.xlu0
        %v2937 = vpop.trf.xlu0
        %v2938 = vpop.trf.xlu0
        %2939 = vxpose.xlu0.b32.start [1/16] %v2842, 128
        %2940 = vxpose.xlu0.b32.cont [2/16] 0.0, 128
        %2941 = vxpose.xlu0.b32.cont [3/16] 0.0, 128
        %2942 = vxpose.xlu0.b32.cont [4/16] 0.0, 128
        %2943 = vxpose.xlu0.b32.cont [5/16] 0.0, 128
        %2944 = vxpose.xlu0.b32.cont [6/16] 0.0, 128
        %2945 = vxpose.xlu0.b32.cont [7/16] 0.0, 128
        %2946 = vxpose.xlu0.b32.cont [8/16] 0.0, 128
        %2947 = vxpose.xlu0.b32.cont [9/16] 0.0, 128
        %2948 = vxpose.xlu0.b32.cont [10/16] 0.0, 128
        %2949 = vxpose.xlu0.b32.cont [11/16] 0.0, 128
        %2950 = vxpose.xlu0.b32.cont [12/16] 0.0, 128
        %2951 = vxpose.xlu0.b32.cont [13/16] 0.0, 128
        %2952 = vxpose.xlu0.b32.cont [14/16] 0.0, 128
        %2953 = vxpose.xlu0.b32.cont [15/16] 0.0, 128
        %2954 = vxpose.xlu0.b32.end [16/16] 0.0, 128
        %v2955 = vpop.trf.xlu0
        %v2956 = vpop.trf.xlu0
        %v2957 = vpop.trf.xlu0
        %v2958 = vpop.trf.xlu0
        %v2959 = vpop.trf.xlu0
        %v2960 = vpop.trf.xlu0
        %v2961 = vpop.trf.xlu0
        %v2962 = vpop.trf.xlu0
        %v2963 = vpop.trf.xlu0
        %v2964 = vpop.trf.xlu0
        %v2965 = vpop.trf.xlu0
        %v2966 = vpop.trf.xlu0
        %v2967 = vpop.trf.xlu0
        %v2968 = vpop.trf.xlu0
        %v2969 = vpop.trf.xlu0
        %v2970 = vpop.trf.xlu0
        %s2971 = scalar_lea.vmem %s1, 24
        %v2972 = vld [vmem:[%s2971] sm:$0xff]
        %s2973 = scalar_lea.vmem %s6, 4
        %v2974 = vld [vmem:[%s2973] sm:$0x1]
        %v2976 = vlaneseq
        %v2977 = vshrl.u32 %v2976, 7
        %v2978 = vsub.s32 0, %v2977
        %v2979 = vrot.slane %v2974, %v2978
        %v2982 = vsel %vm524, %v2859, 0
        %v2985 = vsel %vm524, %v2860, 0
        %v2988 = vsel %vm524, %v2861, 0
        %v2991 = vsel %vm524, %v2862, 0
        %v2994 = vsel %vm524, %v2891, 0
        %v2997 = vsel %vm524, %v2892, 0
        %v3000 = vsel %vm524, %v2893, 0
        %v3003 = vsel %vm524, %v2894, 0
        %v3006 = vsel %vm524, %v2923, 0
        %v3009 = vsel %vm524, %v2924, 0
        %v3012 = vsel %vm524, %v2925, 0
        %v3015 = vsel %vm524, %v2926, 0
        %v3018 = vsel %vm524, %v2955, 0
        %v3021 = vsel %vm524, %v2956, 0
        %v3024 = vsel %vm524, %v2957, 0
        %v3027 = vsel %vm524, %v2958, 0
        %3029 = vmatprep.subr.mxu0 0.0
        %3030 = vmatpush1.msra.mxu0 %v2972
        %3031 = vmatprep.subr.mxu0 0.0
        %3032 = vmatpush1.msra.mxu0 0.0
        %3033 = vmatprep.subr.mxu0 0.0
        %3034 = vmatpush1.msra.mxu0 0.0
        %3035 = vmatprep.subr.mxu0 0.0
        %3036 = vmatpush1.msra.mxu0 0.0
        %3037 = vmatprep.subr.mxu0 0.0
        %3038 = vmatpush1.msra.mxu0 0.0
        %3039 = vmatprep.subr.mxu0 0.0
        %3040 = vmatpush1.msra.mxu0 0.0
        %3041 = vmatprep.subr.mxu0 0.0
        %3042 = vmatpush1.msra.mxu0 0.0
        %3043 = vmatprep.subr.mxu0 0.0
        %3044 = vmatpush1.msra.mxu0 0.0
        %3045 = vmatprep.subr.mxu0 0.0
        %3046 = vmatpush1.msra.mxu0 0.0
        %3047 = vmatprep.subr.mxu0 0.0
        %3048 = vmatpush1.msra.mxu0 0.0
        %3049 = vmatprep.subr.mxu0 0.0
        %3050 = vmatpush1.msra.mxu0 0.0
        %3051 = vmatprep.subr.mxu0 0.0
        %3052 = vmatpush1.msra.mxu0 0.0
        %3053 = vmatprep.subr.mxu0 0.0
        %3054 = vmatpush1.msra.mxu0 0.0
        %3055 = vmatprep.subr.mxu0 0.0
        %3056 = vmatpush1.msra.mxu0 0.0
        %3057 = vmatprep.subr.mxu0 0.0
        %3058 = vmatpush1.msra.mxu0 0.0
        %3059 = vmatprep.subr.mxu0 0.0
        %3060 = vmatpush1.msra.mxu0 0.0
        %3061 = vmatprep.subr.mxu0 0.0
        %3062 = vmatpush1.msra.mxu0 0.0
        %3063 = vmatprep.subr.mxu0 0.0
        %3064 = vmatpush1.msra.mxu0 0.0
        %3065 = vmatprep.subr.mxu0 0.0
        %3066 = vmatpush1.msra.mxu0 0.0
        %3067 = vmatprep.subr.mxu0 0.0
        %3068 = vmatpush1.msra.mxu0 0.0
        %3069 = vmatprep.subr.mxu0 0.0
        %3070 = vmatpush1.msra.mxu0 0.0
        %3071 = vmatprep.subr.mxu0 0.0
        %3072 = vmatpush1.msra.mxu0 0.0
        %3073 = vmatprep.subr.mxu0 0.0
        %3074 = vmatpush1.msra.mxu0 0.0
        %3075 = vmatprep.subr.mxu0 0.0
        %3076 = vmatpush1.msra.mxu0 0.0
        %3077 = vmatprep.subr.mxu0 0.0
        %3078 = vmatpush1.msra.mxu0 0.0
        %3079 = vmatprep.subr.mxu0 0.0
        %3080 = vmatpush1.msra.mxu0 0.0
        %3081 = vmatprep.subr.mxu0 0.0
        %3082 = vmatpush1.msra.mxu0 0.0
        %3083 = vmatprep.subr.mxu0 0.0
        %3084 = vmatpush1.msra.mxu0 0.0
        %3085 = vmatprep.subr.mxu0 0.0
        %3086 = vmatpush1.msra.mxu0 0.0
        %3087 = vmatprep.subr.mxu0 0.0
        %3088 = vmatpush1.msra.mxu0 0.0
        %3089 = vmatprep.subr.mxu0 0.0
        %3090 = vmatpush1.msra.mxu0 0.0
        %3091 = vmatprep.subr.mxu0 0.0
        %3092 = vmatpush1.msra.mxu0 0.0
        %3093 = vmatprep.mubr.f32.mxu0 0.0
        %3094 = vmatmul.mubr.f32.gmra.mrb[0].mxu0 %v2982
        %v3095 = vpop.f32.mrb[0].mxu0
        %v3096 = vadd.f32 %v2979, %v3095
        %v3097 = vpop.f32.mrb[0].mxu0
        %3098 = vmatprep.mubr.f32.mxu0 0.0
        %3099 = vmatmul.mubr.f32.gmra.mrb[0].mxu0 %v2985
        %v3100 = vpop.f32.mrb[0].mxu0
        %v3101 = vadd.f32 %v2979, %v3100
        %v3102 = vpop.f32.mrb[0].mxu0
        %3103 = vmatprep.mubr.f32.mxu0 0.0
        %3104 = vmatmul.mubr.f32.gmra.mrb[0].mxu0 %v2988
        %v3105 = vpop.f32.mrb[0].mxu0
        %v3106 = vadd.f32 %v2979, %v3105
        %v3107 = vpop.f32.mrb[0].mxu0
        %3108 = vmatprep.mubr.f32.mxu0 0.0
        %3109 = vmatmul.mubr.f32.gmra.mrb[0].mxu0 %v2991
        %v3110 = vpop.f32.mrb[0].mxu0
        %v3111 = vadd.f32 %v2979, %v3110
        %v3112 = vpop.f32.mrb[0].mxu0
        %3113 = vmatprep.mubr.f32.mxu0 0.0
        %3114 = vmatmul.mubr.f32.gmra.mrb[0].mxu0 %v2994
        %v3115 = vpop.f32.mrb[0].mxu0
        %v3116 = vadd.f32 %v2979, %v3115
        %v3117 = vpop.f32.mrb[0].mxu0
        %3118 = vmatprep.mubr.f32.mxu0 0.0
        %3119 = vmatmul.mubr.f32.gmra.mrb[0].mxu0 %v2997
        %v3120 = vpop.f32.mrb[0].mxu0
        %v3121 = vadd.f32 %v2979, %v3120
        %v3122 = vpop.f32.mrb[0].mxu0
        %3123 = vmatprep.mubr.f32.mxu0 0.0
        %3124 = vmatmul.mubr.f32.gmra.mrb[0].mxu0 %v3000
        %v3125 = vpop.f32.mrb[0].mxu0
        %v3126 = vadd.f32 %v2979, %v3125
        %v3127 = vpop.f32.mrb[0].mxu0
        %3128 = vmatprep.mubr.f32.mxu0 0.0
        %3129 = vmatmul.mubr.f32.gmra.mrb[0].mxu0 %v3003
        %v3130 = vpop.f32.mrb[0].mxu0
        %v3131 = vadd.f32 %v2979, %v3130
        %v3132 = vpop.f32.mrb[0].mxu0
        %3133 = vmatprep.mubr.f32.mxu0 0.0
        %3134 = vmatmul.mubr.f32.gmra.mrb[0].mxu0 %v3006
        %v3135 = vpop.f32.mrb[0].mxu0
        %v3136 = vadd.f32 %v2979, %v3135
        %v3137 = vpop.f32.mrb[0].mxu0
        %3138 = vmatprep.mubr.f32.mxu0 0.0
        %3139 = vmatmul.mubr.f32.gmra.mrb[0].mxu0 %v3009
        %v3140 = vpop.f32.mrb[0].mxu0
        %v3141 = vadd.f32 %v2979, %v3140
        %v3142 = vpop.f32.mrb[0].mxu0
        %3143 = vmatprep.mubr.f32.mxu0 0.0
        %3144 = vmatmul.mubr.f32.gmra.mrb[0].mxu0 %v3012
        %v3145 = vpop.f32.mrb[0].mxu0
        %v3146 = vadd.f32 %v2979, %v3145
        %v3147 = vpop.f32.mrb[0].mxu0
        %3148 = vmatprep.mubr.f32.mxu0 0.0
        %3149 = vmatmul.mubr.f32.gmra.mrb[0].mxu0 %v3015
        %v3150 = vpop.f32.mrb[0].mxu0
        %v3151 = vadd.f32 %v2979, %v3150
        %v3152 = vpop.f32.mrb[0].mxu0
        %3153 = vmatprep.mubr.f32.mxu0 0.0
        %3154 = vmatmul.mubr.f32.gmra.mrb[0].mxu0 %v3018
        %v3155 = vpop.f32.mrb[0].mxu0
        %v3156 = vadd.f32 %v2979, %v3155
        %v3157 = vpop.f32.mrb[0].mxu0
        %3158 = vmatprep.mubr.f32.mxu0 0.0
        %3159 = vmatmul.mubr.f32.gmra.mrb[0].mxu0 %v3021
        %v3160 = vpop.f32.mrb[0].mxu0
        %v3161 = vadd.f32 %v2979, %v3160
        %v3162 = vpop.f32.mrb[0].mxu0
        %3163 = vmatprep.mubr.f32.mxu0 0.0
        %3164 = vmatmul.mubr.f32.gmra.mrb[0].mxu0 %v3024
        %v3165 = vpop.f32.mrb[0].mxu0
        %v3166 = vadd.f32 %v2979, %v3165
        %v3167 = vpop.f32.mrb[0].mxu0
        %3168 = vmatprep.mubr.f32.mxu0 0.0
        %3169 = vmatmul.mubr.f32.gmra.mrb[0].mxu0 %v3027
        %v3170 = vpop.f32.mrb[0].mxu0
        %v3171 = vadd.f32 %v2979, %v3170
        %v3172 = vpop.f32.mrb[0].mxu0
        %3173 = vdwg.mxu0
        %s3174 = scalar_lea.vmem %s1, 32
        %v3175 = vld [vmem:[%s3174] sm:$0xff]
        %s3176 = scalar_lea.vmem %s6, 5
        %v3177 = vld [vmem:[%s3176] sm:$0x1]
        %v3179 = vlaneseq
        %v3180 = vshrl.u32 %v3179, 7
        %v3181 = vsub.s32 0, %v3180
        %v3182 = vrot.slane %v3177, %v3181
        %3184 = vmatprep.subr.mxu0 0.0
        %3185 = vmatpush1.msra.mxu0 %v3175
        %3186 = vmatprep.subr.mxu0 0.0
        %3187 = vmatpush1.msra.mxu0 0.0
        %3188 = vmatprep.subr.mxu0 0.0
        %3189 = vmatpush1.msra.mxu0 0.0
        %3190 = vmatprep.subr.mxu0 0.0
        %3191 = vmatpush1.msra.mxu0 0.0
        %3192 = vmatprep.subr.mxu0 0.0
        %3193 = vmatpush1.msra.mxu0 0.0
        %3194 = vmatprep.subr.mxu0 0.0
        %3195 = vmatpush1.msra.mxu0 0.0
        %3196 = vmatprep.subr.mxu0 0.0
        %3197 = vmatpush1.msra.mxu0 0.0
        %3198 = vmatprep.subr.mxu0 0.0
        %3199 = vmatpush1.msra.mxu0 0.0
        %3200 = vmatprep.subr.mxu0 0.0
        %3201 = vmatpush1.msra.mxu0 0.0
        %3202 = vmatprep.subr.mxu0 0.0
        %3203 = vmatpush1.msra.mxu0 0.0
        %3204 = vmatprep.subr.mxu0 0.0
        %3205 = vmatpush1.msra.mxu0 0.0
        %3206 = vmatprep.subr.mxu0 0.0
        %3207 = vmatpush1.msra.mxu0 0.0
        %3208 = vmatprep.subr.mxu0 0.0
        %3209 = vmatpush1.msra.mxu0 0.0
        %3210 = vmatprep.subr.mxu0 0.0
        %3211 = vmatpush1.msra.mxu0 0.0
        %3212 = vmatprep.subr.mxu0 0.0
        %3213 = vmatpush1.msra.mxu0 0.0
        %3214 = vmatprep.subr.mxu0 0.0
        %3215 = vmatpush1.msra.mxu0 0.0
        %3216 = vmatprep.subr.mxu0 0.0
        %3217 = vmatpush1.msra.mxu0 0.0
        %3218 = vmatprep.subr.mxu0 0.0
        %3219 = vmatpush1.msra.mxu0 0.0
        %3220 = vmatprep.subr.mxu0 0.0
        %3221 = vmatpush1.msra.mxu0 0.0
        %3222 = vmatprep.subr.mxu0 0.0
        %3223 = vmatpush1.msra.mxu0 0.0
        %3224 = vmatprep.subr.mxu0 0.0
        %3225 = vmatpush1.msra.mxu0 0.0
        %3226 = vmatprep.subr.mxu0 0.0
        %3227 = vmatpush1.msra.mxu0 0.0
        %3228 = vmatprep.subr.mxu0 0.0
        %3229 = vmatpush1.msra.mxu0 0.0
        %3230 = vmatprep.subr.mxu0 0.0
        %3231 = vmatpush1.msra.mxu0 0.0
        %3232 = vmatprep.subr.mxu0 0.0
        %3233 = vmatpush1.msra.mxu0 0.0
        %3234 = vmatprep.subr.mxu0 0.0
        %3235 = vmatpush1.msra.mxu0 0.0
        %3236 = vmatprep.subr.mxu0 0.0
        %3237 = vmatpush1.msra.mxu0 0.0
        %3238 = vmatprep.subr.mxu0 0.0
        %3239 = vmatpush1.msra.mxu0 0.0
        %3240 = vmatprep.subr.mxu0 0.0
        %3241 = vmatpush1.msra.mxu0 0.0
        %3242 = vmatprep.subr.mxu0 0.0
        %3243 = vmatpush1.msra.mxu0 0.0
        %3244 = vmatprep.subr.mxu0 0.0
        %3245 = vmatpush1.msra.mxu0 0.0
        %3246 = vmatprep.subr.mxu0 0.0
        %3247 = vmatpush1.msra.mxu0 0.0
        %3248 = vmatprep.mubr.f32.mxu0 0.0
        %3249 = vmatmul.mubr.f32.gmra.mrb[0].mxu0 %v2982
        %v3250 = vpop.f32.mrb[0].mxu0
        %v3251 = vadd.f32 %v3182, %v3250
        %v3252 = vpop.f32.mrb[0].mxu0
        %3253 = vmatprep.mubr.f32.mxu0 0.0
        %3254 = vmatmul.mubr.f32.gmra.mrb[0].mxu0 %v2985
        %v3255 = vpop.f32.mrb[0].mxu0
        %v3256 = vadd.f32 %v3182, %v3255
        %v3257 = vpop.f32.mrb[0].mxu0
        %3258 = vmatprep.mubr.f32.mxu0 0.0
        %3259 = vmatmul.mubr.f32.gmra.mrb[0].mxu0 %v2988
        %v3260 = vpop.f32.mrb[0].mxu0
        %v3261 = vadd.f32 %v3182, %v3260
        %v3262 = vpop.f32.mrb[0].mxu0
        %3263 = vmatprep.mubr.f32.mxu0 0.0
        %3264 = vmatmul.mubr.f32.gmra.mrb[0].mxu0 %v2991
        %v3265 = vpop.f32.mrb[0].mxu0
        %v3266 = vadd.f32 %v3182, %v3265
        %v3267 = vpop.f32.mrb[0].mxu0
        %3268 = vmatprep.mubr.f32.mxu0 0.0
        %3269 = vmatmul.mubr.f32.gmra.mrb[0].mxu0 %v2994
        %v3270 = vpop.f32.mrb[0].mxu0
        %v3271 = vadd.f32 %v3182, %v3270
        %v3272 = vpop.f32.mrb[0].mxu0
        %3273 = vmatprep.mubr.f32.mxu0 0.0
        %3274 = vmatmul.mubr.f32.gmra.mrb[0].mxu0 %v2997
        %v3275 = vpop.f32.mrb[0].mxu0
        %v3276 = vadd.f32 %v3182, %v3275
        %v3277 = vpop.f32.mrb[0].mxu0
        %3278 = vmatprep.mubr.f32.mxu0 0.0
        %3279 = vmatmul.mubr.f32.gmra.mrb[0].mxu0 %v3000
        %v3280 = vpop.f32.mrb[0].mxu0
        %v3281 = vadd.f32 %v3182, %v3280
        %v3282 = vpop.f32.mrb[0].mxu0
        %3283 = vmatprep.mubr.f32.mxu0 0.0
        %3284 = vmatmul.mubr.f32.gmra.mrb[0].mxu0 %v3003
        %v3285 = vpop.f32.mrb[0].mxu0
        %v3286 = vadd.f32 %v3182, %v3285
        %v3287 = vpop.f32.mrb[0].mxu0
        %3288 = vmatprep.mubr.f32.mxu0 0.0
        %3289 = vmatmul.mubr.f32.gmra.mrb[0].mxu0 %v3006
        %v3290 = vpop.f32.mrb[0].mxu0
        %v3291 = vadd.f32 %v3182, %v3290
        %v3292 = vpop.f32.mrb[0].mxu0
        %3293 = vmatprep.mubr.f32.mxu0 0.0
        %3294 = vmatmul.mubr.f32.gmra.mrb[0].mxu0 %v3009
        %v3295 = vpop.f32.mrb[0].mxu0
        %v3296 = vadd.f32 %v3182, %v3295
        %v3297 = vpop.f32.mrb[0].mxu0
        %3298 = vmatprep.mubr.f32.mxu0 0.0
        %3299 = vmatmul.mubr.f32.gmra.mrb[0].mxu0 %v3012
        %v3300 = vpop.f32.mrb[0].mxu0
        %v3301 = vadd.f32 %v3182, %v3300
        %v3302 = vpop.f32.mrb[0].mxu0
        %3303 = vmatprep.mubr.f32.mxu0 0.0
        %3304 = vmatmul.mubr.f32.gmra.mrb[0].mxu0 %v3015
        %v3305 = vpop.f32.mrb[0].mxu0
        %v3306 = vadd.f32 %v3182, %v3305
        %v3307 = vpop.f32.mrb[0].mxu0
        %3308 = vmatprep.mubr.f32.mxu0 0.0
        %3309 = vmatmul.mubr.f32.gmra.mrb[0].mxu0 %v3018
        %v3310 = vpop.f32.mrb[0].mxu0
        %v3311 = vadd.f32 %v3182, %v3310
        %v3312 = vpop.f32.mrb[0].mxu0
        %3313 = vmatprep.mubr.f32.mxu0 0.0
        %3314 = vmatmul.mubr.f32.gmra.mrb[0].mxu0 %v3021
        %v3315 = vpop.f32.mrb[0].mxu0
        %v3316 = vadd.f32 %v3182, %v3315
        %v3317 = vpop.f32.mrb[0].mxu0
        %3318 = vmatprep.mubr.f32.mxu0 0.0
        %3319 = vmatmul.mubr.f32.gmra.mrb[0].mxu0 %v3024
        %v3320 = vpop.f32.mrb[0].mxu0
        %v3321 = vadd.f32 %v3182, %v3320
        %v3322 = vpop.f32.mrb[0].mxu0
        %3323 = vmatprep.mubr.f32.mxu0 0.0
        %3324 = vmatmul.mubr.f32.gmra.mrb[0].mxu0 %v3027
        %v3325 = vpop.f32.mrb[0].mxu0
        %v3326 = vadd.f32 %v3182, %v3325
        %v3327 = vpop.f32.mrb[0].mxu0
        %3328 = vdwg.mxu0
        %s3329 = scalar_lea.vmem %s1, 40
        %v3330 = vld [vmem:[%s3329] sm:$0xff]
        %s3331 = scalar_lea.vmem %s6, 6
        %v3332 = vld [vmem:[%s3331] sm:$0x1]
        %v3334 = vlaneseq
        %v3335 = vshrl.u32 %v3334, 7
        %v3336 = vsub.s32 0, %v3335
        %v3337 = vrot.slane %v3332, %v3336
        %3339 = vmatprep.subr.mxu0 0.0
        %3340 = vmatpush1.msra.mxu0 %v3330
        %3341 = vmatprep.subr.mxu0 0.0
        %3342 = vmatpush1.msra.mxu0 0.0
        %3343 = vmatprep.subr.mxu0 0.0
        %3344 = vmatpush1.msra.mxu0 0.0
        %3345 = vmatprep.subr.mxu0 0.0
        %3346 = vmatpush1.msra.mxu0 0.0
        %3347 = vmatprep.subr.mxu0 0.0
        %3348 = vmatpush1.msra.mxu0 0.0
        %3349 = vmatprep.subr.mxu0 0.0
        %3350 = vmatpush1.msra.mxu0 0.0
        %3351 = vmatprep.subr.mxu0 0.0
        %3352 = vmatpush1.msra.mxu0 0.0
        %3353 = vmatprep.subr.mxu0 0.0
        %3354 = vmatpush1.msra.mxu0 0.0
        %3355 = vmatprep.subr.mxu0 0.0
        %3356 = vmatpush1.msra.mxu0 0.0
        %3357 = vmatprep.subr.mxu0 0.0
        %3358 = vmatpush1.msra.mxu0 0.0
        %3359 = vmatprep.subr.mxu0 0.0
        %3360 = vmatpush1.msra.mxu0 0.0
        %3361 = vmatprep.subr.mxu0 0.0
        %3362 = vmatpush1.msra.mxu0 0.0
        %3363 = vmatprep.subr.mxu0 0.0
        %3364 = vmatpush1.msra.mxu0 0.0
        %3365 = vmatprep.subr.mxu0 0.0
        %3366 = vmatpush1.msra.mxu0 0.0
        %3367 = vmatprep.subr.mxu0 0.0
        %3368 = vmatpush1.msra.mxu0 0.0
        %3369 = vmatprep.subr.mxu0 0.0
        %3370 = vmatpush1.msra.mxu0 0.0
        %3371 = vmatprep.subr.mxu0 0.0
        %3372 = vmatpush1.msra.mxu0 0.0
        %3373 = vmatprep.subr.mxu0 0.0
        %3374 = vmatpush1.msra.mxu0 0.0
        %3375 = vmatprep.subr.mxu0 0.0
        %3376 = vmatpush1.msra.mxu0 0.0
        %3377 = vmatprep.subr.mxu0 0.0
        %3378 = vmatpush1.msra.mxu0 0.0
        %3379 = vmatprep.subr.mxu0 0.0
        %3380 = vmatpush1.msra.mxu0 0.0
        %3381 = vmatprep.subr.mxu0 0.0
        %3382 = vmatpush1.msra.mxu0 0.0
        %3383 = vmatprep.subr.mxu0 0.0
        %3384 = vmatpush1.msra.mxu0 0.0
        %3385 = vmatprep.subr.mxu0 0.0
        %3386 = vmatpush1.msra.mxu0 0.0
        %3387 = vmatprep.subr.mxu0 0.0
        %3388 = vmatpush1.msra.mxu0 0.0
        %3389 = vmatprep.subr.mxu0 0.0
        %3390 = vmatpush1.msra.mxu0 0.0
        %3391 = vmatprep.subr.mxu0 0.0
        %3392 = vmatpush1.msra.mxu0 0.0
        %3393 = vmatprep.subr.mxu0 0.0
        %3394 = vmatpush1.msra.mxu0 0.0
        %3395 = vmatprep.subr.mxu0 0.0
        %3396 = vmatpush1.msra.mxu0 0.0
        %3397 = vmatprep.subr.mxu0 0.0
        %3398 = vmatpush1.msra.mxu0 0.0
        %3399 = vmatprep.subr.mxu0 0.0
        %3400 = vmatpush1.msra.mxu0 0.0
        %3401 = vmatprep.subr.mxu0 0.0
        %3402 = vmatpush1.msra.mxu0 0.0
        %3403 = vmatprep.mubr.f32.mxu0 0.0
        %3404 = vmatmul.mubr.f32.gmra.mrb[0].mxu0 %v2982
        %v3405 = vpop.f32.mrb[0].mxu0
        %v3406 = vadd.f32 %v3337, %v3405
        %v3407 = vpop.f32.mrb[0].mxu0
        %3408 = vmatprep.mubr.f32.mxu0 0.0
        %3409 = vmatmul.mubr.f32.gmra.mrb[0].mxu0 %v2985
        %v3410 = vpop.f32.mrb[0].mxu0
        %v3411 = vadd.f32 %v3337, %v3410
        %v3412 = vpop.f32.mrb[0].mxu0
        %3413 = vmatprep.mubr.f32.mxu0 0.0
        %3414 = vmatmul.mubr.f32.gmra.mrb[0].mxu0 %v2988
        %v3415 = vpop.f32.mrb[0].mxu0
        %v3416 = vadd.f32 %v3337, %v3415
        %v3417 = vpop.f32.mrb[0].mxu0
        %3418 = vmatprep.mubr.f32.mxu0 0.0
        %3419 = vmatmul.mubr.f32.gmra.mrb[0].mxu0 %v2991
        %v3420 = vpop.f32.mrb[0].mxu0
        %v3421 = vadd.f32 %v3337, %v3420
        %v3422 = vpop.f32.mrb[0].mxu0
        %3423 = vmatprep.mubr.f32.mxu0 0.0
        %3424 = vmatmul.mubr.f32.gmra.mrb[0].mxu0 %v2994
        %v3425 = vpop.f32.mrb[0].mxu0
        %v3426 = vadd.f32 %v3337, %v3425
        %v3427 = vpop.f32.mrb[0].mxu0
        %3428 = vmatprep.mubr.f32.mxu0 0.0
        %3429 = vmatmul.mubr.f32.gmra.mrb[0].mxu0 %v2997
        %v3430 = vpop.f32.mrb[0].mxu0
        %v3431 = vadd.f32 %v3337, %v3430
        %v3432 = vpop.f32.mrb[0].mxu0
        %3433 = vmatprep.mubr.f32.mxu0 0.0
        %3434 = vmatmul.mubr.f32.gmra.mrb[0].mxu0 %v3000
        %v3435 = vpop.f32.mrb[0].mxu0
        %v3436 = vadd.f32 %v3337, %v3435
        %v3437 = vpop.f32.mrb[0].mxu0
        %3438 = vmatprep.mubr.f32.mxu0 0.0
        %3439 = vmatmul.mubr.f32.gmra.mrb[0].mxu0 %v3003
        %v3440 = vpop.f32.mrb[0].mxu0
        %v3441 = vadd.f32 %v3337, %v3440
        %v3442 = vpop.f32.mrb[0].mxu0
        %3443 = vmatprep.mubr.f32.mxu0 0.0
        %3444 = vmatmul.mubr.f32.gmra.mrb[0].mxu0 %v3006
        %v3445 = vpop.f32.mrb[0].mxu0
        %v3446 = vadd.f32 %v3337, %v3445
        %v3447 = vpop.f32.mrb[0].mxu0
        %3448 = vmatprep.mubr.f32.mxu0 0.0
        %3449 = vmatmul.mubr.f32.gmra.mrb[0].mxu0 %v3009
        %v3450 = vpop.f32.mrb[0].mxu0
        %v3451 = vadd.f32 %v3337, %v3450
        %v3452 = vpop.f32.mrb[0].mxu0
        %3453 = vmatprep.mubr.f32.mxu0 0.0
        %3454 = vmatmul.mubr.f32.gmra.mrb[0].mxu0 %v3012
        %v3455 = vpop.f32.mrb[0].mxu0
        %v3456 = vadd.f32 %v3337, %v3455
        %v3457 = vpop.f32.mrb[0].mxu0
        %3458 = vmatprep.mubr.f32.mxu0 0.0
        %3459 = vmatmul.mubr.f32.gmra.mrb[0].mxu0 %v3015
        %v3460 = vpop.f32.mrb[0].mxu0
        %v3461 = vadd.f32 %v3337, %v3460
        %v3462 = vpop.f32.mrb[0].mxu0
        %3463 = vmatprep.mubr.f32.mxu0 0.0
        %3464 = vmatmul.mubr.f32.gmra.mrb[0].mxu0 %v3018
        %v3465 = vpop.f32.mrb[0].mxu0
        %v3466 = vadd.f32 %v3337, %v3465
        %v3467 = vpop.f32.mrb[0].mxu0
        %3468 = vmatprep.mubr.f32.mxu0 0.0
        %3469 = vmatmul.mubr.f32.gmra.mrb[0].mxu0 %v3021
        %v3470 = vpop.f32.mrb[0].mxu0
        %v3471 = vadd.f32 %v3337, %v3470
        %v3472 = vpop.f32.mrb[0].mxu0
        %3473 = vmatprep.mubr.f32.mxu0 0.0
        %3474 = vmatmul.mubr.f32.gmra.mrb[0].mxu0 %v3024
        %v3475 = vpop.f32.mrb[0].mxu0
        %v3476 = vadd.f32 %v3337, %v3475
        %v3477 = vpop.f32.mrb[0].mxu0
        %3478 = vmatprep.mubr.f32.mxu0 0.0
        %3479 = vmatmul.mubr.f32.gmra.mrb[0].mxu0 %v3027
        %v3480 = vpop.f32.mrb[0].mxu0
        %v3481 = vadd.f32 %v3337, %v3480
        %v3482 = vpop.f32.mrb[0].mxu0
        %3483 = vdwg.mxu0
        %v3485 = vsel %vm524, %v3096, 0
        %v3488 = vsel %vm524, %v3101, 0
        %v3491 = vsel %vm524, %v3106, 0
        %v3494 = vsel %vm524, %v3111, 0
        %v3497 = vsel %vm524, %v3251, 0
        %v3500 = vsel %vm524, %v3256, 0
        %v3503 = vsel %vm524, %v3261, 0
        %v3506 = vsel %vm524, %v3266, 0
        %3508 = vmatprep.subr.mxu0 0.0
        %3509 = vmatpush1.xpose.msra.mxu0 %v3497
        %3510 = vmatprep.subr.mxu0 0.0
        %3511 = vmatpush1.xpose.msra.mxu0 %v3500
        %3512 = vmatprep.subr.mxu0 0.0
        %3513 = vmatpush1.xpose.msra.mxu0 %v3503
        %3514 = vmatprep.subr.mxu0 0.0
        %3515 = vmatpush1.xpose.msra.mxu0 %v3506
        %3516 = vmatprep.subr.mxu0 0.0
        %3517 = vmatpush1.xpose.msra.mxu0 0.0
        %3518 = vmatprep.subr.mxu0 0.0
        %3519 = vmatpush1.xpose.msra.mxu0 0.0
        %3520 = vmatprep.subr.mxu0 0.0
        %3521 = vmatpush1.xpose.msra.mxu0 0.0
        %3522 = vmatprep.subr.mxu0 0.0
        %3523 = vmatpush1.xpose.msra.mxu0 0.0
        %3524 = vmatprep.subr.mxu0 0.0
        %3525 = vmatpush1.xpose.msra.mxu0 0.0
        %3526 = vmatprep.subr.mxu0 0.0
        %3527 = vmatpush1.xpose.msra.mxu0 0.0
        %3528 = vmatprep.subr.mxu0 0.0
        %3529 = vmatpush1.xpose.msra.mxu0 0.0
        %3530 = vmatprep.subr.mxu0 0.0
        %3531 = vmatpush1.xpose.msra.mxu0 0.0
        %3532 = vmatprep.subr.mxu0 0.0
        %3533 = vmatpush1.xpose.msra.mxu0 0.0
        %3534 = vmatprep.subr.mxu0 0.0
        %3535 = vmatpush1.xpose.msra.mxu0 0.0
        %3536 = vmatprep.subr.mxu0 0.0
        %3537 = vmatpush1.xpose.msra.mxu0 0.0
        %3538 = vmatprep.subr.mxu0 0.0
        %3539 = vmatpush1.xpose.msra.mxu0 0.0
        %3540 = vmatprep.subr.mxu0 0.0
        %3541 = vmatpush1.xpose.msra.mxu0 0.0
        %3542 = vmatprep.subr.mxu0 0.0
        %3543 = vmatpush1.xpose.msra.mxu0 0.0
        %3544 = vmatprep.subr.mxu0 0.0
        %3545 = vmatpush1.xpose.msra.mxu0 0.0
        %3546 = vmatprep.subr.mxu0 0.0
        %3547 = vmatpush1.xpose.msra.mxu0 0.0
        %3548 = vmatprep.subr.mxu0 0.0
        %3549 = vmatpush1.xpose.msra.mxu0 0.0
        %3550 = vmatprep.subr.mxu0 0.0
        %3551 = vmatpush1.xpose.msra.mxu0 0.0
        %3552 = vmatprep.subr.mxu0 0.0
        %3553 = vmatpush1.xpose.msra.mxu0 0.0
        %3554 = vmatprep.subr.mxu0 0.0
        %3555 = vmatpush1.xpose.msra.mxu0 0.0
        %3556 = vmatprep.subr.mxu0 0.0
        %3557 = vmatpush1.xpose.msra.mxu0 0.0
        %3558 = vmatprep.subr.mxu0 0.0
        %3559 = vmatpush1.xpose.msra.mxu0 0.0
        %3560 = vmatprep.subr.mxu0 0.0
        %3561 = vmatpush1.xpose.msra.mxu0 0.0
        %3562 = vmatprep.subr.mxu0 0.0
        %3563 = vmatpush1.xpose.msra.mxu0 0.0
        %3564 = vmatprep.subr.mxu0 0.0
        %3565 = vmatpush1.xpose.msra.mxu0 0.0
        %3566 = vmatprep.subr.mxu0 0.0
        %3567 = vmatpush1.xpose.msra.mxu0 0.0
        %3568 = vmatprep.subr.mxu0 0.0
        %3569 = vmatpush1.xpose.msra.mxu0 0.0
        %3570 = vmatprep.subr.mxu0 0.0
        %3571 = vmatpush1.xpose.msra.mxu0 0.0
        %3572 = vmatprep.mubr.f32.mxu0 0.0
        %3573 = vmatmul.mubr.f32.gmra.mrb[0].mxu0 %v3485
        %v3574 = vpop.f32.mrb[0].mxu0
        %v3575 = vadd.f32 0.0, %v3574
        %v3576 = vpop.f32.mrb[0].mxu0
        %3577 = vmatprep.mubr.f32.mxu0 0.0
        %3578 = vmatmul.mubr.f32.gmra.mrb[0].mxu0 %v3488
        %v3579 = vpop.f32.mrb[0].mxu0
        %v3580 = vadd.f32 0.0, %v3579
        %v3581 = vpop.f32.mrb[0].mxu0
        %3582 = vmatprep.mubr.f32.mxu0 0.0
        %3583 = vmatmul.mubr.f32.gmra.mrb[0].mxu0 %v3491
        %v3584 = vpop.f32.mrb[0].mxu0
        %v3585 = vadd.f32 0.0, %v3584
        %v3586 = vpop.f32.mrb[0].mxu0
        %3587 = vmatprep.mubr.f32.mxu0 0.0
        %3588 = vmatmul.mubr.f32.gmra.mrb[0].mxu0 %v3494
        %v3589 = vpop.f32.mrb[0].mxu0
        %v3590 = vadd.f32 0.0, %v3589
        %v3591 = vpop.f32.mrb[0].mxu0
        %3592 = vdwg.mxu0
        %v3594 = vsel %vm524, %v3116, 0
        %v3597 = vsel %vm524, %v3121, 0
        %v3600 = vsel %vm524, %v3126, 0
        %v3603 = vsel %vm524, %v3131, 0
        %v3606 = vsel %vm524, %v3271, 0
        %v3609 = vsel %vm524, %v3276, 0
        %v3612 = vsel %vm524, %v3281, 0
        %v3615 = vsel %vm524, %v3286, 0
        %3617 = vmatprep.subr.mxu0 0.0
        %3618 = vmatpush1.xpose.msra.mxu0 %v3606
        %3619 = vmatprep.subr.mxu0 0.0
        %3620 = vmatpush1.xpose.msra.mxu0 %v3609
        %3621 = vmatprep.subr.mxu0 0.0
        %3622 = vmatpush1.xpose.msra.mxu0 %v3612
        %3623 = vmatprep.subr.mxu0 0.0
        %3624 = vmatpush1.xpose.msra.mxu0 %v3615
        %3625 = vmatprep.subr.mxu0 0.0
        %3626 = vmatpush1.xpose.msra.mxu0 0.0
        %3627 = vmatprep.subr.mxu0 0.0
        %3628 = vmatpush1.xpose.msra.mxu0 0.0
        %3629 = vmatprep.subr.mxu0 0.0
        %3630 = vmatpush1.xpose.msra.mxu0 0.0
        %3631 = vmatprep.subr.mxu0 0.0
        %3632 = vmatpush1.xpose.msra.mxu0 0.0
        %3633 = vmatprep.subr.mxu0 0.0
        %3634 = vmatpush1.xpose.msra.mxu0 0.0
        %3635 = vmatprep.subr.mxu0 0.0
        %3636 = vmatpush1.xpose.msra.mxu0 0.0
        %3637 = vmatprep.subr.mxu0 0.0
        %3638 = vmatpush1.xpose.msra.mxu0 0.0
        %3639 = vmatprep.subr.mxu0 0.0
        %3640 = vmatpush1.xpose.msra.mxu0 0.0
        %3641 = vmatprep.subr.mxu0 0.0
        %3642 = vmatpush1.xpose.msra.mxu0 0.0
        %3643 = vmatprep.subr.mxu0 0.0
        %3644 = vmatpush1.xpose.msra.mxu0 0.0
        %3645 = vmatprep.subr.mxu0 0.0
        %3646 = vmatpush1.xpose.msra.mxu0 0.0
        %3647 = vmatprep.subr.mxu0 0.0
        %3648 = vmatpush1.xpose.msra.mxu0 0.0
        %3649 = vmatprep.subr.mxu0 0.0
        %3650 = vmatpush1.xpose.msra.mxu0 0.0
        %3651 = vmatprep.subr.mxu0 0.0
        %3652 = vmatpush1.xpose.msra.mxu0 0.0
        %3653 = vmatprep.subr.mxu0 0.0
        %3654 = vmatpush1.xpose.msra.mxu0 0.0
        %3655 = vmatprep.subr.mxu0 0.0
        %3656 = vmatpush1.xpose.msra.mxu0 0.0
        %3657 = vmatprep.subr.mxu0 0.0
        %3658 = vmatpush1.xpose.msra.mxu0 0.0
        %3659 = vmatprep.subr.mxu0 0.0
        %3660 = vmatpush1.xpose.msra.mxu0 0.0
        %3661 = vmatprep.subr.mxu0 0.0
        %3662 = vmatpush1.xpose.msra.mxu0 0.0
        %3663 = vmatprep.subr.mxu0 0.0
        %3664 = vmatpush1.xpose.msra.mxu0 0.0
        %3665 = vmatprep.subr.mxu0 0.0
        %3666 = vmatpush1.xpose.msra.mxu0 0.0
        %3667 = vmatprep.subr.mxu0 0.0
        %3668 = vmatpush1.xpose.msra.mxu0 0.0
        %3669 = vmatprep.subr.mxu0 0.0
        %3670 = vmatpush1.xpose.msra.mxu0 0.0
        %3671 = vmatprep.subr.mxu0 0.0
        %3672 = vmatpush1.xpose.msra.mxu0 0.0
        %3673 = vmatprep.subr.mxu0 0.0
        %3674 = vmatpush1.xpose.msra.mxu0 0.0
        %3675 = vmatprep.subr.mxu0 0.0
        %3676 = vmatpush1.xpose.msra.mxu0 0.0
        %3677 = vmatprep.subr.mxu0 0.0
        %3678 = vmatpush1.xpose.msra.mxu0 0.0
        %3679 = vmatprep.subr.mxu0 0.0
        %3680 = vmatpush1.xpose.msra.mxu0 0.0
        %3681 = vmatprep.mubr.f32.mxu0 0.0
        %3682 = vmatmul.mubr.f32.gmra.mrb[0].mxu0 %v3594
        %v3683 = vpop.f32.mrb[0].mxu0
        %v3684 = vadd.f32 0.0, %v3683
        %v3685 = vpop.f32.mrb[0].mxu0
        %3686 = vmatprep.mubr.f32.mxu0 0.0
        %3687 = vmatmul.mubr.f32.gmra.mrb[0].mxu0 %v3597
        %v3688 = vpop.f32.mrb[0].mxu0
        %v3689 = vadd.f32 0.0, %v3688
        %v3690 = vpop.f32.mrb[0].mxu0
        %3691 = vmatprep.mubr.f32.mxu0 0.0
        %3692 = vmatmul.mubr.f32.gmra.mrb[0].mxu0 %v3600
        %v3693 = vpop.f32.mrb[0].mxu0
        %v3694 = vadd.f32 0.0, %v3693
        %v3695 = vpop.f32.mrb[0].mxu0
        %3696 = vmatprep.mubr.f32.mxu0 0.0
        %3697 = vmatmul.mubr.f32.gmra.mrb[0].mxu0 %v3603
        %v3698 = vpop.f32.mrb[0].mxu0
        %v3699 = vadd.f32 0.0, %v3698
        %v3700 = vpop.f32.mrb[0].mxu0
        %3701 = vdwg.mxu0
        %v3703 = vsel %vm524, %v3136, 0
        %v3706 = vsel %vm524, %v3141, 0
        %v3709 = vsel %vm524, %v3146, 0
        %v3712 = vsel %vm524, %v3151, 0
        %v3715 = vsel %vm524, %v3291, 0
        %v3718 = vsel %vm524, %v3296, 0
        %v3721 = vsel %vm524, %v3301, 0
        %v3724 = vsel %vm524, %v3306, 0
        %3726 = vmatprep.subr.mxu0 0.0
        %3727 = vmatpush1.xpose.msra.mxu0 %v3715
        %3728 = vmatprep.subr.mxu0 0.0
        %3729 = vmatpush1.xpose.msra.mxu0 %v3718
        %3730 = vmatprep.subr.mxu0 0.0
        %3731 = vmatpush1.xpose.msra.mxu0 %v3721
        %3732 = vmatprep.subr.mxu0 0.0
        %3733 = vmatpush1.xpose.msra.mxu0 %v3724
        %3734 = vmatprep.subr.mxu0 0.0
        %3735 = vmatpush1.xpose.msra.mxu0 0.0
        %3736 = vmatprep.subr.mxu0 0.0
        %3737 = vmatpush1.xpose.msra.mxu0 0.0
        %3738 = vmatprep.subr.mxu0 0.0
        %3739 = vmatpush1.xpose.msra.mxu0 0.0
        %3740 = vmatprep.subr.mxu0 0.0
        %3741 = vmatpush1.xpose.msra.mxu0 0.0
        %3742 = vmatprep.subr.mxu0 0.0
        %3743 = vmatpush1.xpose.msra.mxu0 0.0
        %3744 = vmatprep.subr.mxu0 0.0
        %3745 = vmatpush1.xpose.msra.mxu0 0.0
        %3746 = vmatprep.subr.mxu0 0.0
        %3747 = vmatpush1.xpose.msra.mxu0 0.0
        %3748 = vmatprep.subr.mxu0 0.0
        %3749 = vmatpush1.xpose.msra.mxu0 0.0
        %3750 = vmatprep.subr.mxu0 0.0
        %3751 = vmatpush1.xpose.msra.mxu0 0.0
        %3752 = vmatprep.subr.mxu0 0.0
        %3753 = vmatpush1.xpose.msra.mxu0 0.0
        %3754 = vmatprep.subr.mxu0 0.0
        %3755 = vmatpush1.xpose.msra.mxu0 0.0
        %3756 = vmatprep.subr.mxu0 0.0
        %3757 = vmatpush1.xpose.msra.mxu0 0.0
        %3758 = vmatprep.subr.mxu0 0.0
        %3759 = vmatpush1.xpose.msra.mxu0 0.0
        %3760 = vmatprep.subr.mxu0 0.0
        %3761 = vmatpush1.xpose.msra.mxu0 0.0
        %3762 = vmatprep.subr.mxu0 0.0
        %3763 = vmatpush1.xpose.msra.mxu0 0.0
        %3764 = vmatprep.subr.mxu0 0.0
        %3765 = vmatpush1.xpose.msra.mxu0 0.0
        %3766 = vmatprep.subr.mxu0 0.0
        %3767 = vmatpush1.xpose.msra.mxu0 0.0
        %3768 = vmatprep.subr.mxu0 0.0
        %3769 = vmatpush1.xpose.msra.mxu0 0.0
        %3770 = vmatprep.subr.mxu0 0.0
        %3771 = vmatpush1.xpose.msra.mxu0 0.0
        %3772 = vmatprep.subr.mxu0 0.0
        %3773 = vmatpush1.xpose.msra.mxu0 0.0
        %3774 = vmatprep.subr.mxu0 0.0
        %3775 = vmatpush1.xpose.msra.mxu0 0.0
        %3776 = vmatprep.subr.mxu0 0.0
        %3777 = vmatpush1.xpose.msra.mxu0 0.0
        %3778 = vmatprep.subr.mxu0 0.0
        %3779 = vmatpush1.xpose.msra.mxu0 0.0
        %3780 = vmatprep.subr.mxu0 0.0
        %3781 = vmatpush1.xpose.msra.mxu0 0.0
        %3782 = vmatprep.subr.mxu0 0.0
        %3783 = vmatpush1.xpose.msra.mxu0 0.0
        %3784 = vmatprep.subr.mxu0 0.0
        %3785 = vmatpush1.xpose.msra.mxu0 0.0
        %3786 = vmatprep.subr.mxu0 0.0
        %3787 = vmatpush1.xpose.msra.mxu0 0.0
        %3788 = vmatprep.subr.mxu0 0.0
        %3789 = vmatpush1.xpose.msra.mxu0 0.0
        %3790 = vmatprep.mubr.f32.mxu0 0.0
        %3791 = vmatmul.mubr.f32.gmra.mrb[0].mxu0 %v3703
        %v3792 = vpop.f32.mrb[0].mxu0
        %v3793 = vadd.f32 0.0, %v3792
        %v3794 = vpop.f32.mrb[0].mxu0
        %3795 = vmatprep.mubr.f32.mxu0 0.0
        %3796 = vmatmul.mubr.f32.gmra.mrb[0].mxu0 %v3706
        %v3797 = vpop.f32.mrb[0].mxu0
        %v3798 = vadd.f32 0.0, %v3797
        %v3799 = vpop.f32.mrb[0].mxu0
        %3800 = vmatprep.mubr.f32.mxu0 0.0
        %3801 = vmatmul.mubr.f32.gmra.mrb[0].mxu0 %v3709
        %v3802 = vpop.f32.mrb[0].mxu0
        %v3803 = vadd.f32 0.0, %v3802
        %v3804 = vpop.f32.mrb[0].mxu0
        %3805 = vmatprep.mubr.f32.mxu0 0.0
        %3806 = vmatmul.mubr.f32.gmra.mrb[0].mxu0 %v3712
        %v3807 = vpop.f32.mrb[0].mxu0
        %v3808 = vadd.f32 0.0, %v3807
        %v3809 = vpop.f32.mrb[0].mxu0
        %3810 = vdwg.mxu0
        %v3812 = vsel %vm524, %v3156, 0
        %v3815 = vsel %vm524, %v3161, 0
        %v3818 = vsel %vm524, %v3166, 0
        %v3821 = vsel %vm524, %v3171, 0
        %v3824 = vsel %vm524, %v3311, 0
        %v3827 = vsel %vm524, %v3316, 0
        %v3830 = vsel %vm524, %v3321, 0
        %v3833 = vsel %vm524, %v3326, 0
        %3835 = vmatprep.subr.mxu0 0.0
        %3836 = vmatpush1.xpose.msra.mxu0 %v3824
        %3837 = vmatprep.subr.mxu0 0.0
        %3838 = vmatpush1.xpose.msra.mxu0 %v3827
        %3839 = vmatprep.subr.mxu0 0.0
        %3840 = vmatpush1.xpose.msra.mxu0 %v3830
        %3841 = vmatprep.subr.mxu0 0.0
        %3842 = vmatpush1.xpose.msra.mxu0 %v3833
        %3843 = vmatprep.subr.mxu0 0.0
        %3844 = vmatpush1.xpose.msra.mxu0 0.0
        %3845 = vmatprep.subr.mxu0 0.0
        %3846 = vmatpush1.xpose.msra.mxu0 0.0
        %3847 = vmatprep.subr.mxu0 0.0
        %3848 = vmatpush1.xpose.msra.mxu0 0.0
        %3849 = vmatprep.subr.mxu0 0.0
        %3850 = vmatpush1.xpose.msra.mxu0 0.0
        %3851 = vmatprep.subr.mxu0 0.0
        %3852 = vmatpush1.xpose.msra.mxu0 0.0
        %3853 = vmatprep.subr.mxu0 0.0
        %3854 = vmatpush1.xpose.msra.mxu0 0.0
        %3855 = vmatprep.subr.mxu0 0.0
        %3856 = vmatpush1.xpose.msra.mxu0 0.0
        %3857 = vmatprep.subr.mxu0 0.0
        %3858 = vmatpush1.xpose.msra.mxu0 0.0
        %3859 = vmatprep.subr.mxu0 0.0
        %3860 = vmatpush1.xpose.msra.mxu0 0.0
        %3861 = vmatprep.subr.mxu0 0.0
        %3862 = vmatpush1.xpose.msra.mxu0 0.0
        %3863 = vmatprep.subr.mxu0 0.0
        %3864 = vmatpush1.xpose.msra.mxu0 0.0
        %3865 = vmatprep.subr.mxu0 0.0
        %3866 = vmatpush1.xpose.msra.mxu0 0.0
        %3867 = vmatprep.subr.mxu0 0.0
        %3868 = vmatpush1.xpose.msra.mxu0 0.0
        %3869 = vmatprep.subr.mxu0 0.0
        %3870 = vmatpush1.xpose.msra.mxu0 0.0
        %3871 = vmatprep.subr.mxu0 0.0
        %3872 = vmatpush1.xpose.msra.mxu0 0.0
        %3873 = vmatprep.subr.mxu0 0.0
        %3874 = vmatpush1.xpose.msra.mxu0 0.0
        %3875 = vmatprep.subr.mxu0 0.0
        %3876 = vmatpush1.xpose.msra.mxu0 0.0
        %3877 = vmatprep.subr.mxu0 0.0
        %3878 = vmatpush1.xpose.msra.mxu0 0.0
        %3879 = vmatprep.subr.mxu0 0.0
        %3880 = vmatpush1.xpose.msra.mxu0 0.0
        %3881 = vmatprep.subr.mxu0 0.0
        %3882 = vmatpush1.xpose.msra.mxu0 0.0
        %3883 = vmatprep.subr.mxu0 0.0
        %3884 = vmatpush1.xpose.msra.mxu0 0.0
        %3885 = vmatprep.subr.mxu0 0.0
        %3886 = vmatpush1.xpose.msra.mxu0 0.0
        %3887 = vmatprep.subr.mxu0 0.0
        %3888 = vmatpush1.xpose.msra.mxu0 0.0
        %3889 = vmatprep.subr.mxu0 0.0
        %3890 = vmatpush1.xpose.msra.mxu0 0.0
        %3891 = vmatprep.subr.mxu0 0.0
        %3892 = vmatpush1.xpose.msra.mxu0 0.0
        %3893 = vmatprep.subr.mxu0 0.0
        %3894 = vmatpush1.xpose.msra.mxu0 0.0
        %3895 = vmatprep.subr.mxu0 0.0
        %3896 = vmatpush1.xpose.msra.mxu0 0.0
        %3897 = vmatprep.subr.mxu0 0.0
        %3898 = vmatpush1.xpose.msra.mxu0 0.0
        %3899 = vmatprep.mubr.f32.mxu0 0.0
        %3900 = vmatmul.mubr.f32.gmra.mrb[0].mxu0 %v3812
        %v3901 = vpop.f32.mrb[0].mxu0
        %v3902 = vadd.f32 0.0, %v3901
        %v3903 = vpop.f32.mrb[0].mxu0
        %3904 = vmatprep.mubr.f32.mxu0 0.0
        %3905 = vmatmul.mubr.f32.gmra.mrb[0].mxu0 %v3815
        %v3906 = vpop.f32.mrb[0].mxu0
        %v3907 = vadd.f32 0.0, %v3906
        %v3908 = vpop.f32.mrb[0].mxu0
        %3909 = vmatprep.mubr.f32.mxu0 0.0
        %3910 = vmatmul.mubr.f32.gmra.mrb[0].mxu0 %v3818
        %v3911 = vpop.f32.mrb[0].mxu0
        %v3912 = vadd.f32 0.0, %v3911
        %v3913 = vpop.f32.mrb[0].mxu0
        %3914 = vmatprep.mubr.f32.mxu0 0.0
        %3915 = vmatmul.mubr.f32.gmra.mrb[0].mxu0 %v3821
        %v3916 = vpop.f32.mrb[0].mxu0
        %v3917 = vadd.f32 0.0, %v3916
        %v3918 = vpop.f32.mrb[0].mxu0
        %3919 = vdwg.mxu0
        %v3920 = vsel %vm314, %v3575, -inf
        %3921 = vmax.xlane.f32.xlu0 %v3920
        %v3922 = vpop.xlane.xlu0 %3921
        %v3923 = vsel %vm314, %v3580, -inf
        %3924 = vmax.xlane.f32.xlu0 %v3923
        %v3925 = vpop.xlane.xlu0 %3924
        %v3926 = vsel %vm314, %v3585, -inf
        %3927 = vmax.xlane.f32.xlu0 %v3926
        %v3928 = vpop.xlane.xlu0 %3927
        %v3929 = vsel %vm314, %v3590, -inf
        %3930 = vmax.xlane.f32.xlu0 %v3929
        %v3931 = vpop.xlane.xlu0 %3930
        %v3932 = vsel %vm314, %v3684, -inf
        %3933 = vmax.xlane.f32.xlu0 %v3932
        %v3934 = vpop.xlane.xlu0 %3933
        %v3935 = vsel %vm314, %v3689, -inf
        %3936 = vmax.xlane.f32.xlu0 %v3935
        %v3937 = vpop.xlane.xlu0 %3936
        %v3938 = vsel %vm314, %v3694, -inf
        %3939 = vmax.xlane.f32.xlu0 %v3938
        %v3940 = vpop.xlane.xlu0 %3939
        %v3941 = vsel %vm314, %v3699, -inf
        %3942 = vmax.xlane.f32.xlu0 %v3941
        %v3943 = vpop.xlane.xlu0 %3942
        %v3944 = vsel %vm314, %v3793, -inf
        %3945 = vmax.xlane.f32.xlu0 %v3944
        %v3946 = vpop.xlane.xlu0 %3945
        %v3947 = vsel %vm314, %v3798, -inf
        %3948 = vmax.xlane.f32.xlu0 %v3947
        %v3949 = vpop.xlane.xlu0 %3948
        %v3950 = vsel %vm314, %v3803, -inf
        %3951 = vmax.xlane.f32.xlu0 %v3950
        %v3952 = vpop.xlane.xlu0 %3951
        %v3953 = vsel %vm314, %v3808, -inf
        %3954 = vmax.xlane.f32.xlu0 %v3953
        %v3955 = vpop.xlane.xlu0 %3954
        %v3956 = vsel %vm314, %v3902, -inf
        %3957 = vmax.xlane.f32.xlu0 %v3956
        %v3958 = vpop.xlane.xlu0 %3957
        %v3959 = vsel %vm314, %v3907, -inf
        %3960 = vmax.xlane.f32.xlu0 %v3959
        %v3961 = vpop.xlane.xlu0 %3960
        %v3962 = vsel %vm314, %v3912, -inf
        %3963 = vmax.xlane.f32.xlu0 %v3962
        %v3964 = vpop.xlane.xlu0 %3963
        %v3965 = vsel %vm314, %v3917, -inf
        %3966 = vmax.xlane.f32.xlu0 %v3965
        %v3967 = vpop.xlane.xlu0 %3966
        %v3968 = vsub.f32 %v3575, %v3922
        %v3969 = vsub.f32 %v3580, %v3925
        %v3970 = vsub.f32 %v3585, %v3928
        %v3971 = vsub.f32 %v3590, %v3931
        %v3972 = vsub.f32 %v3684, %v3934
        %v3973 = vsub.f32 %v3689, %v3937
        %v3974 = vsub.f32 %v3694, %v3940
        %v3975 = vsub.f32 %v3699, %v3943
        %v3976 = vsub.f32 %v3793, %v3946
        %v3977 = vsub.f32 %v3798, %v3949
        %v3978 = vsub.f32 %v3803, %v3952
        %v3979 = vsub.f32 %v3808, %v3955
        %v3980 = vsub.f32 %v3902, %v3958
        %v3981 = vsub.f32 %v3907, %v3961
        %v3982 = vsub.f32 %v3912, %v3964
        %v3983 = vsub.f32 %v3917, %v3967
        %v3984 = vmul.f32 %v3968, 1.442695
        %v3985 = vpow.pop %v3984
        %v3986 = vmul.f32 %v3969, 1.442695
        %v3987 = vpow.pop %v3986
        %v3988 = vmul.f32 %v3970, 1.442695
        %v3989 = vpow.pop %v3988
        %v3990 = vmul.f32 %v3971, 1.442695
        %v3991 = vpow.pop %v3990
        %v3992 = vmul.f32 %v3972, 1.442695
        %v3993 = vpow.pop %v3992
        %v3994 = vmul.f32 %v3973, 1.442695
        %v3995 = vpow.pop %v3994
        %v3996 = vmul.f32 %v3974, 1.442695
        %v3997 = vpow.pop %v3996
        %v3998 = vmul.f32 %v3975, 1.442695
        %v3999 = vpow.pop %v3998
        %v4000 = vmul.f32 %v3976, 1.442695
        %v4001 = vpow.pop %v4000
        %v4002 = vmul.f32 %v3977, 1.442695
        %v4003 = vpow.pop %v4002
        %v4004 = vmul.f32 %v3978, 1.442695
        %v4005 = vpow.pop %v4004
        %v4006 = vmul.f32 %v3979, 1.442695
        %v4007 = vpow.pop %v4006
        %v4008 = vmul.f32 %v3980, 1.442695
        %v4009 = vpow.pop %v4008
        %v4010 = vmul.f32 %v3981, 1.442695
        %v4011 = vpow.pop %v4010
        %v4012 = vmul.f32 %v3982, 1.442695
        %v4013 = vpow.pop %v4012
        %v4014 = vmul.f32 %v3983, 1.442695
        %v4015 = vpow.pop %v4014
        %v4016 = vsel %vm314, %v3985, 0.0
        %4017 = vadd.xlane.f32.xlu0 %v4016
        %v4018 = vpop.xlane.xlu0 %4017
        %v4019 = vsel %vm314, %v3987, 0.0
        %4020 = vadd.xlane.f32.xlu0 %v4019
        %v4021 = vpop.xlane.xlu0 %4020
        %v4022 = vsel %vm314, %v3989, 0.0
        %4023 = vadd.xlane.f32.xlu0 %v4022
        %v4024 = vpop.xlane.xlu0 %4023
        %v4025 = vsel %vm314, %v3991, 0.0
        %4026 = vadd.xlane.f32.xlu0 %v4025
        %v4027 = vpop.xlane.xlu0 %4026
        %v4028 = vsel %vm314, %v3993, 0.0
        %4029 = vadd.xlane.f32.xlu0 %v4028
        %v4030 = vpop.xlane.xlu0 %4029
        %v4031 = vsel %vm314, %v3995, 0.0
        %4032 = vadd.xlane.f32.xlu0 %v4031
        %v4033 = vpop.xlane.xlu0 %4032
        %v4034 = vsel %vm314, %v3997, 0.0
        %4035 = vadd.xlane.f32.xlu0 %v4034
        %v4036 = vpop.xlane.xlu0 %4035
        %v4037 = vsel %vm314, %v3999, 0.0
        %4038 = vadd.xlane.f32.xlu0 %v4037
        %v4039 = vpop.xlane.xlu0 %4038
        %v4040 = vsel %vm314, %v4001, 0.0
        %4041 = vadd.xlane.f32.xlu0 %v4040
        %v4042 = vpop.xlane.xlu0 %4041
        %v4043 = vsel %vm314, %v4003, 0.0
        %4044 = vadd.xlane.f32.xlu0 %v4043
        %v4045 = vpop.xlane.xlu0 %4044
        %v4046 = vsel %vm314, %v4005, 0.0
        %4047 = vadd.xlane.f32.xlu0 %v4046
        %v4048 = vpop.xlane.xlu0 %4047
        %v4049 = vsel %vm314, %v4007, 0.0
        %4050 = vadd.xlane.f32.xlu0 %v4049
        %v4051 = vpop.xlane.xlu0 %4050
        %v4052 = vsel %vm314, %v4009, 0.0
        %4053 = vadd.xlane.f32.xlu0 %v4052
        %v4054 = vpop.xlane.xlu0 %4053
        %v4055 = vsel %vm314, %v4011, 0.0
        %4056 = vadd.xlane.f32.xlu0 %v4055
        %v4057 = vpop.xlane.xlu0 %4056
        %v4058 = vsel %vm314, %v4013, 0.0
        %4059 = vadd.xlane.f32.xlu0 %v4058
        %v4060 = vpop.xlane.xlu0 %4059
        %v4061 = vsel %vm314, %v4015, 0.0
        %4062 = vadd.xlane.f32.xlu0 %v4061
        %v4063 = vpop.xlane.xlu0 %4062
        %v4064 = vrcp.pop %v4018
        %v4065 = vmul.f32 %v3985, %v4064
        %v4066 = vrcp.pop %v4021
        %v4067 = vmul.f32 %v3987, %v4066
        %v4068 = vrcp.pop %v4024
        %v4069 = vmul.f32 %v3989, %v4068
        %v4070 = vrcp.pop %v4027
        %v4071 = vmul.f32 %v3991, %v4070
        %v4072 = vrcp.pop %v4030
        %v4073 = vmul.f32 %v3993, %v4072
        %v4074 = vrcp.pop %v4033
        %v4075 = vmul.f32 %v3995, %v4074
        %v4076 = vrcp.pop %v4036
        %v4077 = vmul.f32 %v3997, %v4076
        %v4078 = vrcp.pop %v4039
        %v4079 = vmul.f32 %v3999, %v4078
        %v4080 = vrcp.pop %v4042
        %v4081 = vmul.f32 %v4001, %v4080
        %v4082 = vrcp.pop %v4045
        %v4083 = vmul.f32 %v4003, %v4082
        %v4084 = vrcp.pop %v4048
        %v4085 = vmul.f32 %v4005, %v4084
        %v4086 = vrcp.pop %v4051
        %v4087 = vmul.f32 %v4007, %v4086
        %v4088 = vrcp.pop %v4054
        %v4089 = vmul.f32 %v4009, %v4088
        %v4090 = vrcp.pop %v4057
        %v4091 = vmul.f32 %v4011, %v4090
        %v4092 = vrcp.pop %v4060
        %v4093 = vmul.f32 %v4013, %v4092
        %v4094 = vrcp.pop %v4063
        %v4095 = vmul.f32 %v4015, %v4094
        %v4097 = vsel %vm314, %v4065, 0
        %v4100 = vsel %vm314, %v4067, 0
        %v4103 = vsel %vm314, %v4069, 0
        %v4106 = vsel %vm314, %v4071, 0
        %4108 = vmatprep.subr.mxu0 0.0
        %4109 = vmatpush1.msra.mxu0 %v3406
        %4110 = vmatprep.subr.mxu0 0.0
        %4111 = vmatpush1.msra.mxu0 %v3411
        %4112 = vmatprep.subr.mxu0 0.0
        %4113 = vmatpush1.msra.mxu0 %v3416
        %4114 = vmatprep.subr.mxu0 0.0
        %4115 = vmatpush1.msra.mxu0 %v3421
        %4116 = vmatprep.subr.mxu0 0.0
        %4117 = vmatpush1.msra.mxu0 0.0
        %4118 = vmatprep.subr.mxu0 0.0
        %4119 = vmatpush1.msra.mxu0 0.0
        %4120 = vmatprep.subr.mxu0 0.0
        %4121 = vmatpush1.msra.mxu0 0.0
        %4122 = vmatprep.subr.mxu0 0.0
        %4123 = vmatpush1.msra.mxu0 0.0
        %4124 = vmatprep.subr.mxu0 0.0
        %4125 = vmatpush1.msra.mxu0 0.0
        %4126 = vmatprep.subr.mxu0 0.0
        %4127 = vmatpush1.msra.mxu0 0.0
        %4128 = vmatprep.subr.mxu0 0.0
        %4129 = vmatpush1.msra.mxu0 0.0
        %4130 = vmatprep.subr.mxu0 0.0
        %4131 = vmatpush1.msra.mxu0 0.0
        %4132 = vmatprep.subr.mxu0 0.0
        %4133 = vmatpush1.msra.mxu0 0.0
        %4134 = vmatprep.subr.mxu0 0.0
        %4135 = vmatpush1.msra.mxu0 0.0
        %4136 = vmatprep.subr.mxu0 0.0
        %4137 = vmatpush1.msra.mxu0 0.0
        %4138 = vmatprep.subr.mxu0 0.0
        %4139 = vmatpush1.msra.mxu0 0.0
        %4140 = vmatprep.subr.mxu0 0.0
        %4141 = vmatpush1.msra.mxu0 0.0
        %4142 = vmatprep.subr.mxu0 0.0
        %4143 = vmatpush1.msra.mxu0 0.0
        %4144 = vmatprep.subr.mxu0 0.0
        %4145 = vmatpush1.msra.mxu0 0.0
        %4146 = vmatprep.subr.mxu0 0.0
        %4147 = vmatpush1.msra.mxu0 0.0
        %4148 = vmatprep.subr.mxu0 0.0
        %4149 = vmatpush1.msra.mxu0 0.0
        %4150 = vmatprep.subr.mxu0 0.0
        %4151 = vmatpush1.msra.mxu0 0.0
        %4152 = vmatprep.subr.mxu0 0.0
        %4153 = vmatpush1.msra.mxu0 0.0
        %4154 = vmatprep.subr.mxu0 0.0
        %4155 = vmatpush1.msra.mxu0 0.0
        %4156 = vmatprep.subr.mxu0 0.0
        %4157 = vmatpush1.msra.mxu0 0.0
        %4158 = vmatprep.subr.mxu0 0.0
        %4159 = vmatpush1.msra.mxu0 0.0
        %4160 = vmatprep.subr.mxu0 0.0
        %4161 = vmatpush1.msra.mxu0 0.0
        %4162 = vmatprep.subr.mxu0 0.0
        %4163 = vmatpush1.msra.mxu0 0.0
        %4164 = vmatprep.subr.mxu0 0.0
        %4165 = vmatpush1.msra.mxu0 0.0
        %4166 = vmatprep.subr.mxu0 0.0
        %4167 = vmatpush1.msra.mxu0 0.0
        %4168 = vmatprep.subr.mxu0 0.0
        %4169 = vmatpush1.msra.mxu0 0.0
        %4170 = vmatprep.subr.mxu0 0.0
        %4171 = vmatpush1.msra.mxu0 0.0
        %4172 = vmatprep.mubr.f32.mxu0 0.0
        %4173 = vmatmul.mubr.f32.gmra.mrb[0].mxu0 %v4097
        %v4174 = vpop.f32.mrb[0].mxu0
        %v4175 = vadd.f32 0.0, %v4174
        %v4176 = vpop.f32.mrb[0].mxu0
        %4177 = vmatprep.mubr.f32.mxu0 0.0
        %4178 = vmatmul.mubr.f32.gmra.mrb[0].mxu0 %v4100
        %v4179 = vpop.f32.mrb[0].mxu0
        %v4180 = vadd.f32 0.0, %v4179
        %v4181 = vpop.f32.mrb[0].mxu0
        %4182 = vmatprep.mubr.f32.mxu0 0.0
        %4183 = vmatmul.mubr.f32.gmra.mrb[0].mxu0 %v4103
        %v4184 = vpop.f32.mrb[0].mxu0
        %v4185 = vadd.f32 0.0, %v4184
        %v4186 = vpop.f32.mrb[0].mxu0
        %4187 = vmatprep.mubr.f32.mxu0 0.0
        %4188 = vmatmul.mubr.f32.gmra.mrb[0].mxu0 %v4106
        %v4189 = vpop.f32.mrb[0].mxu0
        %v4190 = vadd.f32 0.0, %v4189
        %v4191 = vpop.f32.mrb[0].mxu0
        %4192 = vdwg.mxu0
        %v4194 = vsel %vm314, %v4073, 0
        %v4197 = vsel %vm314, %v4075, 0
        %v4200 = vsel %vm314, %v4077, 0
        %v4203 = vsel %vm314, %v4079, 0
        %4205 = vmatprep.subr.mxu0 0.0
        %4206 = vmatpush1.msra.mxu0 %v3426
        %4207 = vmatprep.subr.mxu0 0.0
        %4208 = vmatpush1.msra.mxu0 %v3431
        %4209 = vmatprep.subr.mxu0 0.0
        %4210 = vmatpush1.msra.mxu0 %v3436
        %4211 = vmatprep.subr.mxu0 0.0
        %4212 = vmatpush1.msra.mxu0 %v3441
        %4213 = vmatprep.subr.mxu0 0.0
        %4214 = vmatpush1.msra.mxu0 0.0
        %4215 = vmatprep.subr.mxu0 0.0
        %4216 = vmatpush1.msra.mxu0 0.0
        %4217 = vmatprep.subr.mxu0 0.0
        %4218 = vmatpush1.msra.mxu0 0.0
        %4219 = vmatprep.subr.mxu0 0.0
        %4220 = vmatpush1.msra.mxu0 0.0
        %4221 = vmatprep.subr.mxu0 0.0
        %4222 = vmatpush1.msra.mxu0 0.0
        %4223 = vmatprep.subr.mxu0 0.0
        %4224 = vmatpush1.msra.mxu0 0.0
        %4225 = vmatprep.subr.mxu0 0.0
        %4226 = vmatpush1.msra.mxu0 0.0
        %4227 = vmatprep.subr.mxu0 0.0
        %4228 = vmatpush1.msra.mxu0 0.0
        %4229 = vmatprep.subr.mxu0 0.0
        %4230 = vmatpush1.msra.mxu0 0.0
        %4231 = vmatprep.subr.mxu0 0.0
        %4232 = vmatpush1.msra.mxu0 0.0
        %4233 = vmatprep.subr.mxu0 0.0
        %4234 = vmatpush1.msra.mxu0 0.0
        %4235 = vmatprep.subr.mxu0 0.0
        %4236 = vmatpush1.msra.mxu0 0.0
        %4237 = vmatprep.subr.mxu0 0.0
        %4238 = vmatpush1.msra.mxu0 0.0
        %4239 = vmatprep.subr.mxu0 0.0
        %4240 = vmatpush1.msra.mxu0 0.0
        %4241 = vmatprep.subr.mxu0 0.0
        %4242 = vmatpush1.msra.mxu0 0.0
        %4243 = vmatprep.subr.mxu0 0.0
        %4244 = vmatpush1.msra.mxu0 0.0
        %4245 = vmatprep.subr.mxu0 0.0
        %4246 = vmatpush1.msra.mxu0 0.0
        %4247 = vmatprep.subr.mxu0 0.0
        %4248 = vmatpush1.msra.mxu0 0.0
        %4249 = vmatprep.subr.mxu0 0.0
        %4250 = vmatpush1.msra.mxu0 0.0
        %4251 = vmatprep.subr.mxu0 0.0
        %4252 = vmatpush1.msra.mxu0 0.0
        %4253 = vmatprep.subr.mxu0 0.0
        %4254 = vmatpush1.msra.mxu0 0.0
        %4255 = vmatprep.subr.mxu0 0.0
        %4256 = vmatpush1.msra.mxu0 0.0
        %4257 = vmatprep.subr.mxu0 0.0
        %4258 = vmatpush1.msra.mxu0 0.0
        %4259 = vmatprep.subr.mxu0 0.0
        %4260 = vmatpush1.msra.mxu0 0.0
        %4261 = vmatprep.subr.mxu0 0.0
        %4262 = vmatpush1.msra.mxu0 0.0
        %4263 = vmatprep.subr.mxu0 0.0
        %4264 = vmatpush1.msra.mxu0 0.0
        %4265 = vmatprep.subr.mxu0 0.0
        %4266 = vmatpush1.msra.mxu0 0.0
        %4267 = vmatprep.subr.mxu0 0.0
        %4268 = vmatpush1.msra.mxu0 0.0
        %4269 = vmatprep.mubr.f32.mxu0 0.0
        %4270 = vmatmul.mubr.f32.gmra.mrb[0].mxu0 %v4194
        %v4271 = vpop.f32.mrb[0].mxu0
        %v4272 = vadd.f32 0.0, %v4271
        %v4273 = vpop.f32.mrb[0].mxu0
        %4274 = vmatprep.mubr.f32.mxu0 0.0
        %4275 = vmatmul.mubr.f32.gmra.mrb[0].mxu0 %v4197
        %v4276 = vpop.f32.mrb[0].mxu0
        %v4277 = vadd.f32 0.0, %v4276
        %v4278 = vpop.f32.mrb[0].mxu0
        %4279 = vmatprep.mubr.f32.mxu0 0.0
        %4280 = vmatmul.mubr.f32.gmra.mrb[0].mxu0 %v4200
        %v4281 = vpop.f32.mrb[0].mxu0
        %v4282 = vadd.f32 0.0, %v4281
        %v4283 = vpop.f32.mrb[0].mxu0
        %4284 = vmatprep.mubr.f32.mxu0 0.0
        %4285 = vmatmul.mubr.f32.gmra.mrb[0].mxu0 %v4203
        %v4286 = vpop.f32.mrb[0].mxu0
        %v4287 = vadd.f32 0.0, %v4286
        %v4288 = vpop.f32.mrb[0].mxu0
        %4289 = vdwg.mxu0
        %v4291 = vsel %vm314, %v4081, 0
        %v4294 = vsel %vm314, %v4083, 0
        %v4297 = vsel %vm314, %v4085, 0
        %v4300 = vsel %vm314, %v4087, 0
        %4302 = vmatprep.subr.mxu0 0.0
        %4303 = vmatpush1.msra.mxu0 %v3446
        %4304 = vmatprep.subr.mxu0 0.0
        %4305 = vmatpush1.msra.mxu0 %v3451
        %4306 = vmatprep.subr.mxu0 0.0
        %4307 = vmatpush1.msra.mxu0 %v3456
        %4308 = vmatprep.subr.mxu0 0.0
        %4309 = vmatpush1.msra.mxu0 %v3461
        %4310 = vmatprep.subr.mxu0 0.0
        %4311 = vmatpush1.msra.mxu0 0.0
        %4312 = vmatprep.subr.mxu0 0.0
        %4313 = vmatpush1.msra.mxu0 0.0
        %4314 = vmatprep.subr.mxu0 0.0
        %4315 = vmatpush1.msra.mxu0 0.0
        %4316 = vmatprep.subr.mxu0 0.0
        %4317 = vmatpush1.msra.mxu0 0.0
        %4318 = vmatprep.subr.mxu0 0.0
        %4319 = vmatpush1.msra.mxu0 0.0
        %4320 = vmatprep.subr.mxu0 0.0
        %4321 = vmatpush1.msra.mxu0 0.0
        %4322 = vmatprep.subr.mxu0 0.0
        %4323 = vmatpush1.msra.mxu0 0.0
        %4324 = vmatprep.subr.mxu0 0.0
        %4325 = vmatpush1.msra.mxu0 0.0
        %4326 = vmatprep.subr.mxu0 0.0
        %4327 = vmatpush1.msra.mxu0 0.0
        %4328 = vmatprep.subr.mxu0 0.0
        %4329 = vmatpush1.msra.mxu0 0.0
        %4330 = vmatprep.subr.mxu0 0.0
        %4331 = vmatpush1.msra.mxu0 0.0
        %4332 = vmatprep.subr.mxu0 0.0
        %4333 = vmatpush1.msra.mxu0 0.0
        %4334 = vmatprep.subr.mxu0 0.0
        %4335 = vmatpush1.msra.mxu0 0.0
        %4336 = vmatprep.subr.mxu0 0.0
        %4337 = vmatpush1.msra.mxu0 0.0
        %4338 = vmatprep.subr.mxu0 0.0
        %4339 = vmatpush1.msra.mxu0 0.0
        %4340 = vmatprep.subr.mxu0 0.0
        %4341 = vmatpush1.msra.mxu0 0.0
        %4342 = vmatprep.subr.mxu0 0.0
        %4343 = vmatpush1.msra.mxu0 0.0
        %4344 = vmatprep.subr.mxu0 0.0
        %4345 = vmatpush1.msra.mxu0 0.0
        %4346 = vmatprep.subr.mxu0 0.0
        %4347 = vmatpush1.msra.mxu0 0.0
        %4348 = vmatprep.subr.mxu0 0.0
        %4349 = vmatpush1.msra.mxu0 0.0
        %4350 = vmatprep.subr.mxu0 0.0
        %4351 = vmatpush1.msra.mxu0 0.0
        %4352 = vmatprep.subr.mxu0 0.0
        %4353 = vmatpush1.msra.mxu0 0.0
        %4354 = vmatprep.subr.mxu0 0.0
        %4355 = vmatpush1.msra.mxu0 0.0
        %4356 = vmatprep.subr.mxu0 0.0
        %4357 = vmatpush1.msra.mxu0 0.0
        %4358 = vmatprep.subr.mxu0 0.0
        %4359 = vmatpush1.msra.mxu0 0.0
        %4360 = vmatprep.subr.mxu0 0.0
        %4361 = vmatpush1.msra.mxu0 0.0
        %4362 = vmatprep.subr.mxu0 0.0
        %4363 = vmatpush1.msra.mxu0 0.0
        %4364 = vmatprep.subr.mxu0 0.0
        %4365 = vmatpush1.msra.mxu0 0.0
        %4366 = vmatprep.mubr.f32.mxu0 0.0
        %4367 = vmatmul.mubr.f32.gmra.mrb[0].mxu0 %v4291
        %v4368 = vpop.f32.mrb[0].mxu0
        %v4369 = vadd.f32 0.0, %v4368
        %v4370 = vpop.f32.mrb[0].mxu0
        %4371 = vmatprep.mubr.f32.mxu0 0.0
        %4372 = vmatmul.mubr.f32.gmra.mrb[0].mxu0 %v4294
        %v4373 = vpop.f32.mrb[0].mxu0
        %v4374 = vadd.f32 0.0, %v4373
        %v4375 = vpop.f32.mrb[0].mxu0
        %4376 = vmatprep.mubr.f32.mxu0 0.0
        %4377 = vmatmul.mubr.f32.gmra.mrb[0].mxu0 %v4297
        %v4378 = vpop.f32.mrb[0].mxu0
        %v4379 = vadd.f32 0.0, %v4378
        %v4380 = vpop.f32.mrb[0].mxu0
        %4381 = vmatprep.mubr.f32.mxu0 0.0
        %4382 = vmatmul.mubr.f32.gmra.mrb[0].mxu0 %v4300
        %v4383 = vpop.f32.mrb[0].mxu0
        %v4384 = vadd.f32 0.0, %v4383
        %v4385 = vpop.f32.mrb[0].mxu0
        %4386 = vdwg.mxu0
        %v4388 = vsel %vm314, %v4089, 0
        %v4391 = vsel %vm314, %v4091, 0
        %v4394 = vsel %vm314, %v4093, 0
        %v4397 = vsel %vm314, %v4095, 0
        %4399 = vmatprep.subr.mxu0 0.0
        %4400 = vmatpush1.msra.mxu0 %v3466
        %4401 = vmatprep.subr.mxu0 0.0
        %4402 = vmatpush1.msra.mxu0 %v3471
        %4403 = vmatprep.subr.mxu0 0.0
        %4404 = vmatpush1.msra.mxu0 %v3476
        %4405 = vmatprep.subr.mxu0 0.0
        %4406 = vmatpush1.msra.mxu0 %v3481
        %4407 = vmatprep.subr.mxu0 0.0
        %4408 = vmatpush1.msra.mxu0 0.0
        %4409 = vmatprep.subr.mxu0 0.0
        %4410 = vmatpush1.msra.mxu0 0.0
        %4411 = vmatprep.subr.mxu0 0.0
        %4412 = vmatpush1.msra.mxu0 0.0
        %4413 = vmatprep.subr.mxu0 0.0
        %4414 = vmatpush1.msra.mxu0 0.0
        %4415 = vmatprep.subr.mxu0 0.0
        %4416 = vmatpush1.msra.mxu0 0.0
        %4417 = vmatprep.subr.mxu0 0.0
        %4418 = vmatpush1.msra.mxu0 0.0
        %4419 = vmatprep.subr.mxu0 0.0
        %4420 = vmatpush1.msra.mxu0 0.0
        %4421 = vmatprep.subr.mxu0 0.0
        %4422 = vmatpush1.msra.mxu0 0.0
        %4423 = vmatprep.subr.mxu0 0.0
        %4424 = vmatpush1.msra.mxu0 0.0
        %4425 = vmatprep.subr.mxu0 0.0
        %4426 = vmatpush1.msra.mxu0 0.0
        %4427 = vmatprep.subr.mxu0 0.0
        %4428 = vmatpush1.msra.mxu0 0.0
        %4429 = vmatprep.subr.mxu0 0.0
        %4430 = vmatpush1.msra.mxu0 0.0
        %4431 = vmatprep.subr.mxu0 0.0
        %4432 = vmatpush1.msra.mxu0 0.0
        %4433 = vmatprep.subr.mxu0 0.0
        %4434 = vmatpush1.msra.mxu0 0.0
        %4435 = vmatprep.subr.mxu0 0.0
        %4436 = vmatpush1.msra.mxu0 0.0
        %4437 = vmatprep.subr.mxu0 0.0
        %4438 = vmatpush1.msra.mxu0 0.0
        %4439 = vmatprep.subr.mxu0 0.0
        %4440 = vmatpush1.msra.mxu0 0.0
        %4441 = vmatprep.subr.mxu0 0.0
        %4442 = vmatpush1.msra.mxu0 0.0
        %4443 = vmatprep.subr.mxu0 0.0
        %4444 = vmatpush1.msra.mxu0 0.0
        %4445 = vmatprep.subr.mxu0 0.0
        %4446 = vmatpush1.msra.mxu0 0.0
        %4447 = vmatprep.subr.mxu0 0.0
        %4448 = vmatpush1.msra.mxu0 0.0
        %4449 = vmatprep.subr.mxu0 0.0
        %4450 = vmatpush1.msra.mxu0 0.0
        %4451 = vmatprep.subr.mxu0 0.0
        %4452 = vmatpush1.msra.mxu0 0.0
        %4453 = vmatprep.subr.mxu0 0.0
        %4454 = vmatpush1.msra.mxu0 0.0
        %4455 = vmatprep.subr.mxu0 0.0
        %4456 = vmatpush1.msra.mxu0 0.0
        %4457 = vmatprep.subr.mxu0 0.0
        %4458 = vmatpush1.msra.mxu0 0.0
        %4459 = vmatprep.subr.mxu0 0.0
        %4460 = vmatpush1.msra.mxu0 0.0
        %4461 = vmatprep.subr.mxu0 0.0
        %4462 = vmatpush1.msra.mxu0 0.0
        %4463 = vmatprep.mubr.f32.mxu0 0.0
        %4464 = vmatmul.mubr.f32.gmra.mrb[0].mxu0 %v4388
        %v4465 = vpop.f32.mrb[0].mxu0
        %v4466 = vadd.f32 0.0, %v4465
        %v4467 = vpop.f32.mrb[0].mxu0
        %4468 = vmatprep.mubr.f32.mxu0 0.0
        %4469 = vmatmul.mubr.f32.gmra.mrb[0].mxu0 %v4391
        %v4470 = vpop.f32.mrb[0].mxu0
        %v4471 = vadd.f32 0.0, %v4470
        %v4472 = vpop.f32.mrb[0].mxu0
        %4473 = vmatprep.mubr.f32.mxu0 0.0
        %4474 = vmatmul.mubr.f32.gmra.mrb[0].mxu0 %v4394
        %v4475 = vpop.f32.mrb[0].mxu0
        %v4476 = vadd.f32 0.0, %v4475
        %v4477 = vpop.f32.mrb[0].mxu0
        %4478 = vmatprep.mubr.f32.mxu0 0.0
        %4479 = vmatmul.mubr.f32.gmra.mrb[0].mxu0 %v4397
        %v4480 = vpop.f32.mrb[0].mxu0
        %v4481 = vadd.f32 0.0, %v4480
        %v4482 = vpop.f32.mrb[0].mxu0
        %4483 = vdwg.mxu0
        %s4484 = scalar_lea.vmem %s2, 8
        %v4485 = vld [vmem:[%s4484] sm:$0xff]
        %s4486 = scalar_lea.vmem %s6, 7
        %v4487 = vld [vmem:[%s4486] sm:$0x1]
        %v4489 = vlaneseq
        %v4490 = vshrl.u32 %v4489, 7
        %v4491 = vsub.s32 0, %v4490
        %v4492 = vrot.slane %v4487, %v4491
        %v4495 = vsel %vm524, %v4175, 0
        %v4498 = vsel %vm524, %v4180, 0
        %v4501 = vsel %vm524, %v4185, 0
        %v4504 = vsel %vm524, %v4190, 0
        %v4507 = vsel %vm524, %v4272, 0
        %v4510 = vsel %vm524, %v4277, 0
        %v4513 = vsel %vm524, %v4282, 0
        %v4516 = vsel %vm524, %v4287, 0
        %v4519 = vsel %vm524, %v4369, 0
        %v4522 = vsel %vm524, %v4374, 0
        %v4525 = vsel %vm524, %v4379, 0
        %v4528 = vsel %vm524, %v4384, 0
        %v4531 = vsel %vm524, %v4466, 0
        %v4534 = vsel %vm524, %v4471, 0
        %v4537 = vsel %vm524, %v4476, 0
        %v4540 = vsel %vm524, %v4481, 0
        %4542 = vmatprep.subr.mxu0 0.0
        %4543 = vmatpush1.msra.mxu0 %v4485
        %4544 = vmatprep.subr.mxu0 0.0
        %4545 = vmatpush1.msra.mxu0 0.0
        %4546 = vmatprep.subr.mxu0 0.0
        %4547 = vmatpush1.msra.mxu0 0.0
        %4548 = vmatprep.subr.mxu0 0.0
        %4549 = vmatpush1.msra.mxu0 0.0
        %4550 = vmatprep.subr.mxu0 0.0
        %4551 = vmatpush1.msra.mxu0 0.0
        %4552 = vmatprep.subr.mxu0 0.0
        %4553 = vmatpush1.msra.mxu0 0.0
        %4554 = vmatprep.subr.mxu0 0.0
        %4555 = vmatpush1.msra.mxu0 0.0
        %4556 = vmatprep.subr.mxu0 0.0
        %4557 = vmatpush1.msra.mxu0 0.0
        %4558 = vmatprep.subr.mxu0 0.0
        %4559 = vmatpush1.msra.mxu0 0.0
        %4560 = vmatprep.subr.mxu0 0.0
        %4561 = vmatpush1.msra.mxu0 0.0
        %4562 = vmatprep.subr.mxu0 0.0
        %4563 = vmatpush1.msra.mxu0 0.0
        %4564 = vmatprep.subr.mxu0 0.0
        %4565 = vmatpush1.msra.mxu0 0.0
        %4566 = vmatprep.subr.mxu0 0.0
        %4567 = vmatpush1.msra.mxu0 0.0
        %4568 = vmatprep.subr.mxu0 0.0
        %4569 = vmatpush1.msra.mxu0 0.0
        %4570 = vmatprep.subr.mxu0 0.0
        %4571 = vmatpush1.msra.mxu0 0.0
        %4572 = vmatprep.subr.mxu0 0.0
        %4573 = vmatpush1.msra.mxu0 0.0
        %4574 = vmatprep.subr.mxu0 0.0
        %4575 = vmatpush1.msra.mxu0 0.0
        %4576 = vmatprep.subr.mxu0 0.0
        %4577 = vmatpush1.msra.mxu0 0.0
        %4578 = vmatprep.subr.mxu0 0.0
        %4579 = vmatpush1.msra.mxu0 0.0
        %4580 = vmatprep.subr.mxu0 0.0
        %4581 = vmatpush1.msra.mxu0 0.0
        %4582 = vmatprep.subr.mxu0 0.0
        %4583 = vmatpush1.msra.mxu0 0.0
        %4584 = vmatprep.subr.mxu0 0.0
        %4585 = vmatpush1.msra.mxu0 0.0
        %4586 = vmatprep.subr.mxu0 0.0
        %4587 = vmatpush1.msra.mxu0 0.0
        %4588 = vmatprep.subr.mxu0 0.0
        %4589 = vmatpush1.msra.mxu0 0.0
        %4590 = vmatprep.subr.mxu0 0.0
        %4591 = vmatpush1.msra.mxu0 0.0
        %4592 = vmatprep.subr.mxu0 0.0
        %4593 = vmatpush1.msra.mxu0 0.0
        %4594 = vmatprep.subr.mxu0 0.0
        %4595 = vmatpush1.msra.mxu0 0.0
        %4596 = vmatprep.subr.mxu0 0.0
        %4597 = vmatpush1.msra.mxu0 0.0
        %4598 = vmatprep.subr.mxu0 0.0
        %4599 = vmatpush1.msra.mxu0 0.0
        %4600 = vmatprep.subr.mxu0 0.0
        %4601 = vmatpush1.msra.mxu0 0.0
        %4602 = vmatprep.subr.mxu0 0.0
        %4603 = vmatpush1.msra.mxu0 0.0
        %4604 = vmatprep.subr.mxu0 0.0
        %4605 = vmatpush1.msra.mxu0 0.0
        %4606 = vmatprep.mubr.f32.mxu0 0.0
        %4607 = vmatmul.mubr.f32.gmra.mrb[0].mxu0 %v4495
        %v4608 = vpop.f32.mrb[0].mxu0
        %v4609 = vadd.f32 %v4492, %v4608
        %v4610 = vpop.f32.mrb[0].mxu0
        %4611 = vmatprep.mubr.f32.mxu0 0.0
        %4612 = vmatmul.mubr.f32.gmra.mrb[0].mxu0 %v4498
        %v4613 = vpop.f32.mrb[0].mxu0
        %v4614 = vadd.f32 %v4492, %v4613
        %v4615 = vpop.f32.mrb[0].mxu0
        %4616 = vmatprep.mubr.f32.mxu0 0.0
        %4617 = vmatmul.mubr.f32.gmra.mrb[0].mxu0 %v4501
        %v4618 = vpop.f32.mrb[0].mxu0
        %v4619 = vadd.f32 %v4492, %v4618
        %v4620 = vpop.f32.mrb[0].mxu0
        %4621 = vmatprep.mubr.f32.mxu0 0.0
        %4622 = vmatmul.mubr.f32.gmra.mrb[0].mxu0 %v4504
        %v4623 = vpop.f32.mrb[0].mxu0
        %v4624 = vadd.f32 %v4492, %v4623
        %v4625 = vpop.f32.mrb[0].mxu0
        %4626 = vmatprep.mubr.f32.mxu0 0.0
        %4627 = vmatmul.mubr.f32.gmra.mrb[0].mxu0 %v4507
        %v4628 = vpop.f32.mrb[0].mxu0
        %v4629 = vadd.f32 %v4492, %v4628
        %v4630 = vpop.f32.mrb[0].mxu0
        %4631 = vmatprep.mubr.f32.mxu0 0.0
        %4632 = vmatmul.mubr.f32.gmra.mrb[0].mxu0 %v4510
        %v4633 = vpop.f32.mrb[0].mxu0
        %v4634 = vadd.f32 %v4492, %v4633
        %v4635 = vpop.f32.mrb[0].mxu0
        %4636 = vmatprep.mubr.f32.mxu0 0.0
        %4637 = vmatmul.mubr.f32.gmra.mrb[0].mxu0 %v4513
        %v4638 = vpop.f32.mrb[0].mxu0
        %v4639 = vadd.f32 %v4492, %v4638
        %v4640 = vpop.f32.mrb[0].mxu0
        %4641 = vmatprep.mubr.f32.mxu0 0.0
        %4642 = vmatmul.mubr.f32.gmra.mrb[0].mxu0 %v4516
        %v4643 = vpop.f32.mrb[0].mxu0
        %v4644 = vadd.f32 %v4492, %v4643
        %v4645 = vpop.f32.mrb[0].mxu0
        %4646 = vmatprep.mubr.f32.mxu0 0.0
        %4647 = vmatmul.mubr.f32.gmra.mrb[0].mxu0 %v4519
        %v4648 = vpop.f32.mrb[0].mxu0
        %v4649 = vadd.f32 %v4492, %v4648
        %v4650 = vpop.f32.mrb[0].mxu0
        %4651 = vmatprep.mubr.f32.mxu0 0.0
        %4652 = vmatmul.mubr.f32.gmra.mrb[0].mxu0 %v4522
        %v4653 = vpop.f32.mrb[0].mxu0
        %v4654 = vadd.f32 %v4492, %v4653
        %v4655 = vpop.f32.mrb[0].mxu0
        %4656 = vmatprep.mubr.f32.mxu0 0.0
        %4657 = vmatmul.mubr.f32.gmra.mrb[0].mxu0 %v4525
        %v4658 = vpop.f32.mrb[0].mxu0
        %v4659 = vadd.f32 %v4492, %v4658
        %v4660 = vpop.f32.mrb[0].mxu0
        %4661 = vmatprep.mubr.f32.mxu0 0.0
        %4662 = vmatmul.mubr.f32.gmra.mrb[0].mxu0 %v4528
        %v4663 = vpop.f32.mrb[0].mxu0
        %v4664 = vadd.f32 %v4492, %v4663
        %v4665 = vpop.f32.mrb[0].mxu0
        %4666 = vmatprep.mubr.f32.mxu0 0.0
        %4667 = vmatmul.mubr.f32.gmra.mrb[0].mxu0 %v4531
        %v4668 = vpop.f32.mrb[0].mxu0
        %v4669 = vadd.f32 %v4492, %v4668
        %v4670 = vpop.f32.mrb[0].mxu0
        %4671 = vmatprep.mubr.f32.mxu0 0.0
        %4672 = vmatmul.mubr.f32.gmra.mrb[0].mxu0 %v4534
        %v4673 = vpop.f32.mrb[0].mxu0
        %v4674 = vadd.f32 %v4492, %v4673
        %v4675 = vpop.f32.mrb[0].mxu0
        %4676 = vmatprep.mubr.f32.mxu0 0.0
        %4677 = vmatmul.mubr.f32.gmra.mrb[0].mxu0 %v4537
        %v4678 = vpop.f32.mrb[0].mxu0
        %v4679 = vadd.f32 %v4492, %v4678
        %v4680 = vpop.f32.mrb[0].mxu0
        %4681 = vmatprep.mubr.f32.mxu0 0.0
        %4682 = vmatmul.mubr.f32.gmra.mrb[0].mxu0 %v4540
        %v4683 = vpop.f32.mrb[0].mxu0
        %v4684 = vadd.f32 %v4492, %v4683
        %v4685 = vpop.f32.mrb[0].mxu0
        %4686 = vdwg.mxu0
        %4687 = vxpose.xlu0.b32.start [1/16] %v4609, 128
        %4688 = vxpose.xlu0.b32.cont [2/16] %v4614, 128
        %4689 = vxpose.xlu0.b32.cont [3/16] %v4619, 128
        %4690 = vxpose.xlu0.b32.cont [4/16] %v4624, 128
        %4691 = vxpose.xlu0.b32.cont [5/16] 0.0, 128
        %4692 = vxpose.xlu0.b32.cont [6/16] 0.0, 128
        %4693 = vxpose.xlu0.b32.cont [7/16] 0.0, 128
        %4694 = vxpose.xlu0.b32.cont [8/16] 0.0, 128
        %4695 = vxpose.xlu0.b32.cont [9/16] 0.0, 128
        %4696 = vxpose.xlu0.b32.cont [10/16] 0.0, 128
        %4697 = vxpose.xlu0.b32.cont [11/16] 0.0, 128
        %4698 = vxpose.xlu0.b32.cont [12/16] 0.0, 128
        %4699 = vxpose.xlu0.b32.cont [13/16] 0.0, 128
        %4700 = vxpose.xlu0.b32.cont [14/16] 0.0, 128
        %4701 = vxpose.xlu0.b32.cont [15/16] 0.0, 128
        %4702 = vxpose.xlu0.b32.end [16/16] 0.0, 128
        %v4703 = vpop.trf.xlu0
        %v4704 = vpop.trf.xlu0
        %v4705 = vpop.trf.xlu0
        %v4706 = vpop.trf.xlu0
        %v4707 = vpop.trf.xlu0
        %v4708 = vpop.trf.xlu0
        %v4709 = vpop.trf.xlu0
        %v4710 = vpop.trf.xlu0
        %v4711 = vpop.trf.xlu0
        %v4712 = vpop.trf.xlu0
        %v4713 = vpop.trf.xlu0
        %v4714 = vpop.trf.xlu0
        %v4715 = vpop.trf.xlu0
        %v4716 = vpop.trf.xlu0
        %v4717 = vpop.trf.xlu0
        %v4718 = vpop.trf.xlu0
        %4719 = vxpose.xlu0.b32.start [1/16] %v4629, 128
        %4720 = vxpose.xlu0.b32.cont [2/16] %v4634, 128
        %4721 = vxpose.xlu0.b32.cont [3/16] %v4639, 128
        %4722 = vxpose.xlu0.b32.cont [4/16] %v4644, 128
        %4723 = vxpose.xlu0.b32.cont [5/16] 0.0, 128
        %4724 = vxpose.xlu0.b32.cont [6/16] 0.0, 128
        %4725 = vxpose.xlu0.b32.cont [7/16] 0.0, 128
        %4726 = vxpose.xlu0.b32.cont [8/16] 0.0, 128
        %4727 = vxpose.xlu0.b32.cont [9/16] 0.0, 128
        %4728 = vxpose.xlu0.b32.cont [10/16] 0.0, 128
        %4729 = vxpose.xlu0.b32.cont [11/16] 0.0, 128
        %4730 = vxpose.xlu0.b32.cont [12/16] 0.0, 128
        %4731 = vxpose.xlu0.b32.cont [13/16] 0.0, 128
        %4732 = vxpose.xlu0.b32.cont [14/16] 0.0, 128
        %4733 = vxpose.xlu0.b32.cont [15/16] 0.0, 128
        %4734 = vxpose.xlu0.b32.end [16/16] 0.0, 128
        %v4735 = vpop.trf.xlu0
        %v4736 = vpop.trf.xlu0
        %v4737 = vpop.trf.xlu0
        %v4738 = vpop.trf.xlu0
        %v4739 = vpop.trf.xlu0
        %v4740 = vpop.trf.xlu0
        %v4741 = vpop.trf.xlu0
        %v4742 = vpop.trf.xlu0
        %v4743 = vpop.trf.xlu0
        %v4744 = vpop.trf.xlu0
        %v4745 = vpop.trf.xlu0
        %v4746 = vpop.trf.xlu0
        %v4747 = vpop.trf.xlu0
        %v4748 = vpop.trf.xlu0
        %v4749 = vpop.trf.xlu0
        %v4750 = vpop.trf.xlu0
        %4751 = vxpose.xlu0.b32.start [1/16] %v4649, 128
        %4752 = vxpose.xlu0.b32.cont [2/16] %v4654, 128
        %4753 = vxpose.xlu0.b32.cont [3/16] %v4659, 128
        %4754 = vxpose.xlu0.b32.cont [4/16] %v4664, 128
        %4755 = vxpose.xlu0.b32.cont [5/16] 0.0, 128
        %4756 = vxpose.xlu0.b32.cont [6/16] 0.0, 128
        %4757 = vxpose.xlu0.b32.cont [7/16] 0.0, 128
        %4758 = vxpose.xlu0.b32.cont [8/16] 0.0, 128
        %4759 = vxpose.xlu0.b32.cont [9/16] 0.0, 128
        %4760 = vxpose.xlu0.b32.cont [10/16] 0.0, 128
        %4761 = vxpose.xlu0.b32.cont [11/16] 0.0, 128
        %4762 = vxpose.xlu0.b32.cont [12/16] 0.0, 128
        %4763 = vxpose.xlu0.b32.cont [13/16] 0.0, 128
        %4764 = vxpose.xlu0.b32.cont [14/16] 0.0, 128
        %4765 = vxpose.xlu0.b32.cont [15/16] 0.0, 128
        %4766 = vxpose.xlu0.b32.end [16/16] 0.0, 128
        %v4767 = vpop.trf.xlu0
        %v4768 = vpop.trf.xlu0
        %v4769 = vpop.trf.xlu0
        %v4770 = vpop.trf.xlu0
        %v4771 = vpop.trf.xlu0
        %v4772 = vpop.trf.xlu0
        %v4773 = vpop.trf.xlu0
        %v4774 = vpop.trf.xlu0
        %v4775 = vpop.trf.xlu0
        %v4776 = vpop.trf.xlu0
        %v4777 = vpop.trf.xlu0
        %v4778 = vpop.trf.xlu0
        %v4779 = vpop.trf.xlu0
        %v4780 = vpop.trf.xlu0
        %v4781 = vpop.trf.xlu0
        %v4782 = vpop.trf.xlu0
        %4783 = vxpose.xlu0.b32.start [1/16] %v4669, 128
        %4784 = vxpose.xlu0.b32.cont [2/16] %v4674, 128
        %4785 = vxpose.xlu0.b32.cont [3/16] %v4679, 128
        %4786 = vxpose.xlu0.b32.cont [4/16] %v4684, 128
        %4787 = vxpose.xlu0.b32.cont [5/16] 0.0, 128
        %4788 = vxpose.xlu0.b32.cont [6/16] 0.0, 128
        %4789 = vxpose.xlu0.b32.cont [7/16] 0.0, 128
        %4790 = vxpose.xlu0.b32.cont [8/16] 0.0, 128
        %4791 = vxpose.xlu0.b32.cont [9/16] 0.0, 128
        %4792 = vxpose.xlu0.b32.cont [10/16] 0.0, 128
        %4793 = vxpose.xlu0.b32.cont [11/16] 0.0, 128
        %4794 = vxpose.xlu0.b32.cont [12/16] 0.0, 128
        %4795 = vxpose.xlu0.b32.cont [13/16] 0.0, 128
        %4796 = vxpose.xlu0.b32.cont [14/16] 0.0, 128
        %4797 = vxpose.xlu0.b32.cont [15/16] 0.0, 128
        %4798 = vxpose.xlu0.b32.end [16/16] 0.0, 128
        %v4799 = vpop.trf.xlu0
        %v4800 = vpop.trf.xlu0
        %v4801 = vpop.trf.xlu0
        %v4802 = vpop.trf.xlu0
        %v4803 = vpop.trf.xlu0
        %v4804 = vpop.trf.xlu0
        %v4805 = vpop.trf.xlu0
        %v4806 = vpop.trf.xlu0
        %v4807 = vpop.trf.xlu0
        %v4808 = vpop.trf.xlu0
        %v4809 = vpop.trf.xlu0
        %v4810 = vpop.trf.xlu0
        %v4811 = vpop.trf.xlu0
        %v4812 = vpop.trf.xlu0
        %v4813 = vpop.trf.xlu0
        %v4814 = vpop.trf.xlu0
        %v4815 = vadd.f32 %v2763, %v4703
        %v4816 = vadd.f32 %v2764, %v4735
        %v4817 = vadd.f32 %v2765, %v4767
        %v4818 = vadd.f32 %v2766, %v4799
        %s4819 = scalar_lea.vmem %s5, 7
        %v4820 = vld [vmem:[%s4819] sm:$0x1]
        %s4821 = scalar_lea.vmem %s5, 8
        %v4822 = vld [vmem:[%s4821] sm:$0x1]
        %v4823 = vsel %vm314, %v4815, 0.0
        %4824 = vadd.xlane.f32.xlu0 %v4823
        %v4825 = vpop.xlane.xlu0 %4824
        %v4826 = vsel %vm314, %v4816, 0.0
        %4827 = vadd.xlane.f32.xlu0 %v4826
        %v4828 = vpop.xlane.xlu0 %4827
        %v4829 = vsel %vm314, %v4817, 0.0
        %4830 = vadd.xlane.f32.xlu0 %v4829
        %v4831 = vpop.xlane.xlu0 %4830
        %v4832 = vsel %vm314, %v4818, 0.0
        %4833 = vadd.xlane.f32.xlu0 %v4832
        %v4834 = vpop.xlane.xlu0 %4833
        %v4835 = vmul.f32 %v4825, %v327
        %v4836 = vmul.f32 %v4828, %v327
        %v4837 = vmul.f32 %v4831, %v327
        %v4838 = vmul.f32 %v4834, %v327
        %v4839 = vsub.f32 %v4815, %v4835
        %v4840 = vsub.f32 %v4816, %v4836
        %v4841 = vsub.f32 %v4817, %v4837
        %v4842 = vsub.f32 %v4818, %v4838
        %v4843 = vmul.f32 %v4839, %v4839
        %v4844 = vmul.f32 %v4840, %v4840
        %v4845 = vmul.f32 %v4841, %v4841
        %v4846 = vmul.f32 %v4842, %v4842
        %v4847 = vsel %vm314, %v4843, 0.0
        %4848 = vadd.xlane.f32.xlu0 %v4847
        %v4849 = vpop.xlane.xlu0 %4848
        %v4850 = vsel %vm314, %v4844, 0.0
        %4851 = vadd.xlane.f32.xlu0 %v4850
        %v4852 = vpop.xlane.xlu0 %4851
        %v4853 = vsel %vm314, %v4845, 0.0
        %4854 = vadd.xlane.f32.xlu0 %v4853
        %v4855 = vpop.xlane.xlu0 %4854
        %v4856 = vsel %vm314, %v4846, 0.0
        %4857 = vadd.xlane.f32.xlu0 %v4856
        %v4858 = vpop.xlane.xlu0 %4857
        %v4859 = vmul.f32 %v4849, %v327
        %v4860 = vmul.f32 %v4852, %v327
        %v4861 = vmul.f32 %v4855, %v327
        %v4862 = vmul.f32 %v4858, %v327
        %v4863 = vadd.f32 %v4859, 1e-05
        %v4864 = vadd.f32 %v4860, 1e-05
        %v4865 = vadd.f32 %v4861, 1e-05
        %v4866 = vadd.f32 %v4862, 1e-05
        %v4867 = vrsqrt.pop %v4863
        %v4868 = vrsqrt.pop %v4864
        %v4869 = vrsqrt.pop %v4865
        %v4870 = vrsqrt.pop %v4866
        %v4871 = vmul.f32 %v4839, %v4867
        %v4872 = vmul.f32 %v4840, %v4868
        %v4873 = vmul.f32 %v4841, %v4869
        %v4874 = vmul.f32 %v4842, %v4870
        %v4876 = vlaneseq
        %v4877 = vshrl.u32 %v4876, 7
        %v4878 = vsub.s32 0, %v4877
        %v4879 = vrot.slane %v4820, %v4878
        %v4881 = vmul.f32 %v4871, %v4879
        %v4882 = vmul.f32 %v4872, %v4879
        %v4883 = vmul.f32 %v4873, %v4879
        %v4884 = vmul.f32 %v4874, %v4879
        %v4886 = vlaneseq
        %v4887 = vshrl.u32 %v4886, 7
        %v4888 = vsub.s32 0, %v4887
        %v4889 = vrot.slane %v4822, %v4888
        %v4891 = vadd.f32 %v4881, %v4889
        %v4892 = vadd.f32 %v4882, %v4889
        %v4893 = vadd.f32 %v4883, %v4889
        %v4894 = vadd.f32 %v4884, %v4889
        %s4895 = scalar_lea.vmem %s3, 32
        %v4896 = vld [vmem:[%s4895] sm:$0xff]
        %v4897 = vld [vmem:[%s4895 + $0x8] sm:$0xff]
        %v4898 = vld [vmem:[%s4895 + $0x10] sm:$0xff]
        %v4899 = vld [vmem:[%s4895 + $0x18] sm:$0xff]
        %s4900 = scalar_lea.vmem %s7, 1
        %v4901 = vld [vmem:[%s4900] sm:$0x1]
        %v4903 = vlaneseq
        %v4904 = vshrl.u32 %v4903, 7
        %v4905 = vsub.s32 0, %v4904
        %v4906 = vrot.slane %v4901, %v4905
        %v4909 = vsel %vm314, %v4891, 0
        %v4912 = vsel %vm314, %v4892, 0
        %v4915 = vsel %vm314, %v4893, 0
        %v4918 = vsel %vm314, %v4894, 0
        %4920 = vmatprep.subr.mxu0 0.0
        %4921 = vmatpush1.msra.mxu0 %v4896
        %4922 = vmatprep.subr.mxu0 0.0
        %4923 = vmatpush1.msra.mxu0 %v4897
        %4924 = vmatprep.subr.mxu0 0.0
        %4925 = vmatpush1.msra.mxu0 %v4898
        %4926 = vmatprep.subr.mxu0 0.0
        %4927 = vmatpush1.msra.mxu0 %v4899
        %4928 = vmatprep.subr.mxu0 0.0
        %4929 = vmatpush1.msra.mxu0 0.0
        %4930 = vmatprep.subr.mxu0 0.0
        %4931 = vmatpush1.msra.mxu0 0.0
        %4932 = vmatprep.subr.mxu0 0.0
        %4933 = vmatpush1.msra.mxu0 0.0
        %4934 = vmatprep.subr.mxu0 0.0
        %4935 = vmatpush1.msra.mxu0 0.0
        %4936 = vmatprep.subr.mxu0 0.0
        %4937 = vmatpush1.msra.mxu0 0.0
        %4938 = vmatprep.subr.mxu0 0.0
        %4939 = vmatpush1.msra.mxu0 0.0
        %4940 = vmatprep.subr.mxu0 0.0
        %4941 = vmatpush1.msra.mxu0 0.0
        %4942 = vmatprep.subr.mxu0 0.0
        %4943 = vmatpush1.msra.mxu0 0.0
        %4944 = vmatprep.subr.mxu0 0.0
        %4945 = vmatpush1.msra.mxu0 0.0
        %4946 = vmatprep.subr.mxu0 0.0
        %4947 = vmatpush1.msra.mxu0 0.0
        %4948 = vmatprep.subr.mxu0 0.0
        %4949 = vmatpush1.msra.mxu0 0.0
        %4950 = vmatprep.subr.mxu0 0.0
        %4951 = vmatpush1.msra.mxu0 0.0
        %4952 = vmatprep.subr.mxu0 0.0
        %4953 = vmatpush1.msra.mxu0 0.0
        %4954 = vmatprep.subr.mxu0 0.0
        %4955 = vmatpush1.msra.mxu0 0.0
        %4956 = vmatprep.subr.mxu0 0.0
        %4957 = vmatpush1.msra.mxu0 0.0
        %4958 = vmatprep.subr.mxu0 0.0
        %4959 = vmatpush1.msra.mxu0 0.0
        %4960 = vmatprep.subr.mxu0 0.0
        %4961 = vmatpush1.msra.mxu0 0.0
        %4962 = vmatprep.subr.mxu0 0.0
        %4963 = vmatpush1.msra.mxu0 0.0
        %4964 = vmatprep.subr.mxu0 0.0
        %4965 = vmatpush1.msra.mxu0 0.0
        %4966 = vmatprep.subr.mxu0 0.0
        %4967 = vmatpush1.msra.mxu0 0.0
        %4968 = vmatprep.subr.mxu0 0.0
        %4969 = vmatpush1.msra.mxu0 0.0
        %4970 = vmatprep.subr.mxu0 0.0
        %4971 = vmatpush1.msra.mxu0 0.0
        %4972 = vmatprep.subr.mxu0 0.0
        %4973 = vmatpush1.msra.mxu0 0.0
        %4974 = vmatprep.subr.mxu0 0.0
        %4975 = vmatpush1.msra.mxu0 0.0
        %4976 = vmatprep.subr.mxu0 0.0
        %4977 = vmatpush1.msra.mxu0 0.0
        %4978 = vmatprep.subr.mxu0 0.0
        %4979 = vmatpush1.msra.mxu0 0.0
        %4980 = vmatprep.subr.mxu0 0.0
        %4981 = vmatpush1.msra.mxu0 0.0
        %4982 = vmatprep.subr.mxu0 0.0
        %4983 = vmatpush1.msra.mxu0 0.0
        %4984 = vmatprep.mubr.f32.mxu0 0.0
        %4985 = vmatmul.mubr.f32.gmra.mrb[0].mxu0 %v4909
        %v4986 = vpop.f32.mrb[0].mxu0
        %v4987 = vadd.f32 %v4906, %v4986
        %v4988 = vpop.f32.mrb[0].mxu0
        %4989 = vmatprep.mubr.f32.mxu0 0.0
        %4990 = vmatmul.mubr.f32.gmra.mrb[0].mxu0 %v4912
        %v4991 = vpop.f32.mrb[0].mxu0
        %v4992 = vadd.f32 %v4906, %v4991
        %v4993 = vpop.f32.mrb[0].mxu0
        %4994 = vmatprep.mubr.f32.mxu0 0.0
        %4995 = vmatmul.mubr.f32.gmra.mrb[0].mxu0 %v4915
        %v4996 = vpop.f32.mrb[0].mxu0
        %v4997 = vadd.f32 %v4906, %v4996
        %v4998 = vpop.f32.mrb[0].mxu0
        %4999 = vmatprep.mubr.f32.mxu0 0.0
        %5000 = vmatmul.mubr.f32.gmra.mrb[0].mxu0 %v4918
        %v5001 = vpop.f32.mrb[0].mxu0
        %v5002 = vadd.f32 %v4906, %v5001
        %v5003 = vpop.f32.mrb[0].mxu0
        %5004 = vdwg.mxu0
        %v5005 = vmul.f32 %v4987, 0.70710677
        %v5006 = vmul.f32 %v4992, 0.70710677
        %v5007 = vmul.f32 %v4997, 0.70710677
        %v5008 = vmul.f32 %v5002, 0.70710677
        %v5009 = vand.u32 2147483647, %v5005
        %v5010 = vand.u32 2147483647, %v5006
        %v5011 = vand.u32 2147483647, %v5007
        %v5012 = vand.u32 2147483647, %v5008
        %v5013 = vmul.f32 %v5009, 0.3275911
        %v5014 = vmul.f32 %v5010, 0.3275911
        %v5015 = vmul.f32 %v5011, 0.3275911
        %v5016 = vmul.f32 %v5012, 0.3275911
        %v5017 = vadd.f32 %v5013, 1.0
        %v5018 = vadd.f32 %v5014, 1.0
        %v5019 = vadd.f32 %v5015, 1.0
        %v5020 = vadd.f32 %v5016, 1.0
        %v5021 = vrcp.pop %v5017
        %v5022 = vmul.f32 1.0, %v5021
        %v5023 = vrcp.pop %v5018
        %v5024 = vmul.f32 1.0, %v5023
        %v5025 = vrcp.pop %v5019
        %v5026 = vmul.f32 1.0, %v5025
        %v5027 = vrcp.pop %v5020
        %v5028 = vmul.f32 1.0, %v5027
        %v5029 = vmul.f32 %v5022, 1.0614054
        %v5030 = vmul.f32 %v5024, 1.0614054
        %v5031 = vmul.f32 %v5026, 1.0614054
        %v5032 = vmul.f32 %v5028, 1.0614054
        %v5033 = vadd.f32 %v5029, -1.4531521
        %v5034 = vadd.f32 %v5030, -1.4531521
        %v5035 = vadd.f32 %v5031, -1.4531521
        %v5036 = vadd.f32 %v5032, -1.4531521
        %v5037 = vmul.f32 %v5022, %v5033
        %v5038 = vmul.f32 %v5024, %v5034
        %v5039 = vmul.f32 %v5026, %v5035
        %v5040 = vmul.f32 %v5028, %v5036
        %v5041 = vadd.f32 %v5037, 1.4214138
        %v5042 = vadd.f32 %v5038, 1.4214138
        %v5043 = vadd.f32 %v5039, 1.4214138
        %v5044 = vadd.f32 %v5040, 1.4214138
        %v5045 = vmul.f32 %v5022, %v5041
        %v5046 = vmul.f32 %v5024, %v5042
        %v5047 = vmul.f32 %v5026, %v5043
        %v5048 = vmul.f32 %v5028, %v5044
        %v5049 = vadd.f32 %v5045, -0.28449672
        %v5050 = vadd.f32 %v5046, -0.28449672
        %v5051 = vadd.f32 %v5047, -0.28449672
        %v5052 = vadd.f32 %v5048, -0.28449672
        %v5053 = vmul.f32 %v5022, %v5049
        %v5054 = vmul.f32 %v5024, %v5050
        %v5055 = vmul.f32 %v5026, %v5051
        %v5056 = vmul.f32 %v5028, %v5052
        %v5057 = vadd.f32 %v5053, 0.2548296
        %v5058 = vadd.f32 %v5054, 0.2548296
        %v5059 = vadd.f32 %v5055, 0.2548296
        %v5060 = vadd.f32 %v5056, 0.2548296
        %v5061 = vmul.f32 %v5022, %v5057
        %v5062 = vmul.f32 %v5024, %v5058
        %v5063 = vmul.f32 %v5026, %v5059
        %v5064 = vmul.f32 %v5028, %v5060
        %v5065 = vsub.f32 0.0, %v5009
        %v5066 = vsub.f32 0.0, %v5010
        %v5067 = vsub.f32 0.0, %v5011
        %v5068 = vsub.f32 0.0, %v5012
        %v5069 = vmul.f32 %v5065, %v5009
        %v5070 = vmul.f32 %v5066, %v5010
        %v5071 = vmul.f32 %v5067, %v5011
        %v5072 = vmul.f32 %v5068, %v5012
        %v5073 = vmul.f32 %v5069, 1.442695
        %v5074 = vpow.pop %v5073
        %v5075 = vmul.f32 %v5070, 1.442695
        %v5076 = vpow.pop %v5075
        %v5077 = vmul.f32 %v5071, 1.442695
        %v5078 = vpow.pop %v5077
        %v5079 = vmul.f32 %v5072, 1.442695
        %v5080 = vpow.pop %v5079
        %v5081 = vmul.f32 %v5061, %v5074
        %v5082 = vmul.f32 %v5062, %v5076
        %v5083 = vmul.f32 %v5063, %v5078
        %v5084 = vmul.f32 %v5064, %v5080
        %v5085 = vsub.f32 1.0, %v5081
        %v5086 = vsub.f32 1.0, %v5082
        %v5087 = vsub.f32 1.0, %v5083
        %v5088 = vsub.f32 1.0, %v5084
        %vm5089 = vcmp.lt.f32.partialorder %v5005, 0.0
        %vm5090 = vcmp.lt.f32.partialorder %v5006, 0.0
        %vm5091 = vcmp.lt.f32.partialorder %v5007, 0.0
        %vm5092 = vcmp.lt.f32.partialorder %v5008, 0.0
        %v5093 = vsub.f32 0.0, %v5085
        %v5094 = vsub.f32 0.0, %v5086
        %v5095 = vsub.f32 0.0, %v5087
        %v5096 = vsub.f32 0.0, %v5088
        %v5097 = vsel %vm5089, %v5093, %v5085
        %v5098 = vsel %vm5090, %v5094, %v5086
        %v5099 = vsel %vm5091, %v5095, %v5087
        %v5100 = vsel %vm5092, %v5096, %v5088
        %v5101 = vmul.f32 %v4987, 0.5
        %v5102 = vmul.f32 %v4992, 0.5
        %v5103 = vmul.f32 %v4997, 0.5
        %v5104 = vmul.f32 %v5002, 0.5
        %v5105 = vadd.f32 %v5097, 1.0
        %v5106 = vadd.f32 %v5098, 1.0
        %v5107 = vadd.f32 %v5099, 1.0
        %v5108 = vadd.f32 %v5100, 1.0
        %v5109 = vmul.f32 %v5101, %v5105
        %v5110 = vmul.f32 %v5102, %v5106
        %v5111 = vmul.f32 %v5103, %v5107
        %v5112 = vmul.f32 %v5104, %v5108
        %s5113 = scalar_lea.vmem %s4, 128
        %v5114 = vld [vmem:[%s5113] sm:$0xff]
        %v5115 = vld [vmem:[%s5113 + $0x8] sm:$0xff]
        %v5116 = vld [vmem:[%s5113 + $0x10] sm:$0xff]
        %v5117 = vld [vmem:[%s5113 + $0x18] sm:$0xff]
        %v5118 = vld [vmem:[%s5113 + $0x20] sm:$0xff]
        %v5119 = vld [vmem:[%s5113 + $0x28] sm:$0xff]
        %v5120 = vld [vmem:[%s5113 + $0x30] sm:$0xff]
        %v5121 = vld [vmem:[%s5113 + $0x38] sm:$0xff]
        %v5122 = vld [vmem:[%s5113 + $0x40] sm:$0xff]
        %v5123 = vld [vmem:[%s5113 + $0x48] sm:$0xff]
        %v5124 = vld [vmem:[%s5113 + $0x50] sm:$0xff]
        %v5125 = vld [vmem:[%s5113 + $0x58] sm:$0xff]
        %v5126 = vld [vmem:[%s5113 + $0x60] sm:$0xff]
        %v5127 = vld [vmem:[%s5113 + $0x68] sm:$0xff]
        %v5128 = vld [vmem:[%s5113 + $0x70] sm:$0xff]
        %v5129 = vld [vmem:[%s5113 + $0x78] sm:$0xff]
        %s5130 = scalar_lea.vmem %s5, 9
        %v5131 = vld [vmem:[%s5130] sm:$0x1]
        %v5133 = vlaneseq
        %v5134 = vshrl.u32 %v5133, 7
        %v5135 = vsub.s32 0, %v5134
        %v5136 = vrot.slane %v5131, %v5135
        %5138 = vmatprep.subr.mxu0 0.0
        %5139 = vmatpush1.msra.mxu0 %v5114
        %5140 = vmatprep.subr.mxu0 0.0
        %5141 = vmatpush1.msra.mxu0 %v5115
        %5142 = vmatprep.subr.mxu0 0.0
        %5143 = vmatpush1.msra.mxu0 %v5116
        %5144 = vmatprep.subr.mxu0 0.0
        %5145 = vmatpush1.msra.mxu0 %v5117
        %5146 = vmatprep.subr.mxu0 0.0
        %5147 = vmatpush1.msra.mxu0 %v5118
        %5148 = vmatprep.subr.mxu0 0.0
        %5149 = vmatpush1.msra.mxu0 %v5119
        %5150 = vmatprep.subr.mxu0 0.0
        %5151 = vmatpush1.msra.mxu0 %v5120
        %5152 = vmatprep.subr.mxu0 0.0
        %5153 = vmatpush1.msra.mxu0 %v5121
        %5154 = vmatprep.subr.mxu0 0.0
        %5155 = vmatpush1.msra.mxu0 %v5122
        %5156 = vmatprep.subr.mxu0 0.0
        %5157 = vmatpush1.msra.mxu0 %v5123
        %5158 = vmatprep.subr.mxu0 0.0
        %5159 = vmatpush1.msra.mxu0 %v5124
        %5160 = vmatprep.subr.mxu0 0.0
        %5161 = vmatpush1.msra.mxu0 %v5125
        %5162 = vmatprep.subr.mxu0 0.0
        %5163 = vmatpush1.msra.mxu0 %v5126
        %5164 = vmatprep.subr.mxu0 0.0
        %5165 = vmatpush1.msra.mxu0 %v5127
        %5166 = vmatprep.subr.mxu0 0.0
        %5167 = vmatpush1.msra.mxu0 %v5128
        %5168 = vmatprep.subr.mxu0 0.0
        %5169 = vmatpush1.msra.mxu0 %v5129
        %5170 = vmatprep.subr.mxu0 0.0
        %5171 = vmatpush1.msra.mxu0 0.0
        %5172 = vmatprep.subr.mxu0 0.0
        %5173 = vmatpush1.msra.mxu0 0.0
        %5174 = vmatprep.subr.mxu0 0.0
        %5175 = vmatpush1.msra.mxu0 0.0
        %5176 = vmatprep.subr.mxu0 0.0
        %5177 = vmatpush1.msra.mxu0 0.0
        %5178 = vmatprep.subr.mxu0 0.0
        %5179 = vmatpush1.msra.mxu0 0.0
        %5180 = vmatprep.subr.mxu0 0.0
        %5181 = vmatpush1.msra.mxu0 0.0
        %5182 = vmatprep.subr.mxu0 0.0
        %5183 = vmatpush1.msra.mxu0 0.0
        %5184 = vmatprep.subr.mxu0 0.0
        %5185 = vmatpush1.msra.mxu0 0.0
        %5186 = vmatprep.subr.mxu0 0.0
        %5187 = vmatpush1.msra.mxu0 0.0
        %5188 = vmatprep.subr.mxu0 0.0
        %5189 = vmatpush1.msra.mxu0 0.0
        %5190 = vmatprep.subr.mxu0 0.0
        %5191 = vmatpush1.msra.mxu0 0.0
        %5192 = vmatprep.subr.mxu0 0.0
        %5193 = vmatpush1.msra.mxu0 0.0
        %5194 = vmatprep.subr.mxu0 0.0
        %5195 = vmatpush1.msra.mxu0 0.0
        %5196 = vmatprep.subr.mxu0 0.0
        %5197 = vmatpush1.msra.mxu0 0.0
        %5198 = vmatprep.subr.mxu0 0.0
        %5199 = vmatpush1.msra.mxu0 0.0
        %5200 = vmatprep.subr.mxu0 0.0
        %5201 = vmatpush1.msra.mxu0 0.0
        %5202 = vmatprep.mubr.f32.mxu0 0.0
        %5203 = vmatmul.mubr.f32.gmra.mrb[0].mxu0 %v5109
        %v5204 = vpop.f32.mrb[0].mxu0
        %v5205 = vadd.f32 %v5136, %v5204
        %v5206 = vpop.f32.mrb[0].mxu0
        %5207 = vmatprep.mubr.f32.mxu0 0.0
        %5208 = vmatmul.mubr.f32.gmra.mrb[0].mxu0 %v5110
        %v5209 = vpop.f32.mrb[0].mxu0
        %v5210 = vadd.f32 %v5136, %v5209
        %v5211 = vpop.f32.mrb[0].mxu0
        %5212 = vmatprep.mubr.f32.mxu0 0.0
        %5213 = vmatmul.mubr.f32.gmra.mrb[0].mxu0 %v5111
        %v5214 = vpop.f32.mrb[0].mxu0
        %v5215 = vadd.f32 %v5136, %v5214
        %v5216 = vpop.f32.mrb[0].mxu0
        %5217 = vmatprep.mubr.f32.mxu0 0.0
        %5218 = vmatmul.mubr.f32.gmra.mrb[0].mxu0 %v5112
        %v5219 = vpop.f32.mrb[0].mxu0
        %v5220 = vadd.f32 %v5136, %v5219
        %v5221 = vpop.f32.mrb[0].mxu0
        %5222 = vdwg.mxu0
        %v5223 = vadd.f32 %v4815, %v5205
        %v5224 = vadd.f32 %v4816, %v5210
        %v5225 = vadd.f32 %v4817, %v5215
        %v5226 = vadd.f32 %v4818, %v5220
        %5227 = vst.msk [vmem:[%s299] sm:$0xff] %vm314, %v5223
        %5228 = vst.msk [vmem:[%s299 + $0x8] sm:$0xff] %vm314, %v5224
        %5229 = vst.msk [vmem:[%s299 + $0x10] sm:$0xff] %vm314, %v5225
        %5230 = vst.msk [vmem:[%s299 + $0x18] sm:$0xff] %vm314, %v5226
        %s5231 = sand.u32 %s203, 1
        %s5232 = scalar_lea.sflag [#allocation3], %s5231
        %s5233 = sand.u32 %s203, 1
        %s5234 = smul.addr %s5233, 32
        %s5235 = scalar_lea.vmem [#allocation2], %s5234
        // Predicated region
        $region53: #{tpu_custom_call.1} parent=51 // pred_check
          %p5236 = pneg %p213
        $region54: #{tpu_custom_call.1} parent=51 // pred_check_branch
          %5238 = sbr.rel (%p5236) target = $region56
        $region55: #{tpu_custom_call.1} parent=51 // pred_region
          %s5239 = smul.u32 4, %s22
          %s5241 = ssub.s32 512, 512
          %5242 = vsyncadd %s5232, %s5241
          %s5243 = smul.addr %s5239, 128
          %s5244 = scalar_lea.hbm %s8, %s5243
          %s5245 = sshll.u32 %s5235, 4
          %s5246 = int_to_ptr.vmem [resolvable:$true] %s5245
          %5251 = dma.vmem_to_hbm [thread:$0]  %s5246, 512, %s5244, %s5232, 128, 128, 8
        $region56: #{tpu_custom_call.1} parent=51 // pred_fallthru
          _
      $region52: #{tpu_custom_call.1} parent=5 // pred_fallthru
        _
      %p5252 = scmp.le.s32.totalorder 2, %s17
      // Predicated region
      $region57: #{tpu_custom_call.1} parent=5 // pred_check
        %p5253 = pneg %p5252
      $region58: #{tpu_custom_call.1} parent=5 // pred_check_branch
        %5255 = sbr.rel (%p5253) target = $region60
      $region59: #{tpu_custom_call.1} parent=5 // pred_region
        %s5256 = ssub.s32 %s17, 2
        // Predicated region
        $region61: #{tpu_custom_call.1} parent=59 // pred_check
          %p5257 = pneg %p219
        $region62: #{tpu_custom_call.1} parent=59 // pred_check_branch
          %5259 = sbr.rel (%p5257) target = $region64
        $region63: #{tpu_custom_call.1} parent=59 // pred_region
          %s5260 = sand.u32 %s204, 1
          %s5261 = scalar_lea.sflag [#allocation3], %s5260
          %s5262 = sand.u32 %s204, 1
          %s5263 = smul.addr %s5262, 32
          %s5264 = scalar_lea.vmem [#allocation2], %s5263
          %5265 = dma.done %s5261, 512
        $region64: #{tpu_custom_call.1} parent=59 // pred_fallthru
          _
      $region60: #{tpu_custom_call.1} parent=5 // pred_fallthru
        _
    $region6: #{tpu_custom_call.1} parent=1 // loop_footer
      %s21 = sadd.s32 1, %s17
    $region7: #{tpu_custom_call.1} parent=1 // loop_footer_branch
      %16 = sbr.rel target = $region3
    $region8: #{tpu_custom_call.1} parent=1 // loop_exit
      _
    %5266 = vsyncpa [#allocation3], 1
    %s5267 = scalar_lea.sflag [#allocation3], 1
    %5268 = vsyncpa %s5267, 1

</llo_original>
